<compile_context>
chip_gen: v6e
topology: v6e:2x2x1
jax: 0.10.0
libtpu: 0.0.40
codegen_flags: <defaults>
</compile_context>

<pallas_src>
import functools

import jax
import jax.numpy as jnp
from jax.experimental import pallas as pl
from jax.experimental.pallas import tpu as pltpu

KH = KW = 5
PAD = 2


def _maxpool2x2(y, ho, wo, cg):
    """2x2/stride-2 max-pool of a (2*ho, 2*wo*cg) slab laid out as (h, w*cg + c).

    Pure lane-block / row-block slices + maxes + concats (no reshapes, no
    strided slicing) -> trivially lowerable and stays lane-dense.
    """
    # pool along W: max of adjacent cg-wide lane blocks
    yw = jnp.concatenate(
        [jnp.maximum(y[:, (2 * w) * cg:(2 * w + 1) * cg],
                     y[:, (2 * w + 1) * cg:(2 * w + 2) * cg])
         for w in range(wo)], axis=1)                             # (2*ho, wo*cg)
    # pool along H: max of adjacent row pairs
    return jnp.concatenate(
        [jnp.maximum(yw[2 * h:2 * h + 1, :], yw[2 * h + 1:2 * h + 2, :])
         for h in range(ho)], axis=0)                             # (ho, wo*cg)


def cnn_fused_kernel(x_ref, w1_ref, b1_ref, w2_ref, b2_ref, wo_ref, bo_ref,
                     o_ref, xpad_ref, y1p_ref):
    """Fused conv1+ReLU+pool -> conv2+ReLU+pool -> linear for ONE image.

    x_ref   : (1, 28, 28) f32   input image (one grid step = one image)
    w1_ref  : (160, 448)        conv1-as-matmul: row = ki*32 + in_col, col = w*16 + co
    b1_ref  : (1, 448)   f32    conv1 bias tiled over the 28 output columns
    w2_ref  : (1440, 448)       conv2-as-matmul: row = ki*288 + in_col*16 + ci, col = w*32 + co
    b2_ref  : (1, 448)   f32    conv2 bias tiled over the 14 output columns
    wo_ref  : (1568, 128)       linear weight, rows in (h, w, c) order, N padded 10 -> 128
    bo_ref  : (1, 128)   f32    linear bias, padded 10 -> 128
    o_ref   : (1, 1, 128) f32   logits (first 10 lanes are real)
    xpad_ref: (32, 32)   f32    VMEM scratch: zero-padded input image
    y1p_ref : (18, 288)  f32    VMEM scratch: zero-padded pooled conv1 map, (h, w*16 + c)
    """
    cdt = w1_ref.dtype  # MXU input dtype: f32 (default) or bf16 (v6e/v7x)

    # ---------------- conv1 + ReLU + 2x2 max-pool -------------------------
    xpad_ref[...] = jnp.zeros_like(xpad_ref)
    xpad_ref[2:30, 2:30] = x_ref[0]

    # one matmul: the 5 kernel-row taps are folded into the contraction dim
    lhs1 = jnp.concatenate([xpad_ref[ki:ki + 28, :] for ki in range(KH)],
                           axis=1)                                # (28, 160)
    y1 = jnp.dot(lhs1.astype(cdt), w1_ref[...],
                 preferred_element_type=jnp.float32)              # (28, 448): (h, w*16+c)
    y1 = jnp.maximum(y1 + b1_ref[...], 0.0)
    y1 = _maxpool2x2(y1, 14, 14, 16)                              # (14, 224)

    # zero-padded (h, w*16+c) map feeding conv2
    y1p_ref[...] = jnp.zeros_like(y1p_ref)
    y1p_ref[2:16, 32:256] = y1

    # ---------------- conv2 + ReLU + 2x2 max-pool -------------------------
    lhs2 = jnp.concatenate([y1p_ref[ki:ki + 14, :] for ki in range(KH)],
                           axis=1)                                # (14, 1440)
    y2 = jnp.dot(lhs2.astype(cdt), w2_ref[...],
                 preferred_element_type=jnp.float32)              # (14, 448): (h, w*32+c)
    y2 = jnp.maximum(y2 + b2_ref[...], 0.0)
    y2 = _maxpool2x2(y2, 7, 7, 32)                                # (7, 224)

    # ---------------- linear ----------------------------------------------
    # flatten (h, w, c) into lanes via lane-concat (no reshape): (1, 1568)
    flat = jnp.concatenate([y2[h:h + 1, :] for h in range(7)], axis=1)
    out = jnp.dot(flat.astype(cdt), wo_ref[...],
                  preferred_element_type=jnp.float32) + bo_ref[...]   # (1, 128)
    o_ref[0] = out.astype(o_ref.dtype)


def _conv1_as_matmul(w1):
    """(5,5,1,16) -> (160, 448); row = ki*32 + in_col, col = out_col*16 + cout."""
    w1s = w1[:, :, 0, :]                                   # (ki, kj, co)
    in_col = jnp.arange(32)[:, None]
    out_col = jnp.arange(28)[None, :]
    d = in_col - out_col                                   # = kj when 0 <= d < 5
    t = w1s[:, jnp.clip(d, 0, KW - 1), :]                  # (5, 32, 28, 16)
    t = jnp.where(((d >= 0) & (d < KW))[None, :, :, None], t, 0.0)
    return t.reshape(KH * 32, 28 * 16)


def _conv2_as_matmul(w2):
    """(5,5,16,32) -> (1440, 448); row = ki*288 + in_col*16 + cin, col = out_col*32 + cout."""
    in_col = jnp.arange(18)[:, None]
    out_col = jnp.arange(14)[None, :]
    d = in_col - out_col
    t = w2[:, jnp.clip(d, 0, KW - 1), :, :]                # (5, 18, 14, 16, 32) = (ki, in, out, ci, co)
    t = jnp.where(((d >= 0) & (d < KW))[None, :, :, None, None], t, 0.0)
    t = jnp.transpose(t, (0, 1, 3, 2, 4))                  # (ki, in, ci, out, co)
    return t.reshape(KH * 18 * 16, 14 * 32)


@functools.partial(jax.jit, static_argnames=("compute_dtype",))
def cnn_forward(x_nchw, params, compute_dtype=jnp.float32):
    B = x_nchw.shape[0]
    x = x_nchw.reshape(B, 28, 28)

    w1t = _conv1_as_matmul(params["w1"]).astype(compute_dtype)          # (160, 448)
    b1t = jnp.tile(params["b1"], 28).reshape(1, 448)
    w2t = _conv2_as_matmul(params["w2"]).astype(compute_dtype)          # (1440, 448)
    b2t = jnp.tile(params["b2"], 14).reshape(1, 448)
    # Linear weight: reorder rows from PyTorch's (c,h,w) view-order to the
    # kernel's (h,w,c) order and pad N 10 -> 128 for lane-dense (unmasked) stores.
    wo = params["wo"].reshape(32, 7, 7, 10).transpose(1, 2, 0, 3).reshape(1568, 10)
    wot = jnp.zeros((1568, 128), compute_dtype).at[:, :10].set(wo.astype(compute_dtype))
    bot = jnp.zeros((1, 128), jnp.float32).at[:, :10].set(params["bo"].reshape(1, 10))

    out = pl.pallas_call(
        cnn_fused_kernel,
        out_shape=jax.ShapeDtypeStruct((B, 1, 128), jnp.float32),
        grid_spec=pltpu.PrefetchScalarGridSpec(
            num_scalar_prefetch=0,
            grid=(B,),
            in_specs=[
                pl.BlockSpec((1, 28, 28), lambda b: (b, 0, 0)),   # image b
                pl.BlockSpec((160, 448), lambda b: (0, 0)),       # weights stay
                pl.BlockSpec((1, 448), lambda b: (0, 0)),         # VMEM-resident
                pl.BlockSpec((1440, 448), lambda b: (0, 0)),      # across the
                pl.BlockSpec((1, 448), lambda b: (0, 0)),         # batch grid
                pl.BlockSpec((1568, 128), lambda b: (0, 0)),
                pl.BlockSpec((1, 128), lambda b: (0, 0)),
            ],
            out_specs=pl.BlockSpec((1, 1, 128), lambda b: (b, 0, 0)),
            scratch_shapes=[
                pltpu.VMEM((32, 32), jnp.float32),    # zero-padded input image
                pltpu.VMEM((18, 288), jnp.float32),   # zero-padded pooled conv1 map
            ],
        ),
        compiler_params=pltpu.CompilerParams(
            dimension_semantics=("parallel",),        # shard batch over 2 TCs on v7x
            vmem_limit_bytes=32 * 1024 * 1024,        # safe on v5e/v6e/v7x; usage ~10 MiB
        ),
    )(x, w1t, b1t, w2t, b2t, wot, bot)
    return out.reshape(B, 128)[:, :10]


def init_params(key):
    ks = jax.random.split(key, 6)
    return {
        "w1": jax.random.normal(ks[0], (KH, KW, 1, 16), jnp.float32) * 0.1,
        "b1": jax.random.normal(ks[1], (16,), jnp.float32) * 0.1,
        "w2": jax.random.normal(ks[2], (KH, KW, 16, 32), jnp.float32) * 0.05,
        "b2": jax.random.normal(ks[3], (32,), jnp.float32) * 0.05,
        # PyTorch nn.Linear stores weight as (10, 1568); we keep its transpose,
        # with rows in PyTorch's NCHW view/flatten order (c*49 + h*7 + w).
        "wo": jax.random.normal(ks[4], (32 * 7 * 7, 10), jnp.float32) * 0.02,
        "bo": jax.random.normal(ks[5], (10,), jnp.float32) * 0.02,
    }


def cnn_reference(x_nchw, params):
    # Pure-JAX reference of the exact PyTorch forward (for correctness check).
    def block(x, w, b):
        w_oihw = jnp.transpose(w, (3, 2, 0, 1))
        y = jax.lax.conv_general_dilated(
            x, w_oihw, window_strides=(1, 1), padding=((PAD, PAD), (PAD, PAD)),
            dimension_numbers=("NCHW", "OIHW", "NCHW"))
        y = jnp.maximum(y + b.reshape(1, -1, 1, 1), 0.0)
        return jax.lax.reduce_window(y, -jnp.inf, jax.lax.max,
                                     (1, 1, 2, 2), (1, 1, 2, 2), "VALID")
    y = block(x_nchw, params["w1"], params["b1"])
    y = block(y, params["w2"], params["b2"])
    y = y.reshape(y.shape[0], -1)
    return y @ params["wo"] + params["bo"]


if __name__ == "__main__":
    key = jax.random.PRNGKey(0)
    kx, kp = jax.random.split(key)
    # batch=2, channels=1, spatial=28x28 (28 is forced by the 32*7*7 Linear).
    x = jax.random.normal(kx, (2, 1, 28, 28), jnp.float32)
    params = init_params(kp)

    ref = cnn_reference(x, params)

    # f32 path (exact PyTorch semantics)
    out = jax.block_until_ready(cnn_forward(x, params))
    assert out.shape == (2, 10) and out.dtype == jnp.float32
    err = float(jnp.max(jnp.abs(out - ref)))
    assert jnp.allclose(out, ref, rtol=1e-3, atol=1e-3), err

    # bf16 MXU inputs with f32 accumulation (the recommended mode on v6e/v7x)
    out_bf16 = jax.block_until_ready(
        cnn_forward(x, params, compute_dtype=jnp.bfloat16))
    err16 = float(jnp.max(jnp.abs(out_bf16 - ref)))
    assert jnp.allclose(out_bf16, ref, rtol=1e-1, atol=1e-1), err16

    print("KERNEL_OK")
</pallas_src>

<mosaic_0001>
module attributes {stable_mosaic.version = 11 : i64} {
  func.func @cnn_fused_kernel(%arg0: i32, %arg1: memref<1x28x28xf32, #tpu.memory_space<vmem>>, %arg2: memref<160x448xf32, #tpu.memory_space<vmem>>, %arg3: memref<1x448xf32, #tpu.memory_space<vmem>>, %arg4: memref<1440x448xf32, #tpu.memory_space<vmem>>, %arg5: memref<1x448xf32, #tpu.memory_space<vmem>>, %arg6: memref<1568x128xf32, #tpu.memory_space<vmem>>, %arg7: memref<1x128xf32, #tpu.memory_space<vmem>>, %arg8: memref<1x1x128xf32, #tpu.memory_space<vmem>>, %arg9: memref<32x32xf32, #tpu.memory_space<vmem>>, %arg10: memref<18x288xf32, #tpu.memory_space<vmem>>) attributes {dimension_semantics = [#tpu.dimension_semantics<parallel>], iteration_bounds = array<i64: 2>, scalar_prefetch = 0 : i64, scratch_operands = 2 : i64, tpu.core_type = #tpu.core_type<tc>, window_params = [{transform_indices = @transform_0, window_bounds = array<i64: 1, 28, 28>}, {pipeline_mode = #tpu.pipeline_mode<synchronous>, transform_indices = @transform_1, window_bounds = array<i64: 160, 448>}, {pipeline_mode = #tpu.pipeline_mode<synchronous>, transform_indices = @transform_2, window_bounds = array<i64: 1, 448>}, {pipeline_mode = #tpu.pipeline_mode<synchronous>, transform_indices = @transform_3, window_bounds = array<i64: 1440, 448>}, {pipeline_mode = #tpu.pipeline_mode<synchronous>, transform_indices = @transform_4, window_bounds = array<i64: 1, 448>}, {pipeline_mode = #tpu.pipeline_mode<synchronous>, transform_indices = @transform_5, window_bounds = array<i64: 1568, 128>}, {pipeline_mode = #tpu.pipeline_mode<synchronous>, transform_indices = @transform_6, window_bounds = array<i64: 1, 128>}, {transform_indices = @transform_7, window_bounds = array<i64: 1, 1, 128>}]} {
    %cst = arith.constant 0.000000e+00 : f32
    %0 = vector.broadcast %cst : f32 to vector<32x32xf32>
    %c0 = arith.constant 0 : index
    %c0_0 = arith.constant 0 : index
    %1 = vector.load %arg9[%c0, %c0_0] : memref<32x32xf32, #tpu.memory_space<vmem>>, vector<32x32xf32>
    tpu.vector_store %arg9[%c0, %c0_0], %0 {strides = array<i32>} : memref<32x32xf32, #tpu.memory_space<vmem>>, vector<32x32xf32>,
    %c0_1 = arith.constant 0 : index
    %c0_2 = arith.constant 0 : index
    %c0_3 = arith.constant 0 : index
    %2 = vector.load %arg1[%c0_1, %c0_2, %c0_3] : memref<1x28x28xf32, #tpu.memory_space<vmem>>, vector<1x28x28xf32>
    %3 = vector.shape_cast %2 : vector<1x28x28xf32> to vector<28x28xf32>
    %c2 = arith.constant 2 : index
    %c2_4 = arith.constant 2 : index
    %4 = vector.load %arg9[%c2, %c2_4] : memref<32x32xf32, #tpu.memory_space<vmem>>, vector<28x28xf32>
    tpu.vector_store %arg9[%c2, %c2_4], %3 {strides = array<i32>} : memref<32x32xf32, #tpu.memory_space<vmem>>, vector<28x28xf32>,
    %c0_5 = arith.constant 0 : index
    %c0_6 = arith.constant 0 : index
    %5 = vector.load %arg9[%c0_5, %c0_6] : memref<32x32xf32, #tpu.memory_space<vmem>>, vector<28x32xf32>
    %c1 = arith.constant 1 : index
    %c0_7 = arith.constant 0 : index
    %6 = vector.load %arg9[%c1, %c0_7] : memref<32x32xf32, #tpu.memory_space<vmem>>, vector<28x32xf32>
    %c2_8 = arith.constant 2 : index
    %c0_9 = arith.constant 0 : index
    %7 = vector.load %arg9[%c2_8, %c0_9] : memref<32x32xf32, #tpu.memory_space<vmem>>, vector<28x32xf32>
    %c3 = arith.constant 3 : index
    %c0_10 = arith.constant 0 : index
    %8 = vector.load %arg9[%c3, %c0_10] : memref<32x32xf32, #tpu.memory_space<vmem>>, vector<28x32xf32>
    %c4 = arith.constant 4 : index
    %c0_11 = arith.constant 0 : index
    %9 = vector.load %arg9[%c4, %c0_11] : memref<32x32xf32, #tpu.memory_space<vmem>>, vector<28x32xf32>
    %10 = tpu.concatenate %5, %6, %7, %8, %9 in 1 : vector<28x32xf32>, vector<28x32xf32>, vector<28x32xf32>, vector<28x32xf32>, vector<28x32xf32> -> vector<28x160xf32>
    %c0_12 = arith.constant 0 : index
    %c0_13 = arith.constant 0 : index
    %11 = vector.load %arg2[%c0_12, %c0_13] : memref<160x448xf32, #tpu.memory_space<vmem>>, vector<160x448xf32>
    %cst_14 = arith.constant dense<0.000000e+00> : vector<28x448xf32>
    %12 = tpu.matmul %10, %11, %cst_14 {dimension_numbers = #tpu.dot_dimension_numbers<[1], [0], [0], [1], [0, 0, 1, 1], [], []>} : vector<28x160xf32>, vector<160x448xf32>, vector<28x448xf32> -> vector<28x448xf32>
    %c0_15 = arith.constant 0 : index
    %c0_16 = arith.constant 0 : index
    %13 = vector.load %arg3[%c0_15, %c0_16] : memref<1x448xf32, #tpu.memory_space<vmem>>, vector<1x448xf32>
    %14 = vector.broadcast %13 : vector<1x448xf32> to vector<28x448xf32>
    %15 = arith.addf %12, %14 : vector<28x448xf32>
    %cst_17 = arith.constant 0.000000e+00 : f32
    %16 = vector.broadcast %cst_17 : f32 to vector<28x448xf32>
    %17 = arith.maximumf %15, %16 : vector<28x448xf32>
    %18 = vector.extract_strided_slice %17 {offsets = [0, 0], sizes = [28, 16], strides = [1, 1]} : vector<28x448xf32> to vector<28x16xf32>
    %19 = vector.extract_strided_slice %17 {offsets = [0, 16], sizes = [28, 16], strides = [1, 1]} : vector<28x448xf32> to vector<28x16xf32>
    %20 = arith.maximumf %18, %19 : vector<28x16xf32>
    %21 = vector.extract_strided_slice %17 {offsets = [0, 32], sizes = [28, 16], strides = [1, 1]} : vector<28x448xf32> to vector<28x16xf32>
    %22 = vector.extract_strided_slice %17 {offsets = [0, 48], sizes = [28, 16], strides = [1, 1]} : vector<28x448xf32> to vector<28x16xf32>
    %23 = arith.maximumf %21, %22 : vector<28x16xf32>
    %24 = vector.extract_strided_slice %17 {offsets = [0, 64], sizes = [28, 16], strides = [1, 1]} : vector<28x448xf32> to vector<28x16xf32>
    %25 = vector.extract_strided_slice %17 {offsets = [0, 80], sizes = [28, 16], strides = [1, 1]} : vector<28x448xf32> to vector<28x16xf32>
    %26 = arith.maximumf %24, %25 : vector<28x16xf32>
    %27 = vector.extract_strided_slice %17 {offsets = [0, 96], sizes = [28, 16], strides = [1, 1]} : vector<28x448xf32> to vector<28x16xf32>
    %28 = vector.extract_strided_slice %17 {offsets = [0, 112], sizes = [28, 16], strides = [1, 1]} : vector<28x448xf32> to vector<28x16xf32>
    %29 = arith.maximumf %27, %28 : vector<28x16xf32>
    %30 = vector.extract_strided_slice %17 {offsets = [0, 128], sizes = [28, 16], strides = [1, 1]} : vector<28x448xf32> to vector<28x16xf32>
    %31 = vector.extract_strided_slice %17 {offsets = [0, 144], sizes = [28, 16], strides = [1, 1]} : vector<28x448xf32> to vector<28x16xf32>
    %32 = arith.maximumf %30, %31 : vector<28x16xf32>
    %33 = vector.extract_strided_slice %17 {offsets = [0, 160], sizes = [28, 16], strides = [1, 1]} : vector<28x448xf32> to vector<28x16xf32>
    %34 = vector.extract_strided_slice %17 {offsets = [0, 176], sizes = [28, 16], strides = [1, 1]} : vector<28x448xf32> to vector<28x16xf32>
    %35 = arith.maximumf %33, %34 : vector<28x16xf32>
    %36 = vector.extract_strided_slice %17 {offsets = [0, 192], sizes = [28, 16], strides = [1, 1]} : vector<28x448xf32> to vector<28x16xf32>
    %37 = vector.extract_strided_slice %17 {offsets = [0, 208], sizes = [28, 16], strides = [1, 1]} : vector<28x448xf32> to vector<28x16xf32>
    %38 = arith.maximumf %36, %37 : vector<28x16xf32>
    %39 = vector.extract_strided_slice %17 {offsets = [0, 224], sizes = [28, 16], strides = [1, 1]} : vector<28x448xf32> to vector<28x16xf32>
    %40 = vector.extract_strided_slice %17 {offsets = [0, 240], sizes = [28, 16], strides = [1, 1]} : vector<28x448xf32> to vector<28x16xf32>
    %41 = arith.maximumf %39, %40 : vector<28x16xf32>
    %42 = vector.extract_strided_slice %17 {offsets = [0, 256], sizes = [28, 16], strides = [1, 1]} : vector<28x448xf32> to vector<28x16xf32>
    %43 = vector.extract_strided_slice %17 {offsets = [0, 272], sizes = [28, 16], strides = [1, 1]} : vector<28x448xf32> to vector<28x16xf32>
    %44 = arith.maximumf %42, %43 : vector<28x16xf32>
    %45 = vector.extract_strided_slice %17 {offsets = [0, 288], sizes = [28, 16], strides = [1, 1]} : vector<28x448xf32> to vector<28x16xf32>
    %46 = vector.extract_strided_slice %17 {offsets = [0, 304], sizes = [28, 16], strides = [1, 1]} : vector<28x448xf32> to vector<28x16xf32>
    %47 = arith.maximumf %45, %46 : vector<28x16xf32>
    %48 = vector.extract_strided_slice %17 {offsets = [0, 320], sizes = [28, 16], strides = [1, 1]} : vector<28x448xf32> to vector<28x16xf32>
    %49 = vector.extract_strided_slice %17 {offsets = [0, 336], sizes = [28, 16], strides = [1, 1]} : vector<28x448xf32> to vector<28x16xf32>
    %50 = arith.maximumf %48, %49 : vector<28x16xf32>
    %51 = vector.extract_strided_slice %17 {offsets = [0, 352], sizes = [28, 16], strides = [1, 1]} : vector<28x448xf32> to vector<28x16xf32>
    %52 = vector.extract_strided_slice %17 {offsets = [0, 368], sizes = [28, 16], strides = [1, 1]} : vector<28x448xf32> to vector<28x16xf32>
    %53 = arith.maximumf %51, %52 : vector<28x16xf32>
    %54 = vector.extract_strided_slice %17 {offsets = [0, 384], sizes = [28, 16], strides = [1, 1]} : vector<28x448xf32> to vector<28x16xf32>
    %55 = vector.extract_strided_slice %17 {offsets = [0, 400], sizes = [28, 16], strides = [1, 1]} : vector<28x448xf32> to vector<28x16xf32>
    %56 = arith.maximumf %54, %55 : vector<28x16xf32>
    %57 = vector.extract_strided_slice %17 {offsets = [0, 416], sizes = [28, 16], strides = [1, 1]} : vector<28x448xf32> to vector<28x16xf32>
    %58 = vector.extract_strided_slice %17 {offsets = [0, 432], sizes = [28, 16], strides = [1, 1]} : vector<28x448xf32> to vector<28x16xf32>
    %59 = arith.maximumf %57, %58 : vector<28x16xf32>
    %60 = tpu.concatenate %20, %23, %26, %29, %32, %35, %38, %41, %44, %47, %50, %53, %56, %59 in 1 : vector<28x16xf32>, vector<28x16xf32>, vector<28x16xf32>, vector<28x16xf32>, vector<28x16xf32>, vector<28x16xf32>, vector<28x16xf32>, vector<28x16xf32>, vector<28x16xf32>, vector<28x16xf32>, vector<28x16xf32>, vector<28x16xf32>, vector<28x16xf32>, vector<28x16xf32> -> vector<28x224xf32>
    %61 = vector.extract_strided_slice %60 {offsets = [0, 0], sizes = [1, 224], strides = [1, 1]} : vector<28x224xf32> to vector<1x224xf32>
    %62 = vector.extract_strided_slice %60 {offsets = [1, 0], sizes = [1, 224], strides = [1, 1]} : vector<28x224xf32> to vector<1x224xf32>
    %63 = arith.maximumf %61, %62 : vector<1x224xf32>
    %64 = vector.extract_strided_slice %60 {offsets = [2, 0], sizes = [1, 224], strides = [1, 1]} : vector<28x224xf32> to vector<1x224xf32>
    %65 = vector.extract_strided_slice %60 {offsets = [3, 0], sizes = [1, 224], strides = [1, 1]} : vector<28x224xf32> to vector<1x224xf32>
    %66 = arith.maximumf %64, %65 : vector<1x224xf32>
    %67 = vector.extract_strided_slice %60 {offsets = [4, 0], sizes = [1, 224], strides = [1, 1]} : vector<28x224xf32> to vector<1x224xf32>
    %68 = vector.extract_strided_slice %60 {offsets = [5, 0], sizes = [1, 224], strides = [1, 1]} : vector<28x224xf32> to vector<1x224xf32>
    %69 = arith.maximumf %67, %68 : vector<1x224xf32>
    %70 = vector.extract_strided_slice %60 {offsets = [6, 0], sizes = [1, 224], strides = [1, 1]} : vector<28x224xf32> to vector<1x224xf32>
    %71 = vector.extract_strided_slice %60 {offsets = [7, 0], sizes = [1, 224], strides = [1, 1]} : vector<28x224xf32> to vector<1x224xf32>
    %72 = arith.maximumf %70, %71 : vector<1x224xf32>
    %73 = vector.extract_strided_slice %60 {offsets = [8, 0], sizes = [1, 224], strides = [1, 1]} : vector<28x224xf32> to vector<1x224xf32>
    %74 = vector.extract_strided_slice %60 {offsets = [9, 0], sizes = [1, 224], strides = [1, 1]} : vector<28x224xf32> to vector<1x224xf32>
    %75 = arith.maximumf %73, %74 : vector<1x224xf32>
    %76 = vector.extract_strided_slice %60 {offsets = [10, 0], sizes = [1, 224], strides = [1, 1]} : vector<28x224xf32> to vector<1x224xf32>
    %77 = vector.extract_strided_slice %60 {offsets = [11, 0], sizes = [1, 224], strides = [1, 1]} : vector<28x224xf32> to vector<1x224xf32>
    %78 = arith.maximumf %76, %77 : vector<1x224xf32>
    %79 = vector.extract_strided_slice %60 {offsets = [12, 0], sizes = [1, 224], strides = [1, 1]} : vector<28x224xf32> to vector<1x224xf32>
    %80 = vector.extract_strided_slice %60 {offsets = [13, 0], sizes = [1, 224], strides = [1, 1]} : vector<28x224xf32> to vector<1x224xf32>
    %81 = arith.maximumf %79, %80 : vector<1x224xf32>
    %82 = vector.extract_strided_slice %60 {offsets = [14, 0], sizes = [1, 224], strides = [1, 1]} : vector<28x224xf32> to vector<1x224xf32>
    %83 = vector.extract_strided_slice %60 {offsets = [15, 0], sizes = [1, 224], strides = [1, 1]} : vector<28x224xf32> to vector<1x224xf32>
    %84 = arith.maximumf %82, %83 : vector<1x224xf32>
    %85 = vector.extract_strided_slice %60 {offsets = [16, 0], sizes = [1, 224], strides = [1, 1]} : vector<28x224xf32> to vector<1x224xf32>
    %86 = vector.extract_strided_slice %60 {offsets = [17, 0], sizes = [1, 224], strides = [1, 1]} : vector<28x224xf32> to vector<1x224xf32>
    %87 = arith.maximumf %85, %86 : vector<1x224xf32>
    %88 = vector.extract_strided_slice %60 {offsets = [18, 0], sizes = [1, 224], strides = [1, 1]} : vector<28x224xf32> to vector<1x224xf32>
    %89 = vector.extract_strided_slice %60 {offsets = [19, 0], sizes = [1, 224], strides = [1, 1]} : vector<28x224xf32> to vector<1x224xf32>
    %90 = arith.maximumf %88, %89 : vector<1x224xf32>
    %91 = vector.extract_strided_slice %60 {offsets = [20, 0], sizes = [1, 224], strides = [1, 1]} : vector<28x224xf32> to vector<1x224xf32>
    %92 = vector.extract_strided_slice %60 {offsets = [21, 0], sizes = [1, 224], strides = [1, 1]} : vector<28x224xf32> to vector<1x224xf32>
    %93 = arith.maximumf %91, %92 : vector<1x224xf32>
    %94 = vector.extract_strided_slice %60 {offsets = [22, 0], sizes = [1, 224], strides = [1, 1]} : vector<28x224xf32> to vector<1x224xf32>
    %95 = vector.extract_strided_slice %60 {offsets = [23, 0], sizes = [1, 224], strides = [1, 1]} : vector<28x224xf32> to vector<1x224xf32>
    %96 = arith.maximumf %94, %95 : vector<1x224xf32>
    %97 = vector.extract_strided_slice %60 {offsets = [24, 0], sizes = [1, 224], strides = [1, 1]} : vector<28x224xf32> to vector<1x224xf32>
    %98 = vector.extract_strided_slice %60 {offsets = [25, 0], sizes = [1, 224], strides = [1, 1]} : vector<28x224xf32> to vector<1x224xf32>
    %99 = arith.maximumf %97, %98 : vector<1x224xf32>
    %100 = vector.extract_strided_slice %60 {offsets = [26, 0], sizes = [1, 224], strides = [1, 1]} : vector<28x224xf32> to vector<1x224xf32>
    %101 = vector.extract_strided_slice %60 {offsets = [27, 0], sizes = [1, 224], strides = [1, 1]} : vector<28x224xf32> to vector<1x224xf32>
    %102 = arith.maximumf %100, %101 : vector<1x224xf32>
    %103 = tpu.concatenate %63, %66, %69, %72, %75, %78, %81, %84, %87, %90, %93, %96, %99, %102 in 0 : vector<1x224xf32>, vector<1x224xf32>, vector<1x224xf32>, vector<1x224xf32>, vector<1x224xf32>, vector<1x224xf32>, vector<1x224xf32>, vector<1x224xf32>, vector<1x224xf32>, vector<1x224xf32>, vector<1x224xf32>, vector<1x224xf32>, vector<1x224xf32>, vector<1x224xf32> -> vector<14x224xf32>
    %cst_18 = arith.constant 0.000000e+00 : f32
    %104 = vector.broadcast %cst_18 : f32 to vector<18x288xf32>
    %c0_19 = arith.constant 0 : index
    %c0_20 = arith.constant 0 : index
    %105 = vector.load %arg10[%c0_19, %c0_20] : memref<18x288xf32, #tpu.memory_space<vmem>>, vector<18x288xf32>
    tpu.vector_store %arg10[%c0_19, %c0_20], %104 {strides = array<i32>} : memref<18x288xf32, #tpu.memory_space<vmem>>, vector<18x288xf32>,
    %c2_21 = arith.constant 2 : index
    %c32 = arith.constant 32 : index
    %106 = vector.load %arg10[%c2_21, %c32] : memref<18x288xf32, #tpu.memory_space<vmem>>, vector<14x224xf32>
    tpu.vector_store %arg10[%c2_21, %c32], %103 {strides = array<i32>} : memref<18x288xf32, #tpu.memory_space<vmem>>, vector<14x224xf32>,
    %c0_22 = arith.constant 0 : index
    %c0_23 = arith.constant 0 : index
    %107 = vector.load %arg10[%c0_22, %c0_23] : memref<18x288xf32, #tpu.memory_space<vmem>>, vector<14x288xf32>
    %c1_24 = arith.constant 1 : index
    %c0_25 = arith.constant 0 : index
    %108 = vector.load %arg10[%c1_24, %c0_25] : memref<18x288xf32, #tpu.memory_space<vmem>>, vector<14x288xf32>
    %c2_26 = arith.constant 2 : index
    %c0_27 = arith.constant 0 : index
    %109 = vector.load %arg10[%c2_26, %c0_27] : memref<18x288xf32, #tpu.memory_space<vmem>>, vector<14x288xf32>
    %c3_28 = arith.constant 3 : index
    %c0_29 = arith.constant 0 : index
    %110 = vector.load %arg10[%c3_28, %c0_29] : memref<18x288xf32, #tpu.memory_space<vmem>>, vector<14x288xf32>
    %c4_30 = arith.constant 4 : index
    %c0_31 = arith.constant 0 : index
    %111 = vector.load %arg10[%c4_30, %c0_31] : memref<18x288xf32, #tpu.memory_space<vmem>>, vector<14x288xf32>
    %112 = tpu.concatenate %107, %108, %109, %110, %111 in 1 : vector<14x288xf32>, vector<14x288xf32>, vector<14x288xf32>, vector<14x288xf32>, vector<14x288xf32> -> vector<14x1440xf32>
    %c0_32 = arith.constant 0 : index
    %c0_33 = arith.constant 0 : index
    %113 = vector.load %arg4[%c0_32, %c0_33] : memref<1440x448xf32, #tpu.memory_space<vmem>>, vector<1440x448xf32>
    %cst_34 = arith.constant dense<0.000000e+00> : vector<14x448xf32>
    %114 = tpu.matmul %112, %113, %cst_34 {dimension_numbers = #tpu.dot_dimension_numbers<[1], [0], [0], [1], [0, 0, 1, 1], [], []>} : vector<14x1440xf32>, vector<1440x448xf32>, vector<14x448xf32> -> vector<14x448xf32>
    %c0_35 = arith.constant 0 : index
    %c0_36 = arith.constant 0 : index
    %115 = vector.load %arg5[%c0_35, %c0_36] : memref<1x448xf32, #tpu.memory_space<vmem>>, vector<1x448xf32>
    %116 = vector.broadcast %115 : vector<1x448xf32> to vector<14x448xf32>
    %117 = arith.addf %114, %116 : vector<14x448xf32>
    %cst_37 = arith.constant 0.000000e+00 : f32
    %118 = vector.broadcast %cst_37 : f32 to vector<14x448xf32>
    %119 = arith.maximumf %117, %118 : vector<14x448xf32>
    %120 = vector.extract_strided_slice %119 {offsets = [0, 0], sizes = [14, 32], strides = [1, 1]} : vector<14x448xf32> to vector<14x32xf32>
    %121 = vector.extract_strided_slice %119 {offsets = [0, 32], sizes = [14, 32], strides = [1, 1]} : vector<14x448xf32> to vector<14x32xf32>
    %122 = arith.maximumf %120, %121 : vector<14x32xf32>
    %123 = vector.extract_strided_slice %119 {offsets = [0, 64], sizes = [14, 32], strides = [1, 1]} : vector<14x448xf32> to vector<14x32xf32>
    %124 = vector.extract_strided_slice %119 {offsets = [0, 96], sizes = [14, 32], strides = [1, 1]} : vector<14x448xf32> to vector<14x32xf32>
    %125 = arith.maximumf %123, %124 : vector<14x32xf32>
    %126 = vector.extract_strided_slice %119 {offsets = [0, 128], sizes = [14, 32], strides = [1, 1]} : vector<14x448xf32> to vector<14x32xf32>
    %127 = vector.extract_strided_slice %119 {offsets = [0, 160], sizes = [14, 32], strides = [1, 1]} : vector<14x448xf32> to vector<14x32xf32>
    %128 = arith.maximumf %126, %127 : vector<14x32xf32>
    %129 = vector.extract_strided_slice %119 {offsets = [0, 192], sizes = [14, 32], strides = [1, 1]} : vector<14x448xf32> to vector<14x32xf32>
    %130 = vector.extract_strided_slice %119 {offsets = [0, 224], sizes = [14, 32], strides = [1, 1]} : vector<14x448xf32> to vector<14x32xf32>
    %131 = arith.maximumf %129, %130 : vector<14x32xf32>
    %132 = vector.extract_strided_slice %119 {offsets = [0, 256], sizes = [14, 32], strides = [1, 1]} : vector<14x448xf32> to vector<14x32xf32>
    %133 = vector.extract_strided_slice %119 {offsets = [0, 288], sizes = [14, 32], strides = [1, 1]} : vector<14x448xf32> to vector<14x32xf32>
    %134 = arith.maximumf %132, %133 : vector<14x32xf32>
    %135 = vector.extract_strided_slice %119 {offsets = [0, 320], sizes = [14, 32], strides = [1, 1]} : vector<14x448xf32> to vector<14x32xf32>
    %136 = vector.extract_strided_slice %119 {offsets = [0, 352], sizes = [14, 32], strides = [1, 1]} : vector<14x448xf32> to vector<14x32xf32>
    %137 = arith.maximumf %135, %136 : vector<14x32xf32>
    %138 = vector.extract_strided_slice %119 {offsets = [0, 384], sizes = [14, 32], strides = [1, 1]} : vector<14x448xf32> to vector<14x32xf32>
    %139 = vector.extract_strided_slice %119 {offsets = [0, 416], sizes = [14, 32], strides = [1, 1]} : vector<14x448xf32> to vector<14x32xf32>
    %140 = arith.maximumf %138, %139 : vector<14x32xf32>
    %141 = tpu.concatenate %122, %125, %128, %131, %134, %137, %140 in 1 : vector<14x32xf32>, vector<14x32xf32>, vector<14x32xf32>, vector<14x32xf32>, vector<14x32xf32>, vector<14x32xf32>, vector<14x32xf32> -> vector<14x224xf32>
    %142 = vector.extract_strided_slice %141 {offsets = [0, 0], sizes = [1, 224], strides = [1, 1]} : vector<14x224xf32> to vector<1x224xf32>
    %143 = vector.extract_strided_slice %141 {offsets = [1, 0], sizes = [1, 224], strides = [1, 1]} : vector<14x224xf32> to vector<1x224xf32>
    %144 = arith.maximumf %142, %143 : vector<1x224xf32>
    %145 = vector.extract_strided_slice %141 {offsets = [2, 0], sizes = [1, 224], strides = [1, 1]} : vector<14x224xf32> to vector<1x224xf32>
    %146 = vector.extract_strided_slice %141 {offsets = [3, 0], sizes = [1, 224], strides = [1, 1]} : vector<14x224xf32> to vector<1x224xf32>
    %147 = arith.maximumf %145, %146 : vector<1x224xf32>
    %148 = vector.extract_strided_slice %141 {offsets = [4, 0], sizes = [1, 224], strides = [1, 1]} : vector<14x224xf32> to vector<1x224xf32>
    %149 = vector.extract_strided_slice %141 {offsets = [5, 0], sizes = [1, 224], strides = [1, 1]} : vector<14x224xf32> to vector<1x224xf32>
    %150 = arith.maximumf %148, %149 : vector<1x224xf32>
    %151 = vector.extract_strided_slice %141 {offsets = [6, 0], sizes = [1, 224], strides = [1, 1]} : vector<14x224xf32> to vector<1x224xf32>
    %152 = vector.extract_strided_slice %141 {offsets = [7, 0], sizes = [1, 224], strides = [1, 1]} : vector<14x224xf32> to vector<1x224xf32>
    %153 = arith.maximumf %151, %152 : vector<1x224xf32>
    %154 = vector.extract_strided_slice %141 {offsets = [8, 0], sizes = [1, 224], strides = [1, 1]} : vector<14x224xf32> to vector<1x224xf32>
    %155 = vector.extract_strided_slice %141 {offsets = [9, 0], sizes = [1, 224], strides = [1, 1]} : vector<14x224xf32> to vector<1x224xf32>
    %156 = arith.maximumf %154, %155 : vector<1x224xf32>
    %157 = vector.extract_strided_slice %141 {offsets = [10, 0], sizes = [1, 224], strides = [1, 1]} : vector<14x224xf32> to vector<1x224xf32>
    %158 = vector.extract_strided_slice %141 {offsets = [11, 0], sizes = [1, 224], strides = [1, 1]} : vector<14x224xf32> to vector<1x224xf32>
    %159 = arith.maximumf %157, %158 : vector<1x224xf32>
    %160 = vector.extract_strided_slice %141 {offsets = [12, 0], sizes = [1, 224], strides = [1, 1]} : vector<14x224xf32> to vector<1x224xf32>
    %161 = vector.extract_strided_slice %141 {offsets = [13, 0], sizes = [1, 224], strides = [1, 1]} : vector<14x224xf32> to vector<1x224xf32>
    %162 = arith.maximumf %160, %161 : vector<1x224xf32>
    %163 = tpu.concatenate %144, %147, %150, %153, %156, %159, %162 in 0 : vector<1x224xf32>, vector<1x224xf32>, vector<1x224xf32>, vector<1x224xf32>, vector<1x224xf32>, vector<1x224xf32>, vector<1x224xf32> -> vector<7x224xf32>
    %164 = vector.extract_strided_slice %163 {offsets = [0, 0], sizes = [1, 224], strides = [1, 1]} : vector<7x224xf32> to vector<1x224xf32>
    %165 = vector.extract_strided_slice %163 {offsets = [1, 0], sizes = [1, 224], strides = [1, 1]} : vector<7x224xf32> to vector<1x224xf32>
    %166 = vector.extract_strided_slice %163 {offsets = [2, 0], sizes = [1, 224], strides = [1, 1]} : vector<7x224xf32> to vector<1x224xf32>
    %167 = vector.extract_strided_slice %163 {offsets = [3, 0], sizes = [1, 224], strides = [1, 1]} : vector<7x224xf32> to vector<1x224xf32>
    %168 = vector.extract_strided_slice %163 {offsets = [4, 0], sizes = [1, 224], strides = [1, 1]} : vector<7x224xf32> to vector<1x224xf32>
    %169 = vector.extract_strided_slice %163 {offsets = [5, 0], sizes = [1, 224], strides = [1, 1]} : vector<7x224xf32> to vector<1x224xf32>
    %170 = vector.extract_strided_slice %163 {offsets = [6, 0], sizes = [1, 224], strides = [1, 1]} : vector<7x224xf32> to vector<1x224xf32>
    %171 = tpu.concatenate %164, %165, %166, %167, %168, %169, %170 in 1 : vector<1x224xf32>, vector<1x224xf32>, vector<1x224xf32>, vector<1x224xf32>, vector<1x224xf32>, vector<1x224xf32>, vector<1x224xf32> -> vector<1x1568xf32>
    %c0_38 = arith.constant 0 : index
    %c0_39 = arith.constant 0 : index
    %172 = vector.load %arg6[%c0_38, %c0_39] : memref<1568x128xf32, #tpu.memory_space<vmem>>, vector<1568x128xf32>
    %cst_40 = arith.constant dense<0.000000e+00> : vector<1x128xf32>
    %173 = tpu.matmul %171, %172, %cst_40 {dimension_numbers = #tpu.dot_dimension_numbers<[1], [0], [0], [1], [0, 0, 1, 1], [], []>} : vector<1x1568xf32>, vector<1568x128xf32>, vector<1x128xf32> -> vector<1x128xf32>
    %c0_41 = arith.constant 0 : index
    %c0_42 = arith.constant 0 : index
    %174 = vector.load %arg7[%c0_41, %c0_42] : memref<1x128xf32, #tpu.memory_space<vmem>>, vector<1x128xf32>
    %175 = arith.addf %173, %174 : vector<1x128xf32>
    %c0_43 = arith.constant 0 : index
    %c0_44 = arith.constant 0 : index
    %c0_45 = arith.constant 0 : index
    %176 = vector.load %arg8[%c0_43, %c0_44, %c0_45] : memref<1x1x128xf32, #tpu.memory_space<vmem>>, vector<1x1x128xf32>
    %177 = vector.shape_cast %176 : vector<1x1x128xf32> to vector<1x128xf32>
    %178 = vector.shape_cast %175 : vector<1x128xf32> to vector<1x1x128xf32>
    tpu.vector_store %arg8[%c0_43, %c0_44, %c0_45], %178 {strides = array<i32>} : memref<1x1x128xf32, #tpu.memory_space<vmem>>, vector<1x1x128xf32>,
    return
  }
  func.func @transform_0(%arg0: i32) -> (i32, i32, i32) {
    %c0_i32 = arith.constant 0 : i32
    %c0_i32_0 = arith.constant 0 : i32
    %c0_i32_1 = arith.constant 0 : i32
    return %arg0, %c0_i32, %c0_i32_0 : i32, i32, i32
  }
  func.func @transform_1(%arg0: i32) -> (i32, i32) {
    %c0_i32 = arith.constant 0 : i32
    %c0_i32_0 = arith.constant 0 : i32
    %c0_i32_1 = arith.constant 0 : i32
    return %c0_i32, %c0_i32_0 : i32, i32
  }
  func.func @transform_2(%arg0: i32) -> (i32, i32) {
    %c0_i32 = arith.constant 0 : i32
    %c0_i32_0 = arith.constant 0 : i32
    %c0_i32_1 = arith.constant 0 : i32
    return %c0_i32, %c0_i32_0 : i32, i32
  }
  func.func @transform_3(%arg0: i32) -> (i32, i32) {
    %c0_i32 = arith.constant 0 : i32
    %c0_i32_0 = arith.constant 0 : i32
    %c0_i32_1 = arith.constant 0 : i32
    return %c0_i32, %c0_i32_0 : i32, i32
  }
  func.func @transform_4(%arg0: i32) -> (i32, i32) {
    %c0_i32 = arith.constant 0 : i32
    %c0_i32_0 = arith.constant 0 : i32
    %c0_i32_1 = arith.constant 0 : i32
    return %c0_i32, %c0_i32_0 : i32, i32
  }
  func.func @transform_5(%arg0: i32) -> (i32, i32) {
    %c0_i32 = arith.constant 0 : i32
    %c0_i32_0 = arith.constant 0 : i32
    %c0_i32_1 = arith.constant 0 : i32
    return %c0_i32, %c0_i32_0 : i32, i32
  }
  func.func @transform_6(%arg0: i32) -> (i32, i32) {
    %c0_i32 = arith.constant 0 : i32
    %c0_i32_0 = arith.constant 0 : i32
    %c0_i32_1 = arith.constant 0 : i32
    return %c0_i32, %c0_i32_0 : i32, i32
  }
  func.func @transform_7(%arg0: i32) -> (i32, i32, i32) {
    %c0_i32 = arith.constant 0 : i32
    %c0_i32_0 = arith.constant 0 : i32
    %c0_i32_1 = arith.constant 0 : i32
    return %arg0, %c0_i32, %c0_i32_0 : i32, i32, i32
  }
}

</mosaic_0001>

<llo_original>
// kernel: tile.13
$region0: #{tile.13}
  #allocation0 [shape = 's32[1]{0}', space=sflag, size = 0x4, scoped, tag = 'scoped memory for tile.13']
  %s0 = inlined_call_operand.vmem [shape: f32[16], index: 0, kind: input, shape index: {}]
  %s1 = inlined_call_operand.vmem [shape: f32[28,16], index: 1, kind: output, shape index: {}]
  // Predicated region
  $region2: #{tile.13} parent=0 // pred_check
    _
  $region3: #{tile.13} parent=0 // pred_check_branch
    %3 = sbr.rel (0) target = $region5
  $region4: #{tile.13} parent=0 // pred_region
    _
  $region5: #{tile.13} parent=0 // pred_fallthru
    _
  %v4 = vld [vmem:[%s0] ss:$0 sm:$0xff]
  %5 = vst [vmem:[%s1] sm:$0xff] %v4
  %s6 = scalar_lea.vmem %s1, 8
  %7 = vst [vmem:[%s6] sm:$0xff] %v4
  %s8 = scalar_lea.vmem %s1, 16
  %9 = vst [vmem:[%s8] sm:$0xff] %v4
  %s10 = scalar_lea.vmem %s1, 24
  %11 = vst [vmem:[%s10] sm:$0xff] %v4

// kernel: tile.14
$region0: #{tile.14}
  %s0 = inlined_call_operand.vmem [shape: f32[28,16], index: 0, kind: input, shape index: {}]
  %s1 = inlined_call_operand.vmem [shape: f32[1,448], index: 1, kind: output, shape index: {}]
  $region1: #{tile.14} parent=0
    #allocation0 [shape = 'u8[16384]{0}', space=vmem, size = 0x4000, scoped, tag = 'scoped mem for output reshape']
    %v2 = vld [vmem:[%s0] ss:$8 sm:$0xf]
    %vm3 = vcmask 130048
    %4 = vst.msk [vmem:[#allocation0] ss:$8 sm:$0xf] %vm3, %v2
    %s5 = scalar_lea.vmem %s0, 7
    %v6 = vld [vmem:[%s5] ss:$8 sm:$0x7]
    %7 = vrot.lane.b32.xlu0 %v6, 112
    %v8 = vpop.permute.xlu0 %7
    %vm9 = vcmask 1048448
    %10 = vst.msk [vmem:[#allocation0] ss:$8 sm:$0x7] %vm9, %v8
    %s11 = scalar_lea.vmem %s0, 6
    %v12 = vld [vmem:[%s11] ss:$8 sm:$0x7]
    %13 = vrot.lane.b32.xlu0 %v12, 96
    %v14 = vpop.permute.xlu0 %13
    %vm15 = vcmask 917248
    %16 = vst.msk [vmem:[#allocation0] ss:$8 sm:$0x7] %vm15, %v14
    %s17 = scalar_lea.vmem %s0, 5
    %v18 = vld [vmem:[%s17] ss:$8 sm:$0x7]
    %19 = vrot.lane.b32.xlu0 %v18, 80
    %v20 = vpop.permute.xlu0 %19
    %vm21 = vcmask 786048
    %22 = vst.msk [vmem:[#allocation0] ss:$8 sm:$0x7] %vm21, %v20
    %s23 = scalar_lea.vmem %s0, 4
    %v24 = vld [vmem:[%s23] ss:$8 sm:$0x7]
    %25 = vrot.lane.b32.xlu0 %v24, 64
    %v26 = vpop.permute.xlu0 %25
    %vm27 = vcmask 654848
    %28 = vst.msk [vmem:[#allocation0] ss:$8 sm:$0x7] %vm27, %v26
    %s29 = scalar_lea.vmem %s0, 3
    %v30 = vld [vmem:[%s29] ss:$8 sm:$0xf]
    %31 = vrot.lane.b32.xlu0 %v30, 48
    %v32 = vpop.permute.xlu0 %31
    %vm33 = vcmask 523648
    %34 = vst.msk [vmem:[#allocation0] ss:$8 sm:$0xf] %vm33, %v32
    %s35 = scalar_lea.vmem %s0, 2
    %v36 = vld [vmem:[%s35] ss:$8 sm:$0xf]
    %37 = vrot.lane.b32.xlu0 %v36, 32
    %v38 = vpop.permute.xlu0 %37
    %vm39 = vcmask 392448
    %40 = vst.msk [vmem:[#allocation0] ss:$8 sm:$0xf] %vm39, %v38
    %s41 = scalar_lea.vmem %s0, 1
    %v42 = vld [vmem:[%s41] ss:$8 sm:$0xf]
    %43 = vrot.lane.b32.xlu0 %v42, 16
    %v44 = vpop.permute.xlu0 %43
    %vm45 = vcmask 261248
    %46 = vst.msk [vmem:[#allocation0] ss:$8 sm:$0xf] %vm45, %v44
    %s48 = sshll.u32 1, 1
    %s49 = ssub.s32 %s48, 1
    %v51 = vld [vmem:[#allocation0] sm:%s49]
    %s52 = sshll.u32 1, 1
    %s53 = ssub.s32 %s52, 1
    %54 = vst [vmem:[%s1] sm:%s53] %v51
    %s55 = scalar_lea.vmem [#allocation0], 8
    %v56 = vld [vmem:[%s55] sm:%s49]
    %s57 = sshll.u32 1, 1
    %s58 = ssub.s32 %s57, 1
    %s59 = scalar_lea.vmem %s1, 1
    %60 = vst [vmem:[%s59] sm:%s58] %v56
    %s61 = scalar_lea.vmem [#allocation0], 16
    %v62 = vld [vmem:[%s61] sm:%s49]
    %s63 = sshll.u32 1, 1
    %s64 = ssub.s32 %s63, 1
    %s65 = smul.addr 1, 2
    %s66 = scalar_lea.vmem %s1, %s65
    %67 = vst [vmem:[%s66] sm:%s64] %v62
    %s68 = scalar_lea.vmem [#allocation0], 24
    %v69 = vld [vmem:[%s68] sm:%s49]
    %s70 = sshll.u32 1, 1
    %s71 = ssub.s32 %s70, 1
    %s72 = smul.addr 1, 3
    %s73 = scalar_lea.vmem %s1, %s72
    %74 = vst [vmem:[%s73] sm:%s71] %v69

// kernel: tile.18
$region0: #{tile.18}
  #allocation0 [shape = 's32[1]{0}', space=sflag, size = 0x4, scoped, tag = 'scoped memory for tile.18']
  %s0 = inlined_call_operand.vmem [shape: f32[32], index: 0, kind: input, shape index: {}]
  %s1 = inlined_call_operand.vmem [shape: f32[14,32], index: 1, kind: output, shape index: {}]
  // Predicated region
  $region2: #{tile.18} parent=0 // pred_check
    _
  $region3: #{tile.18} parent=0 // pred_check_branch
    %3 = sbr.rel (0) target = $region5
  $region4: #{tile.18} parent=0 // pred_region
    _
  $region5: #{tile.18} parent=0 // pred_fallthru
    _
  %v4 = vld [vmem:[%s0] ss:$0 sm:$0xff]
  %5 = vst [vmem:[%s1] sm:$0xff] %v4
  %s6 = scalar_lea.vmem %s1, 8
  %7 = vst [vmem:[%s6] sm:$0xff] %v4

// kernel: tile.19
$region0: #{tile.19}
  %s0 = inlined_call_operand.vmem [shape: f32[14,32], index: 0, kind: input, shape index: {}]
  %s1 = inlined_call_operand.vmem [shape: f32[1,448], index: 1, kind: output, shape index: {}]
  $region1: #{tile.19} parent=0
    #allocation0 [shape = 'u8[16384]{0}', space=vmem, size = 0x4000, scoped, tag = 'scoped mem for output reshape']
    %v2 = vld [vmem:[%s0] ss:$4 sm:$0xf]
    %vm3 = vcmask 261120
    %4 = vst.msk [vmem:[#allocation0] ss:$8 sm:$0xf] %vm3, %v2
    %s5 = scalar_lea.vmem %s0, 3
    %v6 = vld [vmem:[%s5] ss:$4 sm:$0x7]
    %7 = vrot.lane.b32.xlu0 %v6, 96
    %v8 = vpop.permute.xlu0 %7
    %vm9 = vcmask 1048320
    %10 = vst.msk [vmem:[#allocation0] ss:$8 sm:$0x7] %vm9, %v8
    %s11 = scalar_lea.vmem %s0, 2
    %v12 = vld [vmem:[%s11] ss:$4 sm:$0x7]
    %13 = vrot.lane.b32.xlu0 %v12, 64
    %v14 = vpop.permute.xlu0 %13
    %vm15 = vcmask 785920
    %16 = vst.msk [vmem:[#allocation0] ss:$8 sm:$0x7] %vm15, %v14
    %s17 = scalar_lea.vmem %s0, 1
    %v18 = vld [vmem:[%s17] ss:$4 sm:$0xf]
    %19 = vrot.lane.b32.xlu0 %v18, 32
    %v20 = vpop.permute.xlu0 %19
    %vm21 = vcmask 523520
    %22 = vst.msk [vmem:[#allocation0] ss:$8 sm:$0xf] %vm21, %v20
    %s24 = sshll.u32 1, 1
    %s25 = ssub.s32 %s24, 1
    %v27 = vld [vmem:[#allocation0] sm:%s25]
    %s28 = sshll.u32 1, 1
    %s29 = ssub.s32 %s28, 1
    %30 = vst [vmem:[%s1] sm:%s29] %v27
    %s31 = scalar_lea.vmem [#allocation0], 8
    %v32 = vld [vmem:[%s31] sm:%s25]
    %s33 = sshll.u32 1, 1
    %s34 = ssub.s32 %s33, 1
    %s35 = scalar_lea.vmem %s1, 1
    %36 = vst [vmem:[%s35] sm:%s34] %v32
    %s37 = scalar_lea.vmem [#allocation0], 16
    %v38 = vld [vmem:[%s37] sm:%s25]
    %s39 = sshll.u32 1, 1
    %s40 = ssub.s32 %s39, 1
    %s41 = smul.addr 1, 2
    %s42 = scalar_lea.vmem %s1, %s41
    %43 = vst [vmem:[%s42] sm:%s40] %v38
    %s44 = scalar_lea.vmem [#allocation0], 24
    %v45 = vld [vmem:[%s44] sm:%s25]
    %s46 = sshll.u32 1, 1
    %s47 = ssub.s32 %s46, 1
    %s48 = smul.addr 1, 3
    %s49 = scalar_lea.vmem %s1, %s48
    %50 = vst [vmem:[%s49] sm:%s47] %v45

// kernel: cnn_forward.1
$region0: #{cnn_forward.1}
  #allocation0 [shape = 'u32[]', space=smem, size = 0x4, offset = 0x4, fixed_abs, tag = 'smem constant byte address 0x4 - core index']
  #allocation1 [shape = 'u32[144,128]{1,0:T(1,128)}', space=vmem, size = 0x12000, scoped, tag = 'internal scratch']
  #allocation2 [shape = 'f32[32,32]{1,0:T(8,128)}', space=vmem, size = 0x4000, scoped, tag = 'scratch operand']
  #allocation3 [shape = 'f32[18,288]{1,0:T(8,128)}', space=vmem, size = 0x9000, scoped, tag = 'scratch operand']
  %s0 = inlined_call_operand.vmem [shape: f32[2,28,28], index: 0, kind: input, shape index: {}]
  %s1 = inlined_call_operand.vmem [shape: f32[160,448], index: 1, kind: input, shape index: {}]
  %s2 = inlined_call_operand.vmem [shape: f32[1,448], index: 2, kind: input, shape index: {}]
  %s3 = inlined_call_operand.vmem [shape: f32[1440,448], index: 3, kind: input, shape index: {}]
  %s4 = inlined_call_operand.vmem [shape: f32[1,448], index: 4, kind: input, shape index: {}]
  %s5 = inlined_call_operand.vmem [shape: f32[1568,128], index: 5, kind: input, shape index: {}]
  %s6 = inlined_call_operand.vmem [shape: f32[1,128], index: 6, kind: input, shape index: {}]
  %s7 = inlined_call_operand.hbm [shape: f32[2,1,128], index: 7, kind: output, shape index: {}]
  %s8 = sld [smem:[#allocation0]]
  $region61: #{cnn_forward.1} parent=0
    _
  %s10 = ssub.s32 1, %s8
  %s11 = scalar_select 0, %s10, %s8
  $region1: #{cnn_forward.1} parent=0
    #allocation4 [shape = 'u8[1024]{0}', space=vmem, size = 0x400, scoped, tag = 'output window, operand 0']
    #allocation5 [shape = 's32[2]{0}', space=sflag, size = 0x8, scoped, tag = 'scoped memory for cnn_forward.1']
    %12 = vsyncpa [#allocation5], 0
    %s13 = scalar_lea.sflag [#allocation5], 1
    %14 = vsyncpa %s13, 0
    loop: start=0, step=1, limit=4
    $region2: #{cnn_forward.1} parent=1 // loop_pre_header
      _
    $region3: #{cnn_forward.1} parent=1 // loop_header
      %s16 = sphi 0, %s20
      %p17 = scmp.ge.s32.totalorder %s16, 4
      %s26 = sphi 0, %s28
      %s29 = sphi 0, %s26
      %s30 = sphi 0, %s29
      %s46 = sphi 0, %s30
      %s50 = sphi 0, %s50
      %s52 = sphi 0, %s50
      %s53 = sphi 0, %s52
      %s67 = sphi 0, %s53
      %s71 = sphi 0, %s71
      %s73 = sphi 0, %s71
      %s74 = sphi 0, %s73
      %s88 = sphi 0, %s74
      %s92 = sphi 0, %s92
      %s94 = sphi 0, %s92
      %s95 = sphi 0, %s94
      %s109 = sphi 0, %s95
      %s113 = sphi 0, %s113
      %s115 = sphi 0, %s113
      %s116 = sphi 0, %s115
      %s130 = sphi 0, %s116
      %s134 = sphi 0, %s134
      %s136 = sphi 0, %s134
      %s137 = sphi 0, %s136
      %s151 = sphi 0, %s137
      %s155 = sphi 0, %s155
      %s157 = sphi 0, %s155
      %s158 = sphi 0, %s157
      %s172 = sphi 0, %s158
      %s178 = sphi 0, %s180
      %s181 = sphi 0, %s178
      %s182 = sphi 0, %s181
      %s198 = sphi 0, %s182
    $region4: #{cnn_forward.1} parent=1 // loop_header_branch
      %19 = sbr.rel (%p17) target = $region8
    $region5: #{cnn_forward.1} parent=1 // loop_body
      %s21 = ssub.s32 %s16, 1
      %s22 = ssub.s32 %s16, 2
      %s23 = sadd.s32 %s16, 1
      %s24 = ssub.s32 %s16, %s23
      %p25 = scmp.eq.s32.totalorder %s24, 0
      %s27 = sadd.s32 %s26, 1
      %s28 = scalar_select %p25, %s26, %s27
      %p31 = pneg %p25
      %p32 = scmp.eq.s32.totalorder %s16, 1
      %p33 = por %p31, %p32
      %p34 = scmp.ne.s32.totalorder %s26, %s29
      %p35 = scmp.eq.s32.totalorder %s16, 0
      %p36 = por %p34, %p35
      %p37 = scmp.ne.s32.totalorder %s26, %s29
      %p38 = scmp.eq.s32.totalorder %s21, 1
      %p39 = por %p37, %p38
      %p40 = scmp.ne.s32.totalorder %s29, %s30
      %p41 = scmp.eq.s32.totalorder %s21, 0
      %p42 = por %p40, %p41
      %p43 = scmp.ne.s32.totalorder %s29, %s30
      %p44 = scmp.eq.s32.totalorder %s22, 1
      %p45 = por %p43, %p44
      %p47 = scmp.ne.s32.totalorder %s30, %s46
      %p48 = scmp.eq.s32.totalorder %s22, 0
      %p49 = por %p47, %p48
      %s51 = sadd.s32 %s50, 1
      %p54 = scmp.eq.s32.totalorder %s16, 1
      %p55 = scmp.ne.s32.totalorder %s50, %s52
      %p56 = scmp.eq.s32.totalorder %s16, 0
      %p57 = por %p55, %p56
      %p58 = scmp.ne.s32.totalorder %s50, %s52
      %p59 = scmp.eq.s32.totalorder %s21, 1
      %p60 = por %p58, %p59
      %p61 = scmp.ne.s32.totalorder %s52, %s53
      %p62 = scmp.eq.s32.totalorder %s21, 0
      %p63 = por %p61, %p62
      %p64 = scmp.ne.s32.totalorder %s52, %s53
      %p65 = scmp.eq.s32.totalorder %s22, 1
      %p66 = por %p64, %p65
      %p68 = scmp.ne.s32.totalorder %s53, %s67
      %p69 = scmp.eq.s32.totalorder %s22, 0
      %p70 = por %p68, %p69
      %s72 = sadd.s32 %s71, 1
      %p75 = scmp.eq.s32.totalorder %s16, 1
      %p76 = scmp.ne.s32.totalorder %s71, %s73
      %p77 = scmp.eq.s32.totalorder %s16, 0
      %p78 = por %p76, %p77
      %p79 = scmp.ne.s32.totalorder %s71, %s73
      %p80 = scmp.eq.s32.totalorder %s21, 1
      %p81 = por %p79, %p80
      %p82 = scmp.ne.s32.totalorder %s73, %s74
      %p83 = scmp.eq.s32.totalorder %s21, 0
      %p84 = por %p82, %p83
      %p85 = scmp.ne.s32.totalorder %s73, %s74
      %p86 = scmp.eq.s32.totalorder %s22, 1
      %p87 = por %p85, %p86
      %p89 = scmp.ne.s32.totalorder %s74, %s88
      %p90 = scmp.eq.s32.totalorder %s22, 0
      %p91 = por %p89, %p90
      %s93 = sadd.s32 %s92, 1
      %p96 = scmp.eq.s32.totalorder %s16, 1
      %p97 = scmp.ne.s32.totalorder %s92, %s94
      %p98 = scmp.eq.s32.totalorder %s16, 0
      %p99 = por %p97, %p98
      %p100 = scmp.ne.s32.totalorder %s92, %s94
      %p101 = scmp.eq.s32.totalorder %s21, 1
      %p102 = por %p100, %p101
      %p103 = scmp.ne.s32.totalorder %s94, %s95
      %p104 = scmp.eq.s32.totalorder %s21, 0
      %p105 = por %p103, %p104
      %p106 = scmp.ne.s32.totalorder %s94, %s95
      %p107 = scmp.eq.s32.totalorder %s22, 1
      %p108 = por %p106, %p107
      %p110 = scmp.ne.s32.totalorder %s95, %s109
      %p111 = scmp.eq.s32.totalorder %s22, 0
      %p112 = por %p110, %p111
      %s114 = sadd.s32 %s113, 1
      %p117 = scmp.eq.s32.totalorder %s16, 1
      %p118 = scmp.ne.s32.totalorder %s113, %s115
      %p119 = scmp.eq.s32.totalorder %s16, 0
      %p120 = por %p118, %p119
      %p121 = scmp.ne.s32.totalorder %s113, %s115
      %p122 = scmp.eq.s32.totalorder %s21, 1
      %p123 = por %p121, %p122
      %p124 = scmp.ne.s32.totalorder %s115, %s116
      %p125 = scmp.eq.s32.totalorder %s21, 0
      %p126 = por %p124, %p125
      %p127 = scmp.ne.s32.totalorder %s115, %s116
      %p128 = scmp.eq.s32.totalorder %s22, 1
      %p129 = por %p127, %p128
      %p131 = scmp.ne.s32.totalorder %s116, %s130
      %p132 = scmp.eq.s32.totalorder %s22, 0
      %p133 = por %p131, %p132
      %s135 = sadd.s32 %s134, 1
      %p138 = scmp.eq.s32.totalorder %s16, 1
      %p139 = scmp.ne.s32.totalorder %s134, %s136
      %p140 = scmp.eq.s32.totalorder %s16, 0
      %p141 = por %p139, %p140
      %p142 = scmp.ne.s32.totalorder %s134, %s136
      %p143 = scmp.eq.s32.totalorder %s21, 1
      %p144 = por %p142, %p143
      %p145 = scmp.ne.s32.totalorder %s136, %s137
      %p146 = scmp.eq.s32.totalorder %s21, 0
      %p147 = por %p145, %p146
      %p148 = scmp.ne.s32.totalorder %s136, %s137
      %p149 = scmp.eq.s32.totalorder %s22, 1
      %p150 = por %p148, %p149
      %p152 = scmp.ne.s32.totalorder %s137, %s151
      %p153 = scmp.eq.s32.totalorder %s22, 0
      %p154 = por %p152, %p153
      %s156 = sadd.s32 %s155, 1
      %p159 = scmp.eq.s32.totalorder %s16, 1
      %p160 = scmp.ne.s32.totalorder %s155, %s157
      %p161 = scmp.eq.s32.totalorder %s16, 0
      %p162 = por %p160, %p161
      %p163 = scmp.ne.s32.totalorder %s155, %s157
      %p164 = scmp.eq.s32.totalorder %s21, 1
      %p165 = por %p163, %p164
      %p166 = scmp.ne.s32.totalorder %s157, %s158
      %p167 = scmp.eq.s32.totalorder %s21, 0
      %p168 = por %p166, %p167
      %p169 = scmp.ne.s32.totalorder %s157, %s158
      %p170 = scmp.eq.s32.totalorder %s22, 1
      %p171 = por %p169, %p170
      %p173 = scmp.ne.s32.totalorder %s158, %s172
      %p174 = scmp.eq.s32.totalorder %s22, 0
      %p175 = por %p173, %p174
      %s176 = ssub.s32 %s16, %s23
      %p177 = scmp.eq.s32.totalorder %s176, 0
      %s179 = sadd.s32 %s178, 1
      %s180 = scalar_select %p177, %s178, %s179
      %p183 = pneg %p177
      %p184 = scmp.eq.s32.totalorder %s16, 1
      %p185 = por %p183, %p184
      %p186 = scmp.ne.s32.totalorder %s178, %s181
      %p187 = scmp.eq.s32.totalorder %s16, 0
      %p188 = por %p186, %p187
      %p189 = scmp.ne.s32.totalorder %s178, %s181
      %p190 = scmp.eq.s32.totalorder %s21, 1
      %p191 = por %p189, %p190
      %p192 = scmp.ne.s32.totalorder %s181, %s182
      %p193 = scmp.eq.s32.totalorder %s21, 0
      %p194 = por %p192, %p193
      %p195 = scmp.ne.s32.totalorder %s181, %s182
      %p196 = scmp.eq.s32.totalorder %s22, 1
      %p197 = por %p195, %p196
      %p199 = scmp.ne.s32.totalorder %s182, %s198
      %p200 = scmp.eq.s32.totalorder %s22, 0
      %p201 = por %p199, %p200
      %p202 = scmp.le.s32.totalorder 1, %s16
      %p203 = scmp.lt.s32.totalorder %s16, 3
      %p204 = pnand %p202, %p203
      %p205 = pneg %p204
      // Predicated region
      $region9: #{cnn_forward.1} parent=5 // pred_check
        _
      $region10: #{cnn_forward.1} parent=5 // pred_check_branch
        %207 = sbr.rel (%p204) target = $region12
      $region11: #{cnn_forward.1} parent=5 // pred_region
        %s208 = ssub.s32 %s16, 1
        // Predicated region
        $region13: #{cnn_forward.1} parent=11 // pred_check
          %p209 = pneg %p63
        $region14: #{cnn_forward.1} parent=11 // pred_check_branch
          %211 = sbr.rel (%p209) target = $region16
        $region15: #{cnn_forward.1} parent=11 // pred_region
          _
        $region16: #{cnn_forward.1} parent=11 // pred_fallthru
          _
        // Predicated region
        $region17: #{cnn_forward.1} parent=11 // pred_check
          %p212 = pneg %p84
        $region18: #{cnn_forward.1} parent=11 // pred_check_branch
          %214 = sbr.rel (%p212) target = $region20
        $region19: #{cnn_forward.1} parent=11 // pred_region
          _
        $region20: #{cnn_forward.1} parent=11 // pred_fallthru
          _
        // Predicated region
        $region21: #{cnn_forward.1} parent=11 // pred_check
          %p215 = pneg %p105
        $region22: #{cnn_forward.1} parent=11 // pred_check_branch
          %217 = sbr.rel (%p215) target = $region24
        $region23: #{cnn_forward.1} parent=11 // pred_region
          _
        $region24: #{cnn_forward.1} parent=11 // pred_fallthru
          _
        // Predicated region
        $region25: #{cnn_forward.1} parent=11 // pred_check
          %p218 = pneg %p126
        $region26: #{cnn_forward.1} parent=11 // pred_check_branch
          %220 = sbr.rel (%p218) target = $region28
        $region27: #{cnn_forward.1} parent=11 // pred_region
          _
        $region28: #{cnn_forward.1} parent=11 // pred_fallthru
          _
        // Predicated region
        $region29: #{cnn_forward.1} parent=11 // pred_check
          %p221 = pneg %p147
        $region30: #{cnn_forward.1} parent=11 // pred_check_branch
          %223 = sbr.rel (%p221) target = $region32
        $region31: #{cnn_forward.1} parent=11 // pred_region
          _
        $region32: #{cnn_forward.1} parent=11 // pred_fallthru
          _
        // Predicated region
        $region33: #{cnn_forward.1} parent=11 // pred_check
          %p224 = pneg %p168
        $region34: #{cnn_forward.1} parent=11 // pred_check_branch
          %226 = sbr.rel (%p224) target = $region36
        $region35: #{cnn_forward.1} parent=11 // pred_region
          _
        $region36: #{cnn_forward.1} parent=11 // pred_fallthru
          _
      $region12: #{cnn_forward.1} parent=5 // pred_fallthru
        _
      %p227 = scmp.lt.s32.totalorder %s16, 2
      // Predicated region
      $region37: #{cnn_forward.1} parent=5 // pred_check
        %p228 = pneg %p227
      $region38: #{cnn_forward.1} parent=5 // pred_check_branch
        %230 = sbr.rel (%p228) target = $region40
      $region39: #{cnn_forward.1} parent=5 // pred_region
        // Predicated region
        $region41: #{cnn_forward.1} parent=39 // pred_check
          %p231 = pneg %p36
        $region42: #{cnn_forward.1} parent=39 // pred_check_branch
          %233 = sbr.rel (%p231) target = $region44
        $region43: #{cnn_forward.1} parent=39 // pred_region
          %p234 = scmp.lt.s32.totalorder %s16, 1
          %s235 = scalar_select %p234, %s16, 1
          %s236 = smul.addr %s235, 4
          %s237 = smul.addr %s236, 8
          %s238 = scalar_lea.vmem %s0, %s237
        $region44: #{cnn_forward.1} parent=39 // pred_fallthru
          _
      $region40: #{cnn_forward.1} parent=5 // pred_fallthru
        _
      %p239 = scmp.le.s32.totalorder 1, %s16
      %p240 = scmp.lt.s32.totalorder %s16, 3
      %p241 = pnand %p239, %p240
      %p242 = pneg %p241
      // Predicated region
      $region45: #{cnn_forward.1} parent=5 // pred_check
        _
      $region46: #{cnn_forward.1} parent=5 // pred_check_branch
        %244 = sbr.rel (%p241) target = $region48
      $region47: #{cnn_forward.1} parent=5 // pred_region
        %s245 = ssub.s32 %s16, 1
        %p246 = scmp.lt.s32.totalorder %s21, 1
        %s247 = scalar_select %p246, %s21, 1
        %s248 = smul.addr %s247, 4
        %s249 = smul.addr %s248, 8
        %s250 = scalar_lea.vmem %s0, %s249
        %p251 = pneg %p42
        %p252 = pneg %p39
        %p253 = pneg %p63
        %p254 = pneg %p60
        %p255 = pneg %p84
        %p256 = pneg %p81
        %p257 = pneg %p105
        %p258 = pneg %p102
        %p259 = pneg %p126
        %p260 = pneg %p123
        %p261 = pneg %p147
        %p262 = pneg %p144
        %p263 = pneg %p168
        %p264 = pneg %p165
        %p265 = pneg %p194
        %p266 = pneg %p191
        %s267 = sand.u32 %s181, 1
        %s268 = scalar_lea.sflag [#allocation5], %s267
        %s269 = sand.u32 %s181, 1
        %s270 = scalar_lea.vmem [#allocation4], %s269
        %p271 = scmp.lt.s32.totalorder %s21, 1
        %s272 = scalar_select %p271, %s21, 1
        %s273 = smul.addr %s272, 4
        %s274 = smul.addr %s273, 8
        %s275 = scalar_lea.vmem %s0, %s274
        %vm276 = vcmask 261120
        %277 = vst.msk [vmem:[#allocation2] sm:$0xff] %vm276, 0.0
        %278 = vst.msk [vmem:[#allocation2 + $0x8] sm:$0xff] %vm276, 0.0
        %279 = vst.msk [vmem:[#allocation2 + $0x10] sm:$0xff] %vm276, 0.0
        %280 = vst.msk [vmem:[#allocation2 + $0x18] sm:$0xff] %vm276, 0.0
        %v281 = vld [vmem:[%s275] sm:$0xff]
        %v282 = vld [vmem:[%s275 + $0x8] sm:$0xff]
        %v283 = vld [vmem:[%s275 + $0x10] sm:$0xff]
        %v284 = vld [vmem:[%s275 + $0x18] sm:$0xf]
        %289 = vrot.lane.b32.xlu0 %v281, 2
        %v290 = vpop.permute.xlu0 %289
        %291 = vrot.lane.b32.xlu0 %v282, 2
        %v292 = vpop.permute.xlu0 %291
        %293 = vrot.lane.b32.xlu0 %v283, 2
        %v294 = vpop.permute.xlu0 %293
        %295 = vrot.lane.b32.xlu0 %v284, 2
        %v296 = vpop.permute.xlu0 %295
        %vm301 = vcmask 244752
        %302 = vst.msk [vmem:[#allocation2 + $0x2] sm:$0xff] %vm301, %v290
        %303 = vst.msk [vmem:[#allocation2 + $0xa] sm:$0xff] %vm301, %v292
        %304 = vst.msk [vmem:[#allocation2 + $0x12] sm:$0xff] %vm301, %v294
        %vm305 = vcmask 240656
        %306 = vst.msk [vmem:[#allocation2 + $0x1a] sm:$0xf] %vm305, %v296
        %v307 = vld [vmem:[#allocation2] sm:$0xff]
        %v308 = vld [vmem:[#allocation2 + $0x8] sm:$0xff]
        %v309 = vld [vmem:[#allocation2 + $0x10] sm:$0xff]
        %v310 = vld [vmem:[#allocation2 + $0x18] sm:$0xf]
        %v311 = vld [vmem:[#allocation2 + $0x1] sm:$0xff]
        %v312 = vld [vmem:[#allocation2 + $0x9] sm:$0xff]
        %v313 = vld [vmem:[#allocation2 + $0x11] sm:$0xff]
        %v314 = vld [vmem:[#allocation2 + $0x19] sm:$0xf]
        %v315 = vld [vmem:[#allocation2 + $0x2] sm:$0xff]
        %v316 = vld [vmem:[#allocation2 + $0xa] sm:$0xff]
        %v317 = vld [vmem:[#allocation2 + $0x12] sm:$0xff]
        %v318 = vld [vmem:[#allocation2 + $0x1a] sm:$0xf]
        %v319 = vld [vmem:[#allocation2 + $0x3] sm:$0xff]
        %v320 = vld [vmem:[#allocation2 + $0xb] sm:$0xff]
        %v321 = vld [vmem:[#allocation2 + $0x13] sm:$0xff]
        %v322 = vld [vmem:[#allocation2 + $0x1b] sm:$0xf]
        %v323 = vld [vmem:[#allocation2 + $0x4] sm:$0xff]
        %v324 = vld [vmem:[#allocation2 + $0xc] sm:$0xff]
        %v325 = vld [vmem:[#allocation2 + $0x14] sm:$0xff]
        %v326 = vld [vmem:[#allocation2 + $0x1c] sm:$0xf]
        %331 = vrot.lane.b32.xlu0 %v311, 32
        %v332 = vpop.permute.xlu0 %331
        %333 = vrot.lane.b32.xlu0 %v312, 32
        %v334 = vpop.permute.xlu0 %333
        %335 = vrot.lane.b32.xlu0 %v313, 32
        %v336 = vpop.permute.xlu0 %335
        %337 = vrot.lane.b32.xlu0 %v314, 32
        %v338 = vpop.permute.xlu0 %337
        %347 = vrot.lane.b32.xlu0 %v315, 64
        %v348 = vpop.permute.xlu0 %347
        %349 = vrot.lane.b32.xlu0 %v316, 64
        %v350 = vpop.permute.xlu0 %349
        %351 = vrot.lane.b32.xlu0 %v317, 64
        %v352 = vpop.permute.xlu0 %351
        %353 = vrot.lane.b32.xlu0 %v318, 64
        %v354 = vpop.permute.xlu0 %353
        %363 = vrot.lane.b32.xlu0 %v319, 96
        %v364 = vpop.permute.xlu0 %363
        %365 = vrot.lane.b32.xlu0 %v320, 96
        %v366 = vpop.permute.xlu0 %365
        %367 = vrot.lane.b32.xlu0 %v321, 96
        %v368 = vpop.permute.xlu0 %367
        %369 = vrot.lane.b32.xlu0 %v322, 96
        %v370 = vpop.permute.xlu0 %369
        %v375 = vsel %vm276, %v307, %v332
        %v376 = vsel %vm276, %v308, %v334
        %v377 = vsel %vm276, %v309, %v336
        %v378 = vsel %vm276, %v310, %v338
        %vm379 = vcmask 523264
        %v380 = vsel %vm379, %v375, %v348
        %v381 = vsel %vm379, %v376, %v350
        %v382 = vsel %vm379, %v377, %v352
        %v383 = vsel %vm379, %v378, %v354
        %vm384 = vcmask 785408
        %v385 = vsel %vm384, %v380, %v364
        %v386 = vsel %vm384, %v381, %v366
        %v387 = vsel %vm384, %v382, %v368
        %v388 = vsel %vm384, %v383, %v370
        %v389 = vld [vmem:[%s1] sm:$0xff]
        %v390 = vld [vmem:[%s1 + $0x8] sm:$0xff]
        %v391 = vld [vmem:[%s1 + $0x10] sm:$0xff]
        %v392 = vld [vmem:[%s1 + $0x18] sm:$0xff]
        %v393 = vld [vmem:[%s1 + $0x20] sm:$0xff]
        %v394 = vld [vmem:[%s1 + $0x28] sm:$0xff]
        %v395 = vld [vmem:[%s1 + $0x30] sm:$0xff]
        %v396 = vld [vmem:[%s1 + $0x38] sm:$0xff]
        %v397 = vld [vmem:[%s1 + $0x40] sm:$0xff]
        %v398 = vld [vmem:[%s1 + $0x48] sm:$0xff]
        %v399 = vld [vmem:[%s1 + $0x50] sm:$0xff]
        %v400 = vld [vmem:[%s1 + $0x58] sm:$0xff]
        %v401 = vld [vmem:[%s1 + $0x60] sm:$0xff]
        %v402 = vld [vmem:[%s1 + $0x68] sm:$0xff]
        %v403 = vld [vmem:[%s1 + $0x70] sm:$0xff]
        %v404 = vld [vmem:[%s1 + $0x78] sm:$0xff]
        %v405 = vld [vmem:[%s1 + $0x80] sm:$0xff]
        %v406 = vld [vmem:[%s1 + $0x88] sm:$0xff]
        %v407 = vld [vmem:[%s1 + $0x90] sm:$0xff]
        %v408 = vld [vmem:[%s1 + $0x98] sm:$0xff]
        %v409 = vld [vmem:[%s1 + $0xa0] sm:$0xff]
        %v410 = vld [vmem:[%s1 + $0xa8] sm:$0xff]
        %v411 = vld [vmem:[%s1 + $0xb0] sm:$0xff]
        %v412 = vld [vmem:[%s1 + $0xb8] sm:$0xff]
        %v413 = vld [vmem:[%s1 + $0xc0] sm:$0xff]
        %v414 = vld [vmem:[%s1 + $0xc8] sm:$0xff]
        %v415 = vld [vmem:[%s1 + $0xd0] sm:$0xff]
        %v416 = vld [vmem:[%s1 + $0xd8] sm:$0xff]
        %v417 = vld [vmem:[%s1 + $0xe0] sm:$0xff]
        %v418 = vld [vmem:[%s1 + $0xe8] sm:$0xff]
        %v419 = vld [vmem:[%s1 + $0xf0] sm:$0xff]
        %v420 = vld [vmem:[%s1 + $0xf8] sm:$0xff]
        %v421 = vld [vmem:[%s1 + $0x100] sm:$0xff]
        %v422 = vld [vmem:[%s1 + $0x108] sm:$0xff]
        %v423 = vld [vmem:[%s1 + $0x110] sm:$0xff]
        %v424 = vld [vmem:[%s1 + $0x118] sm:$0xff]
        %v425 = vld [vmem:[%s1 + $0x120] sm:$0xff]
        %v426 = vld [vmem:[%s1 + $0x128] sm:$0xff]
        %v427 = vld [vmem:[%s1 + $0x130] sm:$0xff]
        %v428 = vld [vmem:[%s1 + $0x138] sm:$0xff]
        %v429 = vld [vmem:[%s1 + $0x140] sm:$0xff]
        %v430 = vld [vmem:[%s1 + $0x148] sm:$0xff]
        %v431 = vld [vmem:[%s1 + $0x150] sm:$0xff]
        %v432 = vld [vmem:[%s1 + $0x158] sm:$0xff]
        %v433 = vld [vmem:[%s1 + $0x160] sm:$0xff]
        %v434 = vld [vmem:[%s1 + $0x168] sm:$0xff]
        %v435 = vld [vmem:[%s1 + $0x170] sm:$0xff]
        %v436 = vld [vmem:[%s1 + $0x178] sm:$0xff]
        %v437 = vld [vmem:[%s1 + $0x180] sm:$0xff]
        %v438 = vld [vmem:[%s1 + $0x188] sm:$0xff]
        %v439 = vld [vmem:[%s1 + $0x190] sm:$0xff]
        %v440 = vld [vmem:[%s1 + $0x198] sm:$0xff]
        %v441 = vld [vmem:[%s1 + $0x1a0] sm:$0xff]
        %v442 = vld [vmem:[%s1 + $0x1a8] sm:$0xff]
        %v443 = vld [vmem:[%s1 + $0x1b0] sm:$0xff]
        %v444 = vld [vmem:[%s1 + $0x1b8] sm:$0xff]
        %v445 = vld [vmem:[%s1 + $0x1c0] sm:$0xff]
        %v446 = vld [vmem:[%s1 + $0x1c8] sm:$0xff]
        %v447 = vld [vmem:[%s1 + $0x1d0] sm:$0xff]
        %v448 = vld [vmem:[%s1 + $0x1d8] sm:$0xff]
        %v449 = vld [vmem:[%s1 + $0x1e0] sm:$0xff]
        %v450 = vld [vmem:[%s1 + $0x1e8] sm:$0xff]
        %v451 = vld [vmem:[%s1 + $0x1f0] sm:$0xff]
        %v452 = vld [vmem:[%s1 + $0x1f8] sm:$0xff]
        %v453 = vld [vmem:[%s1 + $0x200] sm:$0xff]
        %v454 = vld [vmem:[%s1 + $0x208] sm:$0xff]
        %v455 = vld [vmem:[%s1 + $0x210] sm:$0xff]
        %v456 = vld [vmem:[%s1 + $0x218] sm:$0xff]
        %v457 = vld [vmem:[%s1 + $0x220] sm:$0xff]
        %v458 = vld [vmem:[%s1 + $0x228] sm:$0xff]
        %v459 = vld [vmem:[%s1 + $0x230] sm:$0xff]
        %v460 = vld [vmem:[%s1 + $0x238] sm:$0xff]
        %v461 = vld [vmem:[%s1 + $0x240] sm:$0xff]
        %v462 = vld [vmem:[%s1 + $0x248] sm:$0xff]
        %v463 = vld [vmem:[%s1 + $0x250] sm:$0xff]
        %v464 = vld [vmem:[%s1 + $0x258] sm:$0xff]
        %v465 = vld [vmem:[%s1 + $0x260] sm:$0xff]
        %v466 = vld [vmem:[%s1 + $0x268] sm:$0xff]
        %v467 = vld [vmem:[%s1 + $0x270] sm:$0xff]
        %v468 = vld [vmem:[%s1 + $0x278] sm:$0xff]
        %v469 = vld [vmem:[%s2] sm:$0xf]
        %v471 = vlaneseq
        %v472 = vshrl.u32 %v471, 7
        %v473 = vsub.s32 0, %v472
        %v474 = vrot.slane %v469, %v473
        %v475 = vlaneseq
        %v476 = vshrl.u32 %v475, 7
        %v477 = vsub.s32 1, %v476
        %v478 = vrot.slane %v469, %v477
        %v479 = vlaneseq
        %v480 = vshrl.u32 %v479, 7
        %v481 = vsub.s32 2, %v480
        %v482 = vrot.slane %v469, %v481
        %v483 = vlaneseq
        %v484 = vshrl.u32 %v483, 7
        %v485 = vsub.s32 3, %v484
        %v486 = vrot.slane %v469, %v485
        %v492 = vsel %vm276, %v323, 0
        %v495 = vsel %vm276, %v324, 0
        %v498 = vsel %vm276, %v325, 0
        %v501 = vsel %vm276, %v326, 0
        %503 = vmatprep.subr.mxu0 %v450
        %504 = vmatpush1.msra.mxu0 %v449
        %505 = vmatprep.subr.mxu0 %v446
        %506 = vmatpush1.msra.mxu0 %v445
        %507 = vmatprep.subr.mxu0 %v442
        %508 = vmatpush1.msra.mxu0 %v441
        %509 = vmatprep.subr.mxu0 %v438
        %510 = vmatpush1.msra.mxu0 %v437
        %511 = vmatprep.subr.mxu0 %v434
        %512 = vmatpush1.msra.mxu0 %v433
        %513 = vmatprep.subr.mxu0 %v430
        %514 = vmatpush1.msra.mxu0 %v429
        %515 = vmatprep.subr.mxu0 %v426
        %516 = vmatpush1.msra.mxu0 %v425
        %517 = vmatprep.subr.mxu0 %v422
        %518 = vmatpush1.msra.mxu0 %v421
        %519 = vmatprep.subr.mxu0 %v418
        %520 = vmatpush1.msra.mxu0 %v417
        %521 = vmatprep.subr.mxu0 %v414
        %522 = vmatpush1.msra.mxu0 %v413
        %523 = vmatprep.subr.mxu0 %v410
        %524 = vmatpush1.msra.mxu0 %v409
        %525 = vmatprep.subr.mxu0 %v406
        %526 = vmatpush1.msra.mxu0 %v405
        %527 = vmatprep.subr.mxu0 %v402
        %528 = vmatpush1.msra.mxu0 %v401
        %529 = vmatprep.subr.mxu0 %v398
        %530 = vmatpush1.msra.mxu0 %v397
        %531 = vmatprep.subr.mxu0 %v394
        %532 = vmatpush1.msra.mxu0 %v393
        %533 = vmatprep.subr.mxu0 %v390
        %534 = vmatpush1.msra.mxu0 %v389
        %535 = vmatprep.subr.mxu0 0.0
        %536 = vmatpush2.msra.mxu0 0.0
        %537 = vmatprep.subr.mxu0 0.0
        %538 = vmatpush2.msra.mxu0 0.0
        %539 = vmatprep.subr.mxu0 0.0
        %540 = vmatpush2.msra.mxu0 0.0
        %541 = vmatprep.subr.mxu0 0.0
        %542 = vmatpush2.msra.mxu0 0.0
        %543 = vmatprep.subr.mxu0 0.0
        %544 = vmatpush2.msra.mxu0 0.0
        %545 = vmatprep.subr.mxu0 0.0
        %546 = vmatpush2.msra.mxu0 0.0
        %547 = vmatprep.subr.mxu0 0.0
        %548 = vmatpush2.msra.mxu0 0.0
        %549 = vmatprep.subr.mxu0 0.0
        %550 = vmatpush2.msra.mxu0 0.0
        %551 = vmatprep.subr.mxu0 0.0
        %552 = vmatpush2.msra.mxu0 0.0
        %553 = vmatprep.subr.mxu0 0.0
        %554 = vmatpush2.msra.mxu0 0.0
        %555 = vmatprep.subr.mxu0 0.0
        %556 = vmatpush2.msra.mxu0 0.0
        %557 = vmatprep.subr.mxu0 0.0
        %558 = vmatpush2.msra.mxu0 0.0
        %559 = vmatprep.subr.mxu0 %v466
        %560 = vmatpush2.msra.mxu0 %v465
        %561 = vmatprep.subr.mxu0 %v462
        %562 = vmatpush2.msra.mxu0 %v461
        %563 = vmatprep.subr.mxu0 %v458
        %564 = vmatpush2.msra.mxu0 %v457
        %565 = vmatprep.subr.mxu0 %v454
        %566 = vmatpush2.msra.mxu0 %v453
        %567 = vmatprep.mubr.f32.mxu0 %v492
        %568 = vmatmul.mubr.f32.gmra.mxu0 %v385
        %v569 = vpop.f32.mrf.mxu0
        %v570 = vadd.f32 %v474, %v569
        %v571 = vpop.f32.mrf.mxu0
        %v572 = vadd.f32 %v478, %v571
        %573 = vmatprep.mubr.f32.mxu0 %v495
        %574 = vmatmul.mubr.f32.gmra.mxu0 %v386
        %v575 = vpop.f32.mrf.mxu0
        %v576 = vadd.f32 %v474, %v575
        %v577 = vpop.f32.mrf.mxu0
        %v578 = vadd.f32 %v478, %v577
        %579 = vmatprep.mubr.f32.mxu0 %v498
        %580 = vmatmul.mubr.f32.gmra.mxu0 %v387
        %v581 = vpop.f32.mrf.mxu0
        %v582 = vadd.f32 %v474, %v581
        %v583 = vpop.f32.mrf.mxu0
        %v584 = vadd.f32 %v478, %v583
        %585 = vmatprep.mubr.f32.mxu0 %v501
        %586 = vmatmul.mubr.f32.gmra.mxu0 %v388
        %v587 = vpop.f32.mrf.mxu0
        %v588 = vadd.f32 %v474, %v587
        %v589 = vpop.f32.mrf.mxu0
        %v590 = vadd.f32 %v478, %v589
        %591 = vdwg.mxu0
        %592 = vmatprep.subr.mxu0 %v452
        %593 = vmatpush1.msra.mxu0 %v451
        %594 = vmatprep.subr.mxu0 %v448
        %595 = vmatpush1.msra.mxu0 %v447
        %596 = vmatprep.subr.mxu0 %v444
        %597 = vmatpush1.msra.mxu0 %v443
        %598 = vmatprep.subr.mxu0 %v440
        %599 = vmatpush1.msra.mxu0 %v439
        %600 = vmatprep.subr.mxu0 %v436
        %601 = vmatpush1.msra.mxu0 %v435
        %602 = vmatprep.subr.mxu0 %v432
        %603 = vmatpush1.msra.mxu0 %v431
        %604 = vmatprep.subr.mxu0 %v428
        %605 = vmatpush1.msra.mxu0 %v427
        %606 = vmatprep.subr.mxu0 %v424
        %607 = vmatpush1.msra.mxu0 %v423
        %608 = vmatprep.subr.mxu0 %v420
        %609 = vmatpush1.msra.mxu0 %v419
        %610 = vmatprep.subr.mxu0 %v416
        %611 = vmatpush1.msra.mxu0 %v415
        %612 = vmatprep.subr.mxu0 %v412
        %613 = vmatpush1.msra.mxu0 %v411
        %614 = vmatprep.subr.mxu0 %v408
        %615 = vmatpush1.msra.mxu0 %v407
        %616 = vmatprep.subr.mxu0 %v404
        %617 = vmatpush1.msra.mxu0 %v403
        %618 = vmatprep.subr.mxu0 %v400
        %619 = vmatpush1.msra.mxu0 %v399
        %620 = vmatprep.subr.mxu0 %v396
        %621 = vmatpush1.msra.mxu0 %v395
        %622 = vmatprep.subr.mxu0 %v392
        %623 = vmatpush1.msra.mxu0 %v391
        %624 = vmatprep.subr.mxu0 0.0
        %625 = vmatpush2.msra.mxu0 0.0
        %626 = vmatprep.subr.mxu0 0.0
        %627 = vmatpush2.msra.mxu0 0.0
        %628 = vmatprep.subr.mxu0 0.0
        %629 = vmatpush2.msra.mxu0 0.0
        %630 = vmatprep.subr.mxu0 0.0
        %631 = vmatpush2.msra.mxu0 0.0
        %632 = vmatprep.subr.mxu0 0.0
        %633 = vmatpush2.msra.mxu0 0.0
        %634 = vmatprep.subr.mxu0 0.0
        %635 = vmatpush2.msra.mxu0 0.0
        %636 = vmatprep.subr.mxu0 0.0
        %637 = vmatpush2.msra.mxu0 0.0
        %638 = vmatprep.subr.mxu0 0.0
        %639 = vmatpush2.msra.mxu0 0.0
        %640 = vmatprep.subr.mxu0 0.0
        %641 = vmatpush2.msra.mxu0 0.0
        %642 = vmatprep.subr.mxu0 0.0
        %643 = vmatpush2.msra.mxu0 0.0
        %644 = vmatprep.subr.mxu0 0.0
        %645 = vmatpush2.msra.mxu0 0.0
        %646 = vmatprep.subr.mxu0 0.0
        %647 = vmatpush2.msra.mxu0 0.0
        %648 = vmatprep.subr.mxu0 %v468
        %649 = vmatpush2.msra.mxu0 %v467
        %650 = vmatprep.subr.mxu0 %v464
        %651 = vmatpush2.msra.mxu0 %v463
        %652 = vmatprep.subr.mxu0 %v460
        %653 = vmatpush2.msra.mxu0 %v459
        %654 = vmatprep.subr.mxu0 %v456
        %655 = vmatpush2.msra.mxu0 %v455
        %656 = vmatprep.mubr.f32.mxu0 %v492
        %657 = vmatmul.mubr.f32.gmra.mxu0 %v385
        %v658 = vpop.f32.mrf.mxu0
        %v659 = vadd.f32 %v482, %v658
        %v660 = vpop.f32.mrf.mxu0
        %v661 = vadd.f32 %v486, %v660
        %662 = vmatprep.mubr.f32.mxu0 %v495
        %663 = vmatmul.mubr.f32.gmra.mxu0 %v386
        %v664 = vpop.f32.mrf.mxu0
        %v665 = vadd.f32 %v482, %v664
        %v666 = vpop.f32.mrf.mxu0
        %v667 = vadd.f32 %v486, %v666
        %668 = vmatprep.mubr.f32.mxu0 %v498
        %669 = vmatmul.mubr.f32.gmra.mxu0 %v387
        %v670 = vpop.f32.mrf.mxu0
        %v671 = vadd.f32 %v482, %v670
        %v672 = vpop.f32.mrf.mxu0
        %v673 = vadd.f32 %v486, %v672
        %674 = vmatprep.mubr.f32.mxu0 %v501
        %675 = vmatmul.mubr.f32.gmra.mxu0 %v388
        %v676 = vpop.f32.mrf.mxu0
        %v677 = vadd.f32 %v482, %v676
        %v678 = vpop.f32.mrf.mxu0
        %v679 = vadd.f32 %v486, %v678
        %680 = vdwg.mxu0
        %v681 = vmax.f32 %v570, 0.0
        %v682 = vmax.f32 %v572, 0.0
        %v683 = vmax.f32 %v659, 0.0
        %v684 = vmax.f32 %v661, 0.0
        %v685 = vmax.f32 %v576, 0.0
        %v686 = vmax.f32 %v578, 0.0
        %v687 = vmax.f32 %v665, 0.0
        %v688 = vmax.f32 %v667, 0.0
        %v689 = vmax.f32 %v582, 0.0
        %v690 = vmax.f32 %v584, 0.0
        %v691 = vmax.f32 %v671, 0.0
        %v692 = vmax.f32 %v673, 0.0
        %v693 = vmax.f32 %v588, 0.0
        %v694 = vmax.f32 %v590, 0.0
        %v695 = vmax.f32 %v677, 0.0
        %v696 = vmax.f32 %v679, 0.0
        %701 = vrot.lane.b32.xlu0 %v681, 112
        %v702 = vpop.permute.xlu0 %701
        %703 = vrot.lane.b32.xlu0 %v685, 112
        %v704 = vpop.permute.xlu0 %703
        %705 = vrot.lane.b32.xlu0 %v689, 112
        %v706 = vpop.permute.xlu0 %705
        %707 = vrot.lane.b32.xlu0 %v693, 112
        %v708 = vpop.permute.xlu0 %707
        %v713 = vmax.f32 %v681, %v702
        %v714 = vmax.f32 %v685, %v704
        %v715 = vmax.f32 %v689, %v706
        %v716 = vmax.f32 %v693, %v708
        %721 = vrot.lane.b32.xlu0 %v682, 112
        %v722 = vpop.permute.xlu0 %721
        %723 = vrot.lane.b32.xlu0 %v686, 112
        %v724 = vpop.permute.xlu0 %723
        %725 = vrot.lane.b32.xlu0 %v690, 112
        %v726 = vpop.permute.xlu0 %725
        %727 = vrot.lane.b32.xlu0 %v694, 112
        %v728 = vpop.permute.xlu0 %727
        %v733 = vmax.f32 %v682, %v722
        %v734 = vmax.f32 %v686, %v724
        %v735 = vmax.f32 %v690, %v726
        %v736 = vmax.f32 %v694, %v728
        %741 = vrot.lane.b32.xlu0 %v683, 112
        %v742 = vpop.permute.xlu0 %741
        %743 = vrot.lane.b32.xlu0 %v687, 112
        %v744 = vpop.permute.xlu0 %743
        %745 = vrot.lane.b32.xlu0 %v691, 112
        %v746 = vpop.permute.xlu0 %745
        %747 = vrot.lane.b32.xlu0 %v695, 112
        %v748 = vpop.permute.xlu0 %747
        %v753 = vmax.f32 %v683, %v742
        %v754 = vmax.f32 %v687, %v744
        %v755 = vmax.f32 %v691, %v746
        %v756 = vmax.f32 %v695, %v748
        %761 = vrot.lane.b32.xlu0 %v684, 112
        %v762 = vpop.permute.xlu0 %761
        %763 = vrot.lane.b32.xlu0 %v688, 112
        %v764 = vpop.permute.xlu0 %763
        %765 = vrot.lane.b32.xlu0 %v692, 112
        %v766 = vpop.permute.xlu0 %765
        %767 = vrot.lane.b32.xlu0 %v696, 112
        %v768 = vpop.permute.xlu0 %767
        %v773 = vmax.f32 %v684, %v762
        %v774 = vmax.f32 %v688, %v764
        %v775 = vmax.f32 %v692, %v766
        %v776 = vmax.f32 %v696, %v768
        %781 = vrot.lane.b32.xlu0 %v713, 112
        %v782 = vpop.permute.xlu0 %781
        %783 = vrot.lane.b32.xlu0 %v714, 112
        %v784 = vpop.permute.xlu0 %783
        %785 = vrot.lane.b32.xlu0 %v715, 112
        %v786 = vpop.permute.xlu0 %785
        %787 = vrot.lane.b32.xlu0 %v716, 112
        %v788 = vpop.permute.xlu0 %787
        %793 = vrot.lane.b32.xlu0 %v713, 96
        %v794 = vpop.permute.xlu0 %793
        %795 = vrot.lane.b32.xlu0 %v714, 96
        %v796 = vpop.permute.xlu0 %795
        %797 = vrot.lane.b32.xlu0 %v715, 96
        %v798 = vpop.permute.xlu0 %797
        %799 = vrot.lane.b32.xlu0 %v716, 96
        %v800 = vpop.permute.xlu0 %799
        %805 = vrot.lane.b32.xlu0 %v713, 80
        %v806 = vpop.permute.xlu0 %805
        %807 = vrot.lane.b32.xlu0 %v714, 80
        %v808 = vpop.permute.xlu0 %807
        %809 = vrot.lane.b32.xlu0 %v715, 80
        %v810 = vpop.permute.xlu0 %809
        %811 = vrot.lane.b32.xlu0 %v716, 80
        %v812 = vpop.permute.xlu0 %811
        %821 = vrot.lane.b32.xlu0 %v733, 64
        %v822 = vpop.permute.xlu0 %821
        %823 = vrot.lane.b32.xlu0 %v734, 64
        %v824 = vpop.permute.xlu0 %823
        %825 = vrot.lane.b32.xlu0 %v735, 64
        %v826 = vpop.permute.xlu0 %825
        %827 = vrot.lane.b32.xlu0 %v736, 64
        %v828 = vpop.permute.xlu0 %827
        %833 = vrot.lane.b32.xlu0 %v733, 48
        %v834 = vpop.permute.xlu0 %833
        %835 = vrot.lane.b32.xlu0 %v734, 48
        %v836 = vpop.permute.xlu0 %835
        %837 = vrot.lane.b32.xlu0 %v735, 48
        %v838 = vpop.permute.xlu0 %837
        %839 = vrot.lane.b32.xlu0 %v736, 48
        %v840 = vpop.permute.xlu0 %839
        %845 = vrot.lane.b32.xlu0 %v733, 32
        %v846 = vpop.permute.xlu0 %845
        %847 = vrot.lane.b32.xlu0 %v734, 32
        %v848 = vpop.permute.xlu0 %847
        %849 = vrot.lane.b32.xlu0 %v735, 32
        %v850 = vpop.permute.xlu0 %849
        %851 = vrot.lane.b32.xlu0 %v736, 32
        %v852 = vpop.permute.xlu0 %851
        %857 = vrot.lane.b32.xlu0 %v733, 16
        %v858 = vpop.permute.xlu0 %857
        %859 = vrot.lane.b32.xlu0 %v734, 16
        %v860 = vpop.permute.xlu0 %859
        %861 = vrot.lane.b32.xlu0 %v735, 16
        %v862 = vpop.permute.xlu0 %861
        %863 = vrot.lane.b32.xlu0 %v736, 16
        %v864 = vpop.permute.xlu0 %863
        %873 = vrot.lane.b32.xlu0 %v753, 112
        %v874 = vpop.permute.xlu0 %873
        %875 = vrot.lane.b32.xlu0 %v754, 112
        %v876 = vpop.permute.xlu0 %875
        %877 = vrot.lane.b32.xlu0 %v755, 112
        %v878 = vpop.permute.xlu0 %877
        %879 = vrot.lane.b32.xlu0 %v756, 112
        %v880 = vpop.permute.xlu0 %879
        %885 = vrot.lane.b32.xlu0 %v753, 96
        %v886 = vpop.permute.xlu0 %885
        %887 = vrot.lane.b32.xlu0 %v754, 96
        %v888 = vpop.permute.xlu0 %887
        %889 = vrot.lane.b32.xlu0 %v755, 96
        %v890 = vpop.permute.xlu0 %889
        %891 = vrot.lane.b32.xlu0 %v756, 96
        %v892 = vpop.permute.xlu0 %891
        %897 = vrot.lane.b32.xlu0 %v753, 80
        %v898 = vpop.permute.xlu0 %897
        %899 = vrot.lane.b32.xlu0 %v754, 80
        %v900 = vpop.permute.xlu0 %899
        %901 = vrot.lane.b32.xlu0 %v755, 80
        %v902 = vpop.permute.xlu0 %901
        %903 = vrot.lane.b32.xlu0 %v756, 80
        %v904 = vpop.permute.xlu0 %903
        %913 = vrot.lane.b32.xlu0 %v773, 64
        %v914 = vpop.permute.xlu0 %913
        %915 = vrot.lane.b32.xlu0 %v774, 64
        %v916 = vpop.permute.xlu0 %915
        %917 = vrot.lane.b32.xlu0 %v775, 64
        %v918 = vpop.permute.xlu0 %917
        %919 = vrot.lane.b32.xlu0 %v776, 64
        %v920 = vpop.permute.xlu0 %919
        %925 = vrot.lane.b32.xlu0 %v773, 48
        %v926 = vpop.permute.xlu0 %925
        %927 = vrot.lane.b32.xlu0 %v774, 48
        %v928 = vpop.permute.xlu0 %927
        %929 = vrot.lane.b32.xlu0 %v775, 48
        %v930 = vpop.permute.xlu0 %929
        %931 = vrot.lane.b32.xlu0 %v776, 48
        %v932 = vpop.permute.xlu0 %931
        %vm937 = vcmask 130048
        %v938 = vsel %vm937, %v713, %v782
        %v939 = vsel %vm937, %v714, %v784
        %v940 = vsel %vm937, %v715, %v786
        %v941 = vsel %vm937, %v716, %v788
        %v942 = vsel %vm276, %v938, %v794
        %v943 = vsel %vm276, %v939, %v796
        %v944 = vsel %vm276, %v940, %v798
        %v945 = vsel %vm276, %v941, %v800
        %vm946 = vcmask 392192
        %v947 = vsel %vm946, %v942, %v806
        %v948 = vsel %vm946, %v943, %v808
        %v949 = vsel %vm946, %v944, %v810
        %v950 = vsel %vm946, %v945, %v812
        %v951 = vsel %vm379, %v947, %v822
        %v952 = vsel %vm379, %v948, %v824
        %v953 = vsel %vm379, %v949, %v826
        %v954 = vsel %vm379, %v950, %v828
        %vm955 = vcmask 654336
        %v956 = vsel %vm955, %v951, %v834
        %v957 = vsel %vm955, %v952, %v836
        %v958 = vsel %vm955, %v953, %v838
        %v959 = vsel %vm955, %v954, %v840
        %v960 = vsel %vm384, %v956, %v846
        %v961 = vsel %vm384, %v957, %v848
        %v962 = vsel %vm384, %v958, %v850
        %v963 = vsel %vm384, %v959, %v852
        %vm964 = vcmask 916480
        %v965 = vsel %vm964, %v960, %v858
        %v966 = vsel %vm964, %v961, %v860
        %v967 = vsel %vm964, %v962, %v862
        %v968 = vsel %vm964, %v963, %v864
        %v969 = vsel %vm937, %v753, %v874
        %v970 = vsel %vm937, %v754, %v876
        %v971 = vsel %vm937, %v755, %v878
        %v972 = vsel %vm937, %v756, %v880
        %v973 = vsel %vm276, %v969, %v886
        %v974 = vsel %vm276, %v970, %v888
        %v975 = vsel %vm276, %v971, %v890
        %v976 = vsel %vm276, %v972, %v892
        %v977 = vsel %vm946, %v973, %v898
        %v978 = vsel %vm946, %v974, %v900
        %v979 = vsel %vm946, %v975, %v902
        %v980 = vsel %vm946, %v976, %v904
        %v981 = vsel %vm379, %v977, %v914
        %v982 = vsel %vm379, %v978, %v916
        %v983 = vsel %vm379, %v979, %v918
        %v984 = vsel %vm379, %v980, %v920
        %v985 = vsel %vm955, %v981, %v926
        %v986 = vsel %vm955, %v982, %v928
        %v987 = vsel %vm955, %v983, %v930
        %v988 = vsel %vm955, %v984, %v932
        %v991 = vrot.slane %v965, 1
        %v992 = vrot.slane %v985, 1
        %v995 = vmax.f32 %v965, %v991
        %v996 = vmax.f32 %v985, %v992
        %v999 = vrot.slane %v966, 1
        %v1000 = vrot.slane %v986, 1
        %v1003 = vmax.f32 %v966, %v999
        %v1004 = vmax.f32 %v986, %v1000
        %v1007 = vrot.slane %v967, 1
        %v1008 = vrot.slane %v987, 1
        %v1011 = vmax.f32 %v967, %v1007
        %v1012 = vmax.f32 %v987, %v1008
        %v1015 = vrot.slane %v968, 1
        %v1016 = vrot.slane %v988, 1
        %v1019 = vmax.f32 %v968, %v1015
        %v1020 = vmax.f32 %v988, %v1016
        %v1023 = vrot.slane %v995, 1
        %v1024 = vrot.slane %v996, 1
        %v1027 = vrot.slane %v995, 2
        %v1028 = vrot.slane %v996, 2
        %v1031 = vrot.slane %v995, 3
        %v1032 = vrot.slane %v996, 3
        %v1037 = vrot.slane %v1003, 4
        %v1038 = vrot.slane %v1004, 4
        %v1041 = vrot.slane %v1003, 5
        %v1042 = vrot.slane %v1004, 5
        %v1045 = vrot.slane %v1003, 6
        %v1046 = vrot.slane %v1004, 6
        %v1049 = vrot.slane %v1003, 7
        %v1050 = vrot.slane %v1004, 7
        %v1055 = vrot.slane %v1011, 1
        %v1056 = vrot.slane %v1012, 1
        %v1059 = vrot.slane %v1011, 2
        %v1060 = vrot.slane %v1012, 2
        %v1063 = vrot.slane %v1011, 3
        %v1064 = vrot.slane %v1012, 3
        %v1069 = vrot.slane %v1019, 4
        %v1070 = vrot.slane %v1020, 4
        %v1073 = vrot.slane %v1019, 5
        %v1074 = vrot.slane %v1020, 5
        %vm1077 = vcmask 1040384
        %v1078 = vsel %vm1077, %v995, %v1023
        %v1079 = vsel %vm1077, %v996, %v1024
        %vm1080 = vcmask 1041408
        %v1081 = vsel %vm1080, %v1078, %v1027
        %v1082 = vsel %vm1080, %v1079, %v1028
        %vm1083 = vcmask 1042432
        %v1084 = vsel %vm1083, %v1081, %v1031
        %v1085 = vsel %vm1083, %v1082, %v1032
        %vm1086 = vcmask 1043456
        %v1087 = vsel %vm1086, %v1084, %v1037
        %v1088 = vsel %vm1086, %v1085, %v1038
        %vm1089 = vcmask 1044480
        %v1090 = vsel %vm1089, %v1087, %v1041
        %v1091 = vsel %vm1089, %v1088, %v1042
        %vm1092 = vcmask 1045504
        %v1093 = vsel %vm1092, %v1090, %v1045
        %v1094 = vsel %vm1092, %v1091, %v1046
        %vm1095 = vcmask 1046528
        %v1096 = vsel %vm1095, %v1093, %v1049
        %v1097 = vsel %vm1095, %v1094, %v1050
        %v1098 = vsel %vm1077, %v1011, %v1055
        %v1099 = vsel %vm1077, %v1012, %v1056
        %v1100 = vsel %vm1080, %v1098, %v1059
        %v1101 = vsel %vm1080, %v1099, %v1060
        %v1102 = vsel %vm1083, %v1100, %v1063
        %v1103 = vsel %vm1083, %v1101, %v1064
        %v1104 = vsel %vm1086, %v1102, %v1069
        %v1105 = vsel %vm1086, %v1103, %v1070
        %v1106 = vsel %vm1089, %v1104, %v1073
        %v1107 = vsel %vm1089, %v1105, %v1074
        %1108 = vst [vmem:[#allocation3] sm:$0xff] 0.0
        %1109 = vst [vmem:[#allocation3 + $0x8] sm:$0xff] 0.0
        %1110 = vst.msk [vmem:[#allocation3 + $0x10] sm:$0xff] %vm276, 0.0
        %1111 = vst [vmem:[#allocation3 + $0x18] sm:$0xff] 0.0
        %1112 = vst [vmem:[#allocation3 + $0x20] sm:$0xff] 0.0
        %1113 = vst.msk [vmem:[#allocation3 + $0x28] sm:$0xff] %vm276, 0.0
        %1114 = vst [vmem:[#allocation3 + $0x30] sm:$0x3] 0.0
        %1115 = vst [vmem:[#allocation3 + $0x38] sm:$0x3] 0.0
        %vm1116 = vcmask 254976
        %1117 = vst.msk [vmem:[#allocation3 + $0x40] sm:$0x3] %vm1116, 0.0
        %v1122 = vrot.slane %v1096, 6
        %v1123 = vrot.slane %v1097, 6
        %v1124 = vrot.slane %v1106, 6
        %v1125 = vsel %vm1080, %v1122, %v1124
        %v1126 = vrot.slane %v1107, 6
        %v1127 = vsel %vm1080, %v1123, %v1126
        %1128 = vrot.lane.b32.xlu0 %v1122, 32
        %v1129 = vpop.permute.xlu0 %1128
        %1130 = vrot.lane.b32.xlu0 %v1123, 32
        %v1131 = vpop.permute.xlu0 %1130
        %1132 = vrot.lane.b32.xlu0 %v1125, 32
        %v1133 = vpop.permute.xlu0 %1132
        %1134 = vrot.lane.b32.xlu0 %v1127, 32
        %v1135 = vpop.permute.xlu0 %1134
        %v1136 = vsel %vm276, %v1129, %v1131
        %v1137 = vsel %vm276, %v1133, %v1135
        %vm1142 = vcmask 1047810
        %1143 = vst.msk [vmem:[#allocation3] sm:$0xfc] %vm1142, %v1129
        %1144 = vst [vmem:[#allocation3 + $0x8] sm:$0xfc] %v1136
        %vm1145 = vcmask 1047808
        %1146 = vst.msk [vmem:[#allocation3 + $0x18] sm:$0xff] %vm1145, %v1133
        %1147 = vst [vmem:[#allocation3 + $0x20] sm:$0xff] %v1137
        %v1148 = vld [vmem:[#allocation3] sm:$0xff]
        %v1149 = vld [vmem:[#allocation3 + $0x8] sm:$0xff]
        %v1150 = vld [vmem:[#allocation3 + $0x10] sm:$0xff]
        %v1151 = vld [vmem:[#allocation3 + $0x18] sm:$0x3f]
        %v1152 = vld [vmem:[#allocation3 + $0x20] sm:$0x3f]
        %v1153 = vld [vmem:[#allocation3 + $0x28] sm:$0x3f]
        %v1154 = vld [vmem:[#allocation3] sm:$0xfe]
        %v1155 = vld [vmem:[#allocation3 + $0x8] sm:$0xfe]
        %v1156 = vld [vmem:[#allocation3 + $0x10] sm:$0xfe]
        %v1157 = vld [vmem:[#allocation3 + $0x18] sm:$0x7f]
        %v1158 = vld [vmem:[#allocation3 + $0x20] sm:$0x7f]
        %v1159 = vld [vmem:[#allocation3 + $0x28] sm:$0x7f]
        %v1160 = vld [vmem:[#allocation3] sm:$0xfc]
        %v1161 = vld [vmem:[#allocation3 + $0x8] sm:$0xfc]
        %v1162 = vld [vmem:[#allocation3 + $0x10] sm:$0xfc]
        %v1163 = vld [vmem:[#allocation3 + $0x18] sm:$0xff]
        %v1164 = vld [vmem:[#allocation3 + $0x20] sm:$0xff]
        %v1165 = vld [vmem:[#allocation3 + $0x28] sm:$0xff]
        %v1166 = vld [vmem:[#allocation3] sm:$0xf8]
        %v1167 = vld [vmem:[#allocation3 + $0x8] sm:$0xf8]
        %v1168 = vld [vmem:[#allocation3 + $0x10] sm:$0xf8]
        %v1169 = vld [vmem:[#allocation3 + $0x30] sm:$0x1]
        %v1170 = vld [vmem:[#allocation3 + $0x38] sm:$0x1]
        %v1171 = vld [vmem:[#allocation3 + $0x40] sm:$0x1]
        %v1172 = vld [vmem:[#allocation3] sm:$0xf0]
        %v1173 = vld [vmem:[#allocation3 + $0x8] sm:$0xf0]
        %v1174 = vld [vmem:[#allocation3 + $0x10] sm:$0xf0]
        %v1175 = vld [vmem:[#allocation3 + $0x30] sm:$0x3]
        %v1176 = vld [vmem:[#allocation3 + $0x38] sm:$0x3]
        %v1177 = vld [vmem:[#allocation3 + $0x40] sm:$0x3]
        %v1184 = vrot.slane %v1154, 1
        %v1185 = vrot.slane %v1157, 1
        %v1186 = vsel %vm1095, %v1184, %v1185
        %v1187 = vrot.slane %v1155, 1
        %v1188 = vrot.slane %v1158, 1
        %v1189 = vsel %vm1095, %v1187, %v1188
        %v1190 = vrot.slane %v1156, 1
        %v1191 = vrot.slane %v1159, 1
        %v1192 = vsel %vm1095, %v1190, %v1191
        %1193 = vrot.lane.b32.xlu0 %v1186, 32
        %v1194 = vpop.permute.xlu0 %1193
        %1195 = vrot.lane.b32.xlu0 %v1189, 32
        %v1196 = vpop.permute.xlu0 %1195
        %1197 = vrot.lane.b32.xlu0 %v1192, 32
        %v1198 = vpop.permute.xlu0 %1197
        %1199 = vrot.lane.b32.xlu0 %v1185, 32
        %v1200 = vpop.permute.xlu0 %1199
        %1201 = vrot.lane.b32.xlu0 %v1188, 32
        %v1202 = vpop.permute.xlu0 %1201
        %1203 = vrot.lane.b32.xlu0 %v1191, 32
        %v1204 = vpop.permute.xlu0 %1203
        %v1205 = vsel %vm276, %v1194, %v1196
        %v1206 = vsel %vm276, %v1196, %v1198
        %v1207 = vsel %vm276, %v1200, %v1202
        %v1208 = vsel %vm276, %v1202, %v1204
        %v1221 = vrot.slane %v1160, 2
        %v1222 = vrot.slane %v1163, 2
        %v1223 = vsel %vm1092, %v1221, %v1222
        %v1224 = vrot.slane %v1161, 2
        %v1225 = vrot.slane %v1164, 2
        %v1226 = vsel %vm1092, %v1224, %v1225
        %v1227 = vrot.slane %v1162, 2
        %v1228 = vrot.slane %v1165, 2
        %v1229 = vsel %vm1092, %v1227, %v1228
        %1230 = vrot.lane.b32.xlu0 %v1223, 64
        %v1231 = vpop.permute.xlu0 %1230
        %1232 = vrot.lane.b32.xlu0 %v1226, 64
        %v1233 = vpop.permute.xlu0 %1232
        %1234 = vrot.lane.b32.xlu0 %v1229, 64
        %v1235 = vpop.permute.xlu0 %1234
        %1236 = vrot.lane.b32.xlu0 %v1222, 64
        %v1237 = vpop.permute.xlu0 %1236
        %1238 = vrot.lane.b32.xlu0 %v1225, 64
        %v1239 = vpop.permute.xlu0 %1238
        %1240 = vrot.lane.b32.xlu0 %v1228, 64
        %v1241 = vpop.permute.xlu0 %1240
        %v1242 = vsel %vm379, %v1231, %v1233
        %v1243 = vsel %vm379, %v1233, %v1235
        %v1244 = vsel %vm379, %v1237, %v1239
        %v1245 = vsel %vm379, %v1239, %v1241
        %v1258 = vrot.slane %v1166, 3
        %v1259 = vrot.slane %v1163, 3
        %v1260 = vsel %vm1089, %v1258, %v1259
        %v1261 = vrot.slane %v1167, 3
        %v1262 = vrot.slane %v1164, 3
        %v1263 = vsel %vm1089, %v1261, %v1262
        %v1264 = vrot.slane %v1168, 3
        %v1265 = vrot.slane %v1165, 3
        %v1266 = vsel %vm1089, %v1264, %v1265
        %v1267 = vrot.slane %v1169, 3
        %v1268 = vsel %vm1089, %v1259, %v1267
        %v1269 = vrot.slane %v1170, 3
        %v1270 = vsel %vm1089, %v1262, %v1269
        %v1271 = vrot.slane %v1171, 3
        %v1272 = vsel %vm1089, %v1265, %v1271
        %1273 = vrot.lane.b32.xlu0 %v1260, 96
        %v1274 = vpop.permute.xlu0 %1273
        %1275 = vrot.lane.b32.xlu0 %v1263, 96
        %v1276 = vpop.permute.xlu0 %1275
        %1277 = vrot.lane.b32.xlu0 %v1266, 96
        %v1278 = vpop.permute.xlu0 %1277
        %1279 = vrot.lane.b32.xlu0 %v1268, 96
        %v1280 = vpop.permute.xlu0 %1279
        %1281 = vrot.lane.b32.xlu0 %v1270, 96
        %v1282 = vpop.permute.xlu0 %1281
        %1283 = vrot.lane.b32.xlu0 %v1272, 96
        %v1284 = vpop.permute.xlu0 %1283
        %v1285 = vsel %vm384, %v1274, %v1276
        %v1286 = vsel %vm384, %v1276, %v1278
        %v1287 = vsel %vm384, %v1280, %v1282
        %v1288 = vsel %vm384, %v1282, %v1284
        %v1301 = vrot.slane %v1172, 4
        %v1302 = vrot.slane %v1163, 4
        %v1303 = vsel %vm1086, %v1301, %v1302
        %v1304 = vrot.slane %v1173, 4
        %v1305 = vrot.slane %v1164, 4
        %v1306 = vsel %vm1086, %v1304, %v1305
        %v1307 = vrot.slane %v1174, 4
        %v1308 = vrot.slane %v1165, 4
        %v1309 = vsel %vm1086, %v1307, %v1308
        %v1310 = vrot.slane %v1175, 4
        %v1311 = vsel %vm1086, %v1302, %v1310
        %v1312 = vrot.slane %v1176, 4
        %v1313 = vsel %vm1086, %v1305, %v1312
        %v1314 = vrot.slane %v1177, 4
        %v1315 = vsel %vm1086, %v1308, %v1314
        %v1320 = vsel %vm276, %v1150, %v1194
        %v1321 = vsel %vm276, %v1153, %v1200
        %v1322 = vsel %vm379, %v1206, %v1231
        %v1323 = vsel %vm379, %v1208, %v1237
        %v1324 = vsel %vm384, %v1243, %v1274
        %v1325 = vsel %vm384, %v1245, %v1280
        %v1326 = vld [vmem:[%s3] sm:$0xff]
        %v1327 = vld [vmem:[%s3 + $0x8] sm:$0xff]
        %v1328 = vld [vmem:[%s3 + $0x10] sm:$0xff]
        %v1329 = vld [vmem:[%s3 + $0x18] sm:$0xff]
        %v1330 = vld [vmem:[%s3 + $0x20] sm:$0xff]
        %v1331 = vld [vmem:[%s3 + $0x28] sm:$0xff]
        %v1332 = vld [vmem:[%s3 + $0x30] sm:$0xff]
        %v1333 = vld [vmem:[%s3 + $0x38] sm:$0xff]
        %v1334 = vld [vmem:[%s3 + $0x40] sm:$0xff]
        %v1335 = vld [vmem:[%s3 + $0x48] sm:$0xff]
        %v1336 = vld [vmem:[%s3 + $0x50] sm:$0xff]
        %v1337 = vld [vmem:[%s3 + $0x58] sm:$0xff]
        %v1338 = vld [vmem:[%s3 + $0x60] sm:$0xff]
        %v1339 = vld [vmem:[%s3 + $0x68] sm:$0xff]
        %v1340 = vld [vmem:[%s3 + $0x70] sm:$0xff]
        %v1341 = vld [vmem:[%s3 + $0x78] sm:$0xff]
        %v1342 = vld [vmem:[%s3 + $0x80] sm:$0xff]
        %v1343 = vld [vmem:[%s3 + $0x88] sm:$0xff]
        %v1344 = vld [vmem:[%s3 + $0x90] sm:$0xff]
        %v1345 = vld [vmem:[%s3 + $0x98] sm:$0xff]
        %v1346 = vld [vmem:[%s3 + $0xa0] sm:$0xff]
        %v1347 = vld [vmem:[%s3 + $0xa8] sm:$0xff]
        %v1348 = vld [vmem:[%s3 + $0xb0] sm:$0xff]
        %v1349 = vld [vmem:[%s3 + $0xb8] sm:$0xff]
        %v1350 = vld [vmem:[%s3 + $0xc0] sm:$0xff]
        %v1351 = vld [vmem:[%s3 + $0xc8] sm:$0xff]
        %v1352 = vld [vmem:[%s3 + $0xd0] sm:$0xff]
        %v1353 = vld [vmem:[%s3 + $0xd8] sm:$0xff]
        %v1354 = vld [vmem:[%s3 + $0xe0] sm:$0xff]
        %v1355 = vld [vmem:[%s3 + $0xe8] sm:$0xff]
        %v1356 = vld [vmem:[%s3 + $0xf0] sm:$0xff]
        %v1357 = vld [vmem:[%s3 + $0xf8] sm:$0xff]
        %v1358 = vld [vmem:[%s3 + $0x100] sm:$0xff]
        %v1359 = vld [vmem:[%s3 + $0x108] sm:$0xff]
        %v1360 = vld [vmem:[%s3 + $0x110] sm:$0xff]
        %v1361 = vld [vmem:[%s3 + $0x118] sm:$0xff]
        %v1362 = vld [vmem:[%s3 + $0x120] sm:$0xff]
        %v1363 = vld [vmem:[%s3 + $0x128] sm:$0xff]
        %v1364 = vld [vmem:[%s3 + $0x130] sm:$0xff]
        %v1365 = vld [vmem:[%s3 + $0x138] sm:$0xff]
        %v1366 = vld [vmem:[%s3 + $0x140] sm:$0xff]
        %v1367 = vld [vmem:[%s3 + $0x148] sm:$0xff]
        %v1368 = vld [vmem:[%s3 + $0x150] sm:$0xff]
        %v1369 = vld [vmem:[%s3 + $0x158] sm:$0xff]
        %v1370 = vld [vmem:[%s3 + $0x160] sm:$0xff]
        %v1371 = vld [vmem:[%s3 + $0x168] sm:$0xff]
        %v1372 = vld [vmem:[%s3 + $0x170] sm:$0xff]
        %v1373 = vld [vmem:[%s3 + $0x178] sm:$0xff]
        %v1374 = vld [vmem:[%s3 + $0x180] sm:$0xff]
        %v1375 = vld [vmem:[%s3 + $0x188] sm:$0xff]
        %v1376 = vld [vmem:[%s3 + $0x190] sm:$0xff]
        %v1377 = vld [vmem:[%s3 + $0x198] sm:$0xff]
        %v1378 = vld [vmem:[%s3 + $0x1a0] sm:$0xff]
        %v1379 = vld [vmem:[%s3 + $0x1a8] sm:$0xff]
        %v1380 = vld [vmem:[%s3 + $0x1b0] sm:$0xff]
        %v1381 = vld [vmem:[%s3 + $0x1b8] sm:$0xff]
        %v1382 = vld [vmem:[%s3 + $0x1c0] sm:$0xff]
        %v1383 = vld [vmem:[%s3 + $0x1c8] sm:$0xff]
        %v1384 = vld [vmem:[%s3 + $0x1d0] sm:$0xff]
        %v1385 = vld [vmem:[%s3 + $0x1d8] sm:$0xff]
        %v1386 = vld [vmem:[%s3 + $0x1e0] sm:$0xff]
        %v1387 = vld [vmem:[%s3 + $0x1e8] sm:$0xff]
        %v1388 = vld [vmem:[%s3 + $0x1f0] sm:$0xff]
        %v1389 = vld [vmem:[%s3 + $0x1f8] sm:$0xff]
        %v1390 = vld [vmem:[%s3 + $0x200] sm:$0xff]
        %v1391 = vld [vmem:[%s3 + $0x208] sm:$0xff]
        %v1392 = vld [vmem:[%s3 + $0x210] sm:$0xff]
        %v1393 = vld [vmem:[%s3 + $0x218] sm:$0xff]
        %v1394 = vld [vmem:[%s3 + $0x220] sm:$0xff]
        %v1395 = vld [vmem:[%s3 + $0x228] sm:$0xff]
        %v1396 = vld [vmem:[%s3 + $0x230] sm:$0xff]
        %v1397 = vld [vmem:[%s3 + $0x238] sm:$0xff]
        %v1398 = vld [vmem:[%s3 + $0x240] sm:$0xff]
        %v1399 = vld [vmem:[%s3 + $0x248] sm:$0xff]
        %v1400 = vld [vmem:[%s3 + $0x250] sm:$0xff]
        %v1401 = vld [vmem:[%s3 + $0x258] sm:$0xff]
        %v1402 = vld [vmem:[%s3 + $0x260] sm:$0xff]
        %v1403 = vld [vmem:[%s3 + $0x268] sm:$0xff]
        %v1404 = vld [vmem:[%s3 + $0x270] sm:$0xff]
        %v1405 = vld [vmem:[%s3 + $0x278] sm:$0xff]
        %v1406 = vld [vmem:[%s3 + $0x280] sm:$0xff]
        %v1407 = vld [vmem:[%s3 + $0x288] sm:$0xff]
        %v1408 = vld [vmem:[%s3 + $0x290] sm:$0xff]
        %v1409 = vld [vmem:[%s3 + $0x298] sm:$0xff]
        %v1410 = vld [vmem:[%s3 + $0x2a0] sm:$0xff]
        %v1411 = vld [vmem:[%s3 + $0x2a8] sm:$0xff]
        %v1412 = vld [vmem:[%s3 + $0x2b0] sm:$0xff]
        %v1413 = vld [vmem:[%s3 + $0x2b8] sm:$0xff]
        %v1414 = vld [vmem:[%s3 + $0x2c0] sm:$0xff]
        %v1415 = vld [vmem:[%s3 + $0x2c8] sm:$0xff]
        %v1416 = vld [vmem:[%s3 + $0x2d0] sm:$0xff]
        %v1417 = vld [vmem:[%s3 + $0x2d8] sm:$0xff]
        %v1418 = vld [vmem:[%s3 + $0x2e0] sm:$0xff]
        %v1419 = vld [vmem:[%s3 + $0x2e8] sm:$0xff]
        %v1420 = vld [vmem:[%s3 + $0x2f0] sm:$0xff]
        %v1421 = vld [vmem:[%s3 + $0x2f8] sm:$0xff]
        %v1422 = vld [vmem:[%s3 + $0x300] sm:$0xff]
        %v1423 = vld [vmem:[%s3 + $0x308] sm:$0xff]
        %v1424 = vld [vmem:[%s3 + $0x310] sm:$0xff]
        %v1425 = vld [vmem:[%s3 + $0x318] sm:$0xff]
        %v1426 = vld [vmem:[%s3 + $0x320] sm:$0xff]
        %v1427 = vld [vmem:[%s3 + $0x328] sm:$0xff]
        %v1428 = vld [vmem:[%s3 + $0x330] sm:$0xff]
        %v1429 = vld [vmem:[%s3 + $0x338] sm:$0xff]
        %v1430 = vld [vmem:[%s3 + $0x340] sm:$0xff]
        %v1431 = vld [vmem:[%s3 + $0x348] sm:$0xff]
        %v1432 = vld [vmem:[%s3 + $0x350] sm:$0xff]
        %v1433 = vld [vmem:[%s3 + $0x358] sm:$0xff]
        %v1434 = vld [vmem:[%s3 + $0x360] sm:$0xff]
        %v1435 = vld [vmem:[%s3 + $0x368] sm:$0xff]
        %v1436 = vld [vmem:[%s3 + $0x370] sm:$0xff]
        %v1437 = vld [vmem:[%s3 + $0x378] sm:$0xff]
        %v1438 = vld [vmem:[%s3 + $0x380] sm:$0xff]
        %v1439 = vld [vmem:[%s3 + $0x388] sm:$0xff]
        %v1440 = vld [vmem:[%s3 + $0x390] sm:$0xff]
        %v1441 = vld [vmem:[%s3 + $0x398] sm:$0xff]
        %v1442 = vld [vmem:[%s3 + $0x3a0] sm:$0xff]
        %v1443 = vld [vmem:[%s3 + $0x3a8] sm:$0xff]
        %v1444 = vld [vmem:[%s3 + $0x3b0] sm:$0xff]
        %v1445 = vld [vmem:[%s3 + $0x3b8] sm:$0xff]
        %v1446 = vld [vmem:[%s3 + $0x3c0] sm:$0xff]
        %v1447 = vld [vmem:[%s3 + $0x3c8] sm:$0xff]
        %v1448 = vld [vmem:[%s3 + $0x3d0] sm:$0xff]
        %v1449 = vld [vmem:[%s3 + $0x3d8] sm:$0xff]
        %v1450 = vld [vmem:[%s3 + $0x3e0] sm:$0xff]
        %v1451 = vld [vmem:[%s3 + $0x3e8] sm:$0xff]
        %v1452 = vld [vmem:[%s3 + $0x3f0] sm:$0xff]
        %v1453 = vld [vmem:[%s3 + $0x3f8] sm:$0xff]
        %v1454 = vld [vmem:[%s3 + $0x400] sm:$0xff]
        %v1455 = vld [vmem:[%s3 + $0x408] sm:$0xff]
        %v1456 = vld [vmem:[%s3 + $0x410] sm:$0xff]
        %v1457 = vld [vmem:[%s3 + $0x418] sm:$0xff]
        %v1458 = vld [vmem:[%s3 + $0x420] sm:$0xff]
        %v1459 = vld [vmem:[%s3 + $0x428] sm:$0xff]
        %v1460 = vld [vmem:[%s3 + $0x430] sm:$0xff]
        %v1461 = vld [vmem:[%s3 + $0x438] sm:$0xff]
        %v1462 = vld [vmem:[%s3 + $0x440] sm:$0xff]
        %v1463 = vld [vmem:[%s3 + $0x448] sm:$0xff]
        %v1464 = vld [vmem:[%s3 + $0x450] sm:$0xff]
        %v1465 = vld [vmem:[%s3 + $0x458] sm:$0xff]
        %v1466 = vld [vmem:[%s3 + $0x460] sm:$0xff]
        %v1467 = vld [vmem:[%s3 + $0x468] sm:$0xff]
        %v1468 = vld [vmem:[%s3 + $0x470] sm:$0xff]
        %v1469 = vld [vmem:[%s3 + $0x478] sm:$0xff]
        %v1470 = vld [vmem:[%s3 + $0x480] sm:$0xff]
        %v1471 = vld [vmem:[%s3 + $0x488] sm:$0xff]
        %v1472 = vld [vmem:[%s3 + $0x490] sm:$0xff]
        %v1473 = vld [vmem:[%s3 + $0x498] sm:$0xff]
        %v1474 = vld [vmem:[%s3 + $0x4a0] sm:$0xff]
        %v1475 = vld [vmem:[%s3 + $0x4a8] sm:$0xff]
        %v1476 = vld [vmem:[%s3 + $0x4b0] sm:$0xff]
        %v1477 = vld [vmem:[%s3 + $0x4b8] sm:$0xff]
        %v1478 = vld [vmem:[%s3 + $0x4c0] sm:$0xff]
        %v1479 = vld [vmem:[%s3 + $0x4c8] sm:$0xff]
        %v1480 = vld [vmem:[%s3 + $0x4d0] sm:$0xff]
        %v1481 = vld [vmem:[%s3 + $0x4d8] sm:$0xff]
        %v1482 = vld [vmem:[%s3 + $0x4e0] sm:$0xff]
        %v1483 = vld [vmem:[%s3 + $0x4e8] sm:$0xff]
        %v1484 = vld [vmem:[%s3 + $0x4f0] sm:$0xff]
        %v1485 = vld [vmem:[%s3 + $0x4f8] sm:$0xff]
        %v1486 = vld [vmem:[%s3 + $0x500] sm:$0xff]
        %v1487 = vld [vmem:[%s3 + $0x508] sm:$0xff]
        %v1488 = vld [vmem:[%s3 + $0x510] sm:$0xff]
        %v1489 = vld [vmem:[%s3 + $0x518] sm:$0xff]
        %v1490 = vld [vmem:[%s3 + $0x520] sm:$0xff]
        %v1491 = vld [vmem:[%s3 + $0x528] sm:$0xff]
        %v1492 = vld [vmem:[%s3 + $0x530] sm:$0xff]
        %v1493 = vld [vmem:[%s3 + $0x538] sm:$0xff]
        %v1494 = vld [vmem:[%s3 + $0x540] sm:$0xff]
        %v1495 = vld [vmem:[%s3 + $0x548] sm:$0xff]
        %v1496 = vld [vmem:[%s3 + $0x550] sm:$0xff]
        %v1497 = vld [vmem:[%s3 + $0x558] sm:$0xff]
        %v1498 = vld [vmem:[%s3 + $0x560] sm:$0xff]
        %v1499 = vld [vmem:[%s3 + $0x568] sm:$0xff]
        %v1500 = vld [vmem:[%s3 + $0x570] sm:$0xff]
        %v1501 = vld [vmem:[%s3 + $0x578] sm:$0xff]
        %v1502 = vld [vmem:[%s3 + $0x580] sm:$0xff]
        %v1503 = vld [vmem:[%s3 + $0x588] sm:$0xff]
        %v1504 = vld [vmem:[%s3 + $0x590] sm:$0xff]
        %v1505 = vld [vmem:[%s3 + $0x598] sm:$0xff]
        %v1506 = vld [vmem:[%s3 + $0x5a0] sm:$0xff]
        %v1507 = vld [vmem:[%s3 + $0x5a8] sm:$0xff]
        %v1508 = vld [vmem:[%s3 + $0x5b0] sm:$0xff]
        %v1509 = vld [vmem:[%s3 + $0x5b8] sm:$0xff]
        %v1510 = vld [vmem:[%s3 + $0x5c0] sm:$0xff]
        %v1511 = vld [vmem:[%s3 + $0x5c8] sm:$0xff]
        %v1512 = vld [vmem:[%s3 + $0x5d0] sm:$0xff]
        %v1513 = vld [vmem:[%s3 + $0x5d8] sm:$0xff]
        %v1514 = vld [vmem:[%s3 + $0x5e0] sm:$0xff]
        %v1515 = vld [vmem:[%s3 + $0x5e8] sm:$0xff]
        %v1516 = vld [vmem:[%s3 + $0x5f0] sm:$0xff]
        %v1517 = vld [vmem:[%s3 + $0x5f8] sm:$0xff]
        %v1518 = vld [vmem:[%s3 + $0x600] sm:$0xff]
        %v1519 = vld [vmem:[%s3 + $0x608] sm:$0xff]
        %v1520 = vld [vmem:[%s3 + $0x610] sm:$0xff]
        %v1521 = vld [vmem:[%s3 + $0x618] sm:$0xff]
        %v1522 = vld [vmem:[%s3 + $0x620] sm:$0xff]
        %v1523 = vld [vmem:[%s3 + $0x628] sm:$0xff]
        %v1524 = vld [vmem:[%s3 + $0x630] sm:$0xff]
        %v1525 = vld [vmem:[%s3 + $0x638] sm:$0xff]
        %v1526 = vld [vmem:[%s3 + $0x640] sm:$0xff]
        %v1527 = vld [vmem:[%s3 + $0x648] sm:$0xff]
        %v1528 = vld [vmem:[%s3 + $0x650] sm:$0xff]
        %v1529 = vld [vmem:[%s3 + $0x658] sm:$0xff]
        %v1530 = vld [vmem:[%s3 + $0x660] sm:$0xff]
        %v1531 = vld [vmem:[%s3 + $0x668] sm:$0xff]
        %v1532 = vld [vmem:[%s3 + $0x670] sm:$0xff]
        %v1533 = vld [vmem:[%s3 + $0x678] sm:$0xff]
        %v1534 = vld [vmem:[%s3 + $0x680] sm:$0xff]
        %v1535 = vld [vmem:[%s3 + $0x688] sm:$0xff]
        %v1536 = vld [vmem:[%s3 + $0x690] sm:$0xff]
        %v1537 = vld [vmem:[%s3 + $0x698] sm:$0xff]
        %v1538 = vld [vmem:[%s3 + $0x6a0] sm:$0xff]
        %v1539 = vld [vmem:[%s3 + $0x6a8] sm:$0xff]
        %v1540 = vld [vmem:[%s3 + $0x6b0] sm:$0xff]
        %v1541 = vld [vmem:[%s3 + $0x6b8] sm:$0xff]
        %v1542 = vld [vmem:[%s3 + $0x6c0] sm:$0xff]
        %v1543 = vld [vmem:[%s3 + $0x6c8] sm:$0xff]
        %v1544 = vld [vmem:[%s3 + $0x6d0] sm:$0xff]
        %v1545 = vld [vmem:[%s3 + $0x6d8] sm:$0xff]
        %v1546 = vld [vmem:[%s3 + $0x6e0] sm:$0xff]
        %v1547 = vld [vmem:[%s3 + $0x6e8] sm:$0xff]
        %v1548 = vld [vmem:[%s3 + $0x6f0] sm:$0xff]
        %v1549 = vld [vmem:[%s3 + $0x6f8] sm:$0xff]
        %v1550 = vld [vmem:[%s3 + $0x700] sm:$0xff]
        %v1551 = vld [vmem:[%s3 + $0x708] sm:$0xff]
        %v1552 = vld [vmem:[%s3 + $0x710] sm:$0xff]
        %v1553 = vld [vmem:[%s3 + $0x718] sm:$0xff]
        %v1554 = vld [vmem:[%s3 + $0x720] sm:$0xff]
        %v1555 = vld [vmem:[%s3 + $0x728] sm:$0xff]
        %v1556 = vld [vmem:[%s3 + $0x730] sm:$0xff]
        %v1557 = vld [vmem:[%s3 + $0x738] sm:$0xff]
        %v1558 = vld [vmem:[%s3 + $0x740] sm:$0xff]
        %v1559 = vld [vmem:[%s3 + $0x748] sm:$0xff]
        %v1560 = vld [vmem:[%s3 + $0x750] sm:$0xff]
        %v1561 = vld [vmem:[%s3 + $0x758] sm:$0xff]
        %v1562 = vld [vmem:[%s3 + $0x760] sm:$0xff]
        %v1563 = vld [vmem:[%s3 + $0x768] sm:$0xff]
        %v1564 = vld [vmem:[%s3 + $0x770] sm:$0xff]
        %v1565 = vld [vmem:[%s3 + $0x778] sm:$0xff]
        %v1566 = vld [vmem:[%s3 + $0x780] sm:$0xff]
        %v1567 = vld [vmem:[%s3 + $0x788] sm:$0xff]
        %v1568 = vld [vmem:[%s3 + $0x790] sm:$0xff]
        %v1569 = vld [vmem:[%s3 + $0x798] sm:$0xff]
        %v1570 = vld [vmem:[%s3 + $0x7a0] sm:$0xff]
        %v1571 = vld [vmem:[%s3 + $0x7a8] sm:$0xff]
        %v1572 = vld [vmem:[%s3 + $0x7b0] sm:$0xff]
        %v1573 = vld [vmem:[%s3 + $0x7b8] sm:$0xff]
        %v1574 = vld [vmem:[%s3 + $0x7c0] sm:$0xff]
        %v1575 = vld [vmem:[%s3 + $0x7c8] sm:$0xff]
        %v1576 = vld [vmem:[%s3 + $0x7d0] sm:$0xff]
        %v1577 = vld [vmem:[%s3 + $0x7d8] sm:$0xff]
        %v1578 = vld [vmem:[%s3 + $0x7e0] sm:$0xff]
        %v1579 = vld [vmem:[%s3 + $0x7e8] sm:$0xff]
        %v1580 = vld [vmem:[%s3 + $0x7f0] sm:$0xff]
        %v1581 = vld [vmem:[%s3 + $0x7f8] sm:$0xff]
        %v1582 = vld [vmem:[%s3 + $0x800] sm:$0xff]
        %v1583 = vld [vmem:[%s3 + $0x808] sm:$0xff]
        %v1584 = vld [vmem:[%s3 + $0x810] sm:$0xff]
        %v1585 = vld [vmem:[%s3 + $0x818] sm:$0xff]
        %v1586 = vld [vmem:[%s3 + $0x820] sm:$0xff]
        %v1587 = vld [vmem:[%s3 + $0x828] sm:$0xff]
        %v1588 = vld [vmem:[%s3 + $0x830] sm:$0xff]
        %v1589 = vld [vmem:[%s3 + $0x838] sm:$0xff]
        %v1590 = vld [vmem:[%s3 + $0x840] sm:$0xff]
        %v1591 = vld [vmem:[%s3 + $0x848] sm:$0xff]
        %v1592 = vld [vmem:[%s3 + $0x850] sm:$0xff]
        %v1593 = vld [vmem:[%s3 + $0x858] sm:$0xff]
        %v1594 = vld [vmem:[%s3 + $0x860] sm:$0xff]
        %v1595 = vld [vmem:[%s3 + $0x868] sm:$0xff]
        %v1596 = vld [vmem:[%s3 + $0x870] sm:$0xff]
        %v1597 = vld [vmem:[%s3 + $0x878] sm:$0xff]
        %v1598 = vld [vmem:[%s3 + $0x880] sm:$0xff]
        %v1599 = vld [vmem:[%s3 + $0x888] sm:$0xff]
        %v1600 = vld [vmem:[%s3 + $0x890] sm:$0xff]
        %v1601 = vld [vmem:[%s3 + $0x898] sm:$0xff]
        %v1602 = vld [vmem:[%s3 + $0x8a0] sm:$0xff]
        %v1603 = vld [vmem:[%s3 + $0x8a8] sm:$0xff]
        %v1604 = vld [vmem:[%s3 + $0x8b0] sm:$0xff]
        %v1605 = vld [vmem:[%s3 + $0x8b8] sm:$0xff]
        %v1606 = vld [vmem:[%s3 + $0x8c0] sm:$0xff]
        %v1607 = vld [vmem:[%s3 + $0x8c8] sm:$0xff]
        %v1608 = vld [vmem:[%s3 + $0x8d0] sm:$0xff]
        %v1609 = vld [vmem:[%s3 + $0x8d8] sm:$0xff]
        %v1610 = vld [vmem:[%s3 + $0x8e0] sm:$0xff]
        %v1611 = vld [vmem:[%s3 + $0x8e8] sm:$0xff]
        %v1612 = vld [vmem:[%s3 + $0x8f0] sm:$0xff]
        %v1613 = vld [vmem:[%s3 + $0x8f8] sm:$0xff]
        %v1614 = vld [vmem:[%s3 + $0x900] sm:$0xff]
        %v1615 = vld [vmem:[%s3 + $0x908] sm:$0xff]
        %v1616 = vld [vmem:[%s3 + $0x910] sm:$0xff]
        %v1617 = vld [vmem:[%s3 + $0x918] sm:$0xff]
        %v1618 = vld [vmem:[%s3 + $0x920] sm:$0xff]
        %v1619 = vld [vmem:[%s3 + $0x928] sm:$0xff]
        %v1620 = vld [vmem:[%s3 + $0x930] sm:$0xff]
        %v1621 = vld [vmem:[%s3 + $0x938] sm:$0xff]
        %v1622 = vld [vmem:[%s3 + $0x940] sm:$0xff]
        %v1623 = vld [vmem:[%s3 + $0x948] sm:$0xff]
        %v1624 = vld [vmem:[%s3 + $0x950] sm:$0xff]
        %v1625 = vld [vmem:[%s3 + $0x958] sm:$0xff]
        %v1626 = vld [vmem:[%s3 + $0x960] sm:$0xff]
        %v1627 = vld [vmem:[%s3 + $0x968] sm:$0xff]
        %v1628 = vld [vmem:[%s3 + $0x970] sm:$0xff]
        %v1629 = vld [vmem:[%s3 + $0x978] sm:$0xff]
        %v1630 = vld [vmem:[%s3 + $0x980] sm:$0xff]
        %v1631 = vld [vmem:[%s3 + $0x988] sm:$0xff]
        %v1632 = vld [vmem:[%s3 + $0x990] sm:$0xff]
        %v1633 = vld [vmem:[%s3 + $0x998] sm:$0xff]
        %v1634 = vld [vmem:[%s3 + $0x9a0] sm:$0xff]
        %v1635 = vld [vmem:[%s3 + $0x9a8] sm:$0xff]
        %v1636 = vld [vmem:[%s3 + $0x9b0] sm:$0xff]
        %v1637 = vld [vmem:[%s3 + $0x9b8] sm:$0xff]
        %v1638 = vld [vmem:[%s3 + $0x9c0] sm:$0xff]
        %v1639 = vld [vmem:[%s3 + $0x9c8] sm:$0xff]
        %v1640 = vld [vmem:[%s3 + $0x9d0] sm:$0xff]
        %v1641 = vld [vmem:[%s3 + $0x9d8] sm:$0xff]
        %v1642 = vld [vmem:[%s3 + $0x9e0] sm:$0xff]
        %v1643 = vld [vmem:[%s3 + $0x9e8] sm:$0xff]
        %v1644 = vld [vmem:[%s3 + $0x9f0] sm:$0xff]
        %v1645 = vld [vmem:[%s3 + $0x9f8] sm:$0xff]
        %v1646 = vld [vmem:[%s3 + $0xa00] sm:$0xff]
        %v1647 = vld [vmem:[%s3 + $0xa08] sm:$0xff]
        %v1648 = vld [vmem:[%s3 + $0xa10] sm:$0xff]
        %v1649 = vld [vmem:[%s3 + $0xa18] sm:$0xff]
        %v1650 = vld [vmem:[%s3 + $0xa20] sm:$0xff]
        %v1651 = vld [vmem:[%s3 + $0xa28] sm:$0xff]
        %v1652 = vld [vmem:[%s3 + $0xa30] sm:$0xff]
        %v1653 = vld [vmem:[%s3 + $0xa38] sm:$0xff]
        %v1654 = vld [vmem:[%s3 + $0xa40] sm:$0xff]
        %v1655 = vld [vmem:[%s3 + $0xa48] sm:$0xff]
        %v1656 = vld [vmem:[%s3 + $0xa50] sm:$0xff]
        %v1657 = vld [vmem:[%s3 + $0xa58] sm:$0xff]
        %v1658 = vld [vmem:[%s3 + $0xa60] sm:$0xff]
        %v1659 = vld [vmem:[%s3 + $0xa68] sm:$0xff]
        %v1660 = vld [vmem:[%s3 + $0xa70] sm:$0xff]
        %v1661 = vld [vmem:[%s3 + $0xa78] sm:$0xff]
        %v1662 = vld [vmem:[%s3 + $0xa80] sm:$0xff]
        %v1663 = vld [vmem:[%s3 + $0xa88] sm:$0xff]
        %v1664 = vld [vmem:[%s3 + $0xa90] sm:$0xff]
        %v1665 = vld [vmem:[%s3 + $0xa98] sm:$0xff]
        %v1666 = vld [vmem:[%s3 + $0xaa0] sm:$0xff]
        %v1667 = vld [vmem:[%s3 + $0xaa8] sm:$0xff]
        %v1668 = vld [vmem:[%s3 + $0xab0] sm:$0xff]
        %v1669 = vld [vmem:[%s3 + $0xab8] sm:$0xff]
        %v1670 = vld [vmem:[%s3 + $0xac0] sm:$0xff]
        %v1671 = vld [vmem:[%s3 + $0xac8] sm:$0xff]
        %v1672 = vld [vmem:[%s3 + $0xad0] sm:$0xff]
        %v1673 = vld [vmem:[%s3 + $0xad8] sm:$0xff]
        %v1674 = vld [vmem:[%s3 + $0xae0] sm:$0xff]
        %v1675 = vld [vmem:[%s3 + $0xae8] sm:$0xff]
        %v1676 = vld [vmem:[%s3 + $0xaf0] sm:$0xff]
        %v1677 = vld [vmem:[%s3 + $0xaf8] sm:$0xff]
        %v1678 = vld [vmem:[%s3 + $0xb00] sm:$0xff]
        %v1679 = vld [vmem:[%s3 + $0xb08] sm:$0xff]
        %v1680 = vld [vmem:[%s3 + $0xb10] sm:$0xff]
        %v1681 = vld [vmem:[%s3 + $0xb18] sm:$0xff]
        %v1682 = vld [vmem:[%s3 + $0xb20] sm:$0xff]
        %v1683 = vld [vmem:[%s3 + $0xb28] sm:$0xff]
        %v1684 = vld [vmem:[%s3 + $0xb30] sm:$0xff]
        %v1685 = vld [vmem:[%s3 + $0xb38] sm:$0xff]
        %v1686 = vld [vmem:[%s3 + $0xb40] sm:$0xff]
        %v1687 = vld [vmem:[%s3 + $0xb48] sm:$0xff]
        %v1688 = vld [vmem:[%s3 + $0xb50] sm:$0xff]
        %v1689 = vld [vmem:[%s3 + $0xb58] sm:$0xff]
        %v1690 = vld [vmem:[%s3 + $0xb60] sm:$0xff]
        %v1691 = vld [vmem:[%s3 + $0xb68] sm:$0xff]
        %v1692 = vld [vmem:[%s3 + $0xb70] sm:$0xff]
        %v1693 = vld [vmem:[%s3 + $0xb78] sm:$0xff]
        %v1694 = vld [vmem:[%s3 + $0xb80] sm:$0xff]
        %v1695 = vld [vmem:[%s3 + $0xb88] sm:$0xff]
        %v1696 = vld [vmem:[%s3 + $0xb90] sm:$0xff]
        %v1697 = vld [vmem:[%s3 + $0xb98] sm:$0xff]
        %v1698 = vld [vmem:[%s3 + $0xba0] sm:$0xff]
        %v1699 = vld [vmem:[%s3 + $0xba8] sm:$0xff]
        %v1700 = vld [vmem:[%s3 + $0xbb0] sm:$0xff]
        %v1701 = vld [vmem:[%s3 + $0xbb8] sm:$0xff]
        %v1702 = vld [vmem:[%s3 + $0xbc0] sm:$0xff]
        %v1703 = vld [vmem:[%s3 + $0xbc8] sm:$0xff]
        %v1704 = vld [vmem:[%s3 + $0xbd0] sm:$0xff]
        %v1705 = vld [vmem:[%s3 + $0xbd8] sm:$0xff]
        %v1706 = vld [vmem:[%s3 + $0xbe0] sm:$0xff]
        %v1707 = vld [vmem:[%s3 + $0xbe8] sm:$0xff]
        %v1708 = vld [vmem:[%s3 + $0xbf0] sm:$0xff]
        %v1709 = vld [vmem:[%s3 + $0xbf8] sm:$0xff]
        %v1710 = vld [vmem:[%s3 + $0xc00] sm:$0xff]
        %v1711 = vld [vmem:[%s3 + $0xc08] sm:$0xff]
        %v1712 = vld [vmem:[%s3 + $0xc10] sm:$0xff]
        %v1713 = vld [vmem:[%s3 + $0xc18] sm:$0xff]
        %v1714 = vld [vmem:[%s3 + $0xc20] sm:$0xff]
        %v1715 = vld [vmem:[%s3 + $0xc28] sm:$0xff]
        %v1716 = vld [vmem:[%s3 + $0xc30] sm:$0xff]
        %v1717 = vld [vmem:[%s3 + $0xc38] sm:$0xff]
        %v1718 = vld [vmem:[%s3 + $0xc40] sm:$0xff]
        %v1719 = vld [vmem:[%s3 + $0xc48] sm:$0xff]
        %v1720 = vld [vmem:[%s3 + $0xc50] sm:$0xff]
        %v1721 = vld [vmem:[%s3 + $0xc58] sm:$0xff]
        %v1722 = vld [vmem:[%s3 + $0xc60] sm:$0xff]
        %v1723 = vld [vmem:[%s3 + $0xc68] sm:$0xff]
        %v1724 = vld [vmem:[%s3 + $0xc70] sm:$0xff]
        %v1725 = vld [vmem:[%s3 + $0xc78] sm:$0xff]
        %v1726 = vld [vmem:[%s3 + $0xc80] sm:$0xff]
        %v1727 = vld [vmem:[%s3 + $0xc88] sm:$0xff]
        %v1728 = vld [vmem:[%s3 + $0xc90] sm:$0xff]
        %v1729 = vld [vmem:[%s3 + $0xc98] sm:$0xff]
        %v1730 = vld [vmem:[%s3 + $0xca0] sm:$0xff]
        %v1731 = vld [vmem:[%s3 + $0xca8] sm:$0xff]
        %v1732 = vld [vmem:[%s3 + $0xcb0] sm:$0xff]
        %v1733 = vld [vmem:[%s3 + $0xcb8] sm:$0xff]
        %v1734 = vld [vmem:[%s3 + $0xcc0] sm:$0xff]
        %v1735 = vld [vmem:[%s3 + $0xcc8] sm:$0xff]
        %v1736 = vld [vmem:[%s3 + $0xcd0] sm:$0xff]
        %v1737 = vld [vmem:[%s3 + $0xcd8] sm:$0xff]
        %v1738 = vld [vmem:[%s3 + $0xce0] sm:$0xff]
        %v1739 = vld [vmem:[%s3 + $0xce8] sm:$0xff]
        %v1740 = vld [vmem:[%s3 + $0xcf0] sm:$0xff]
        %v1741 = vld [vmem:[%s3 + $0xcf8] sm:$0xff]
        %v1742 = vld [vmem:[%s3 + $0xd00] sm:$0xff]
        %v1743 = vld [vmem:[%s3 + $0xd08] sm:$0xff]
        %v1744 = vld [vmem:[%s3 + $0xd10] sm:$0xff]
        %v1745 = vld [vmem:[%s3 + $0xd18] sm:$0xff]
        %v1746 = vld [vmem:[%s3 + $0xd20] sm:$0xff]
        %v1747 = vld [vmem:[%s3 + $0xd28] sm:$0xff]
        %v1748 = vld [vmem:[%s3 + $0xd30] sm:$0xff]
        %v1749 = vld [vmem:[%s3 + $0xd38] sm:$0xff]
        %v1750 = vld [vmem:[%s3 + $0xd40] sm:$0xff]
        %v1751 = vld [vmem:[%s3 + $0xd48] sm:$0xff]
        %v1752 = vld [vmem:[%s3 + $0xd50] sm:$0xff]
        %v1753 = vld [vmem:[%s3 + $0xd58] sm:$0xff]
        %v1754 = vld [vmem:[%s3 + $0xd60] sm:$0xff]
        %v1755 = vld [vmem:[%s3 + $0xd68] sm:$0xff]
        %v1756 = vld [vmem:[%s3 + $0xd70] sm:$0xff]
        %v1757 = vld [vmem:[%s3 + $0xd78] sm:$0xff]
        %v1758 = vld [vmem:[%s3 + $0xd80] sm:$0xff]
        %v1759 = vld [vmem:[%s3 + $0xd88] sm:$0xff]
        %v1760 = vld [vmem:[%s3 + $0xd90] sm:$0xff]
        %v1761 = vld [vmem:[%s3 + $0xd98] sm:$0xff]
        %v1762 = vld [vmem:[%s3 + $0xda0] sm:$0xff]
        %v1763 = vld [vmem:[%s3 + $0xda8] sm:$0xff]
        %v1764 = vld [vmem:[%s3 + $0xdb0] sm:$0xff]
        %v1765 = vld [vmem:[%s3 + $0xdb8] sm:$0xff]
        %v1766 = vld [vmem:[%s3 + $0xdc0] sm:$0xff]
        %v1767 = vld [vmem:[%s3 + $0xdc8] sm:$0xff]
        %v1768 = vld [vmem:[%s3 + $0xdd0] sm:$0xff]
        %v1769 = vld [vmem:[%s3 + $0xdd8] sm:$0xff]
        %v1770 = vld [vmem:[%s3 + $0xde0] sm:$0xff]
        %v1771 = vld [vmem:[%s3 + $0xde8] sm:$0xff]
        %v1772 = vld [vmem:[%s3 + $0xdf0] sm:$0xff]
        %v1773 = vld [vmem:[%s3 + $0xdf8] sm:$0xff]
        %v1774 = vld [vmem:[%s3 + $0xe00] sm:$0xff]
        %v1775 = vld [vmem:[%s3 + $0xe08] sm:$0xff]
        %v1776 = vld [vmem:[%s3 + $0xe10] sm:$0xff]
        %v1777 = vld [vmem:[%s3 + $0xe18] sm:$0xff]
        %v1778 = vld [vmem:[%s3 + $0xe20] sm:$0xff]
        %v1779 = vld [vmem:[%s3 + $0xe28] sm:$0xff]
        %v1780 = vld [vmem:[%s3 + $0xe30] sm:$0xff]
        %v1781 = vld [vmem:[%s3 + $0xe38] sm:$0xff]
        %v1782 = vld [vmem:[%s3 + $0xe40] sm:$0xff]
        %v1783 = vld [vmem:[%s3 + $0xe48] sm:$0xff]
        %v1784 = vld [vmem:[%s3 + $0xe50] sm:$0xff]
        %v1785 = vld [vmem:[%s3 + $0xe58] sm:$0xff]
        %v1786 = vld [vmem:[%s3 + $0xe60] sm:$0xff]
        %v1787 = vld [vmem:[%s3 + $0xe68] sm:$0xff]
        %v1788 = vld [vmem:[%s3 + $0xe70] sm:$0xff]
        %v1789 = vld [vmem:[%s3 + $0xe78] sm:$0xff]
        %v1790 = vld [vmem:[%s3 + $0xe80] sm:$0xff]
        %v1791 = vld [vmem:[%s3 + $0xe88] sm:$0xff]
        %v1792 = vld [vmem:[%s3 + $0xe90] sm:$0xff]
        %v1793 = vld [vmem:[%s3 + $0xe98] sm:$0xff]
        %v1794 = vld [vmem:[%s3 + $0xea0] sm:$0xff]
        %v1795 = vld [vmem:[%s3 + $0xea8] sm:$0xff]
        %v1796 = vld [vmem:[%s3 + $0xeb0] sm:$0xff]
        %v1797 = vld [vmem:[%s3 + $0xeb8] sm:$0xff]
        %v1798 = vld [vmem:[%s3 + $0xec0] sm:$0xff]
        %v1799 = vld [vmem:[%s3 + $0xec8] sm:$0xff]
        %v1800 = vld [vmem:[%s3 + $0xed0] sm:$0xff]
        %v1801 = vld [vmem:[%s3 + $0xed8] sm:$0xff]
        %v1802 = vld [vmem:[%s3 + $0xee0] sm:$0xff]
        %v1803 = vld [vmem:[%s3 + $0xee8] sm:$0xff]
        %v1804 = vld [vmem:[%s3 + $0xef0] sm:$0xff]
        %v1805 = vld [vmem:[%s3 + $0xef8] sm:$0xff]
        %v1806 = vld [vmem:[%s3 + $0xf00] sm:$0xff]
        %v1807 = vld [vmem:[%s3 + $0xf08] sm:$0xff]
        %v1808 = vld [vmem:[%s3 + $0xf10] sm:$0xff]
        %v1809 = vld [vmem:[%s3 + $0xf18] sm:$0xff]
        %v1810 = vld [vmem:[%s3 + $0xf20] sm:$0xff]
        %v1811 = vld [vmem:[%s3 + $0xf28] sm:$0xff]
        %v1812 = vld [vmem:[%s3 + $0xf30] sm:$0xff]
        %v1813 = vld [vmem:[%s3 + $0xf38] sm:$0xff]
        %v1814 = vld [vmem:[%s3 + $0xf40] sm:$0xff]
        %v1815 = vld [vmem:[%s3 + $0xf48] sm:$0xff]
        %v1816 = vld [vmem:[%s3 + $0xf50] sm:$0xff]
        %v1817 = vld [vmem:[%s3 + $0xf58] sm:$0xff]
        %v1818 = vld [vmem:[%s3 + $0xf60] sm:$0xff]
        %v1819 = vld [vmem:[%s3 + $0xf68] sm:$0xff]
        %v1820 = vld [vmem:[%s3 + $0xf70] sm:$0xff]
        %v1821 = vld [vmem:[%s3 + $0xf78] sm:$0xff]
        %v1822 = vld [vmem:[%s3 + $0xf80] sm:$0xff]
        %v1823 = vld [vmem:[%s3 + $0xf88] sm:$0xff]
        %v1824 = vld [vmem:[%s3 + $0xf90] sm:$0xff]
        %v1825 = vld [vmem:[%s3 + $0xf98] sm:$0xff]
        %v1826 = vld [vmem:[%s3 + $0xfa0] sm:$0xff]
        %v1827 = vld [vmem:[%s3 + $0xfa8] sm:$0xff]
        %v1828 = vld [vmem:[%s3 + $0xfb0] sm:$0xff]
        %v1829 = vld [vmem:[%s3 + $0xfb8] sm:$0xff]
        %v1830 = vld [vmem:[%s3 + $0xfc0] sm:$0xff]
        %v1831 = vld [vmem:[%s3 + $0xfc8] sm:$0xff]
        %v1832 = vld [vmem:[%s3 + $0xfd0] sm:$0xff]
        %v1833 = vld [vmem:[%s3 + $0xfd8] sm:$0xff]
        %v1834 = vld [vmem:[%s3 + $0xfe0] sm:$0xff]
        %v1835 = vld [vmem:[%s3 + $0xfe8] sm:$0xff]
        %v1836 = vld [vmem:[%s3 + $0xff0] sm:$0xff]
        %v1837 = vld [vmem:[%s3 + $0xff8] sm:$0xff]
        %v1838 = vld [vmem:[%s3 + $0x1000] sm:$0xff]
        %v1839 = vld [vmem:[%s3 + $0x1008] sm:$0xff]
        %v1840 = vld [vmem:[%s3 + $0x1010] sm:$0xff]
        %v1841 = vld [vmem:[%s3 + $0x1018] sm:$0xff]
        %v1842 = vld [vmem:[%s3 + $0x1020] sm:$0xff]
        %v1843 = vld [vmem:[%s3 + $0x1028] sm:$0xff]
        %v1844 = vld [vmem:[%s3 + $0x1030] sm:$0xff]
        %v1845 = vld [vmem:[%s3 + $0x1038] sm:$0xff]
        %v1846 = vld [vmem:[%s3 + $0x1040] sm:$0xff]
        %v1847 = vld [vmem:[%s3 + $0x1048] sm:$0xff]
        %v1848 = vld [vmem:[%s3 + $0x1050] sm:$0xff]
        %v1849 = vld [vmem:[%s3 + $0x1058] sm:$0xff]
        %v1850 = vld [vmem:[%s3 + $0x1060] sm:$0xff]
        %v1851 = vld [vmem:[%s3 + $0x1068] sm:$0xff]
        %v1852 = vld [vmem:[%s3 + $0x1070] sm:$0xff]
        %v1853 = vld [vmem:[%s3 + $0x1078] sm:$0xff]
        %v1854 = vld [vmem:[%s3 + $0x1080] sm:$0xff]
        %v1855 = vld [vmem:[%s3 + $0x1088] sm:$0xff]
        %v1856 = vld [vmem:[%s3 + $0x1090] sm:$0xff]
        %v1857 = vld [vmem:[%s3 + $0x1098] sm:$0xff]
        %v1858 = vld [vmem:[%s3 + $0x10a0] sm:$0xff]
        %v1859 = vld [vmem:[%s3 + $0x10a8] sm:$0xff]
        %v1860 = vld [vmem:[%s3 + $0x10b0] sm:$0xff]
        %v1861 = vld [vmem:[%s3 + $0x10b8] sm:$0xff]
        %v1862 = vld [vmem:[%s3 + $0x10c0] sm:$0xff]
        %v1863 = vld [vmem:[%s3 + $0x10c8] sm:$0xff]
        %v1864 = vld [vmem:[%s3 + $0x10d0] sm:$0xff]
        %v1865 = vld [vmem:[%s3 + $0x10d8] sm:$0xff]
        %v1866 = vld [vmem:[%s3 + $0x10e0] sm:$0xff]
        %v1867 = vld [vmem:[%s3 + $0x10e8] sm:$0xff]
        %v1868 = vld [vmem:[%s3 + $0x10f0] sm:$0xff]
        %v1869 = vld [vmem:[%s3 + $0x10f8] sm:$0xff]
        %v1870 = vld [vmem:[%s3 + $0x1100] sm:$0xff]
        %v1871 = vld [vmem:[%s3 + $0x1108] sm:$0xff]
        %v1872 = vld [vmem:[%s3 + $0x1110] sm:$0xff]
        %v1873 = vld [vmem:[%s3 + $0x1118] sm:$0xff]
        %v1874 = vld [vmem:[%s3 + $0x1120] sm:$0xff]
        %v1875 = vld [vmem:[%s3 + $0x1128] sm:$0xff]
        %v1876 = vld [vmem:[%s3 + $0x1130] sm:$0xff]
        %v1877 = vld [vmem:[%s3 + $0x1138] sm:$0xff]
        %v1878 = vld [vmem:[%s3 + $0x1140] sm:$0xff]
        %v1879 = vld [vmem:[%s3 + $0x1148] sm:$0xff]
        %v1880 = vld [vmem:[%s3 + $0x1150] sm:$0xff]
        %v1881 = vld [vmem:[%s3 + $0x1158] sm:$0xff]
        %v1882 = vld [vmem:[%s3 + $0x1160] sm:$0xff]
        %v1883 = vld [vmem:[%s3 + $0x1168] sm:$0xff]
        %v1884 = vld [vmem:[%s3 + $0x1170] sm:$0xff]
        %v1885 = vld [vmem:[%s3 + $0x1178] sm:$0xff]
        %v1886 = vld [vmem:[%s3 + $0x1180] sm:$0xff]
        %v1887 = vld [vmem:[%s3 + $0x1188] sm:$0xff]
        %v1888 = vld [vmem:[%s3 + $0x1190] sm:$0xff]
        %v1889 = vld [vmem:[%s3 + $0x1198] sm:$0xff]
        %v1890 = vld [vmem:[%s3 + $0x11a0] sm:$0xff]
        %v1891 = vld [vmem:[%s3 + $0x11a8] sm:$0xff]
        %v1892 = vld [vmem:[%s3 + $0x11b0] sm:$0xff]
        %v1893 = vld [vmem:[%s3 + $0x11b8] sm:$0xff]
        %v1894 = vld [vmem:[%s3 + $0x11c0] sm:$0xff]
        %v1895 = vld [vmem:[%s3 + $0x11c8] sm:$0xff]
        %v1896 = vld [vmem:[%s3 + $0x11d0] sm:$0xff]
        %v1897 = vld [vmem:[%s3 + $0x11d8] sm:$0xff]
        %v1898 = vld [vmem:[%s3 + $0x11e0] sm:$0xff]
        %v1899 = vld [vmem:[%s3 + $0x11e8] sm:$0xff]
        %v1900 = vld [vmem:[%s3 + $0x11f0] sm:$0xff]
        %v1901 = vld [vmem:[%s3 + $0x11f8] sm:$0xff]
        %v1902 = vld [vmem:[%s3 + $0x1200] sm:$0xff]
        %v1903 = vld [vmem:[%s3 + $0x1208] sm:$0xff]
        %v1904 = vld [vmem:[%s3 + $0x1210] sm:$0xff]
        %v1905 = vld [vmem:[%s3 + $0x1218] sm:$0xff]
        %v1906 = vld [vmem:[%s3 + $0x1220] sm:$0xff]
        %v1907 = vld [vmem:[%s3 + $0x1228] sm:$0xff]
        %v1908 = vld [vmem:[%s3 + $0x1230] sm:$0xff]
        %v1909 = vld [vmem:[%s3 + $0x1238] sm:$0xff]
        %v1910 = vld [vmem:[%s3 + $0x1240] sm:$0xff]
        %v1911 = vld [vmem:[%s3 + $0x1248] sm:$0xff]
        %v1912 = vld [vmem:[%s3 + $0x1250] sm:$0xff]
        %v1913 = vld [vmem:[%s3 + $0x1258] sm:$0xff]
        %v1914 = vld [vmem:[%s3 + $0x1260] sm:$0xff]
        %v1915 = vld [vmem:[%s3 + $0x1268] sm:$0xff]
        %v1916 = vld [vmem:[%s3 + $0x1270] sm:$0xff]
        %v1917 = vld [vmem:[%s3 + $0x1278] sm:$0xff]
        %v1918 = vld [vmem:[%s3 + $0x1280] sm:$0xff]
        %v1919 = vld [vmem:[%s3 + $0x1288] sm:$0xff]
        %v1920 = vld [vmem:[%s3 + $0x1290] sm:$0xff]
        %v1921 = vld [vmem:[%s3 + $0x1298] sm:$0xff]
        %v1922 = vld [vmem:[%s3 + $0x12a0] sm:$0xff]
        %v1923 = vld [vmem:[%s3 + $0x12a8] sm:$0xff]
        %v1924 = vld [vmem:[%s3 + $0x12b0] sm:$0xff]
        %v1925 = vld [vmem:[%s3 + $0x12b8] sm:$0xff]
        %v1926 = vld [vmem:[%s3 + $0x12c0] sm:$0xff]
        %v1927 = vld [vmem:[%s3 + $0x12c8] sm:$0xff]
        %v1928 = vld [vmem:[%s3 + $0x12d0] sm:$0xff]
        %v1929 = vld [vmem:[%s3 + $0x12d8] sm:$0xff]
        %v1930 = vld [vmem:[%s3 + $0x12e0] sm:$0xff]
        %v1931 = vld [vmem:[%s3 + $0x12e8] sm:$0xff]
        %v1932 = vld [vmem:[%s3 + $0x12f0] sm:$0xff]
        %v1933 = vld [vmem:[%s3 + $0x12f8] sm:$0xff]
        %v1934 = vld [vmem:[%s3 + $0x1300] sm:$0xff]
        %v1935 = vld [vmem:[%s3 + $0x1308] sm:$0xff]
        %v1936 = vld [vmem:[%s3 + $0x1310] sm:$0xff]
        %v1937 = vld [vmem:[%s3 + $0x1318] sm:$0xff]
        %v1938 = vld [vmem:[%s3 + $0x1320] sm:$0xff]
        %v1939 = vld [vmem:[%s3 + $0x1328] sm:$0xff]
        %v1940 = vld [vmem:[%s3 + $0x1330] sm:$0xff]
        %v1941 = vld [vmem:[%s3 + $0x1338] sm:$0xff]
        %v1942 = vld [vmem:[%s3 + $0x1340] sm:$0xff]
        %v1943 = vld [vmem:[%s3 + $0x1348] sm:$0xff]
        %v1944 = vld [vmem:[%s3 + $0x1350] sm:$0xff]
        %v1945 = vld [vmem:[%s3 + $0x1358] sm:$0xff]
        %v1946 = vld [vmem:[%s3 + $0x1360] sm:$0xff]
        %v1947 = vld [vmem:[%s3 + $0x1368] sm:$0xff]
        %v1948 = vld [vmem:[%s3 + $0x1370] sm:$0xff]
        %v1949 = vld [vmem:[%s3 + $0x1378] sm:$0xff]
        %v1950 = vld [vmem:[%s3 + $0x1380] sm:$0xff]
        %v1951 = vld [vmem:[%s3 + $0x1388] sm:$0xff]
        %v1952 = vld [vmem:[%s3 + $0x1390] sm:$0xff]
        %v1953 = vld [vmem:[%s3 + $0x1398] sm:$0xff]
        %v1954 = vld [vmem:[%s3 + $0x13a0] sm:$0xff]
        %v1955 = vld [vmem:[%s3 + $0x13a8] sm:$0xff]
        %v1956 = vld [vmem:[%s3 + $0x13b0] sm:$0xff]
        %v1957 = vld [vmem:[%s3 + $0x13b8] sm:$0xff]
        %v1958 = vld [vmem:[%s3 + $0x13c0] sm:$0xff]
        %v1959 = vld [vmem:[%s3 + $0x13c8] sm:$0xff]
        %v1960 = vld [vmem:[%s3 + $0x13d0] sm:$0xff]
        %v1961 = vld [vmem:[%s3 + $0x13d8] sm:$0xff]
        %v1962 = vld [vmem:[%s3 + $0x13e0] sm:$0xff]
        %v1963 = vld [vmem:[%s3 + $0x13e8] sm:$0xff]
        %v1964 = vld [vmem:[%s3 + $0x13f0] sm:$0xff]
        %v1965 = vld [vmem:[%s3 + $0x13f8] sm:$0xff]
        %v1966 = vld [vmem:[%s3 + $0x1400] sm:$0xff]
        %v1967 = vld [vmem:[%s3 + $0x1408] sm:$0xff]
        %v1968 = vld [vmem:[%s3 + $0x1410] sm:$0xff]
        %v1969 = vld [vmem:[%s3 + $0x1418] sm:$0xff]
        %v1970 = vld [vmem:[%s3 + $0x1420] sm:$0xff]
        %v1971 = vld [vmem:[%s3 + $0x1428] sm:$0xff]
        %v1972 = vld [vmem:[%s3 + $0x1430] sm:$0xff]
        %v1973 = vld [vmem:[%s3 + $0x1438] sm:$0xff]
        %v1974 = vld [vmem:[%s3 + $0x1440] sm:$0xff]
        %v1975 = vld [vmem:[%s3 + $0x1448] sm:$0xff]
        %v1976 = vld [vmem:[%s3 + $0x1450] sm:$0xff]
        %v1977 = vld [vmem:[%s3 + $0x1458] sm:$0xff]
        %v1978 = vld [vmem:[%s3 + $0x1460] sm:$0xff]
        %v1979 = vld [vmem:[%s3 + $0x1468] sm:$0xff]
        %v1980 = vld [vmem:[%s3 + $0x1470] sm:$0xff]
        %v1981 = vld [vmem:[%s3 + $0x1478] sm:$0xff]
        %v1982 = vld [vmem:[%s3 + $0x1480] sm:$0xff]
        %v1983 = vld [vmem:[%s3 + $0x1488] sm:$0xff]
        %v1984 = vld [vmem:[%s3 + $0x1490] sm:$0xff]
        %v1985 = vld [vmem:[%s3 + $0x1498] sm:$0xff]
        %v1986 = vld [vmem:[%s3 + $0x14a0] sm:$0xff]
        %v1987 = vld [vmem:[%s3 + $0x14a8] sm:$0xff]
        %v1988 = vld [vmem:[%s3 + $0x14b0] sm:$0xff]
        %v1989 = vld [vmem:[%s3 + $0x14b8] sm:$0xff]
        %v1990 = vld [vmem:[%s3 + $0x14c0] sm:$0xff]
        %v1991 = vld [vmem:[%s3 + $0x14c8] sm:$0xff]
        %v1992 = vld [vmem:[%s3 + $0x14d0] sm:$0xff]
        %v1993 = vld [vmem:[%s3 + $0x14d8] sm:$0xff]
        %v1994 = vld [vmem:[%s3 + $0x14e0] sm:$0xff]
        %v1995 = vld [vmem:[%s3 + $0x14e8] sm:$0xff]
        %v1996 = vld [vmem:[%s3 + $0x14f0] sm:$0xff]
        %v1997 = vld [vmem:[%s3 + $0x14f8] sm:$0xff]
        %v1998 = vld [vmem:[%s3 + $0x1500] sm:$0xff]
        %v1999 = vld [vmem:[%s3 + $0x1508] sm:$0xff]
        %v2000 = vld [vmem:[%s3 + $0x1510] sm:$0xff]
        %v2001 = vld [vmem:[%s3 + $0x1518] sm:$0xff]
        %v2002 = vld [vmem:[%s3 + $0x1520] sm:$0xff]
        %v2003 = vld [vmem:[%s3 + $0x1528] sm:$0xff]
        %v2004 = vld [vmem:[%s3 + $0x1530] sm:$0xff]
        %v2005 = vld [vmem:[%s3 + $0x1538] sm:$0xff]
        %v2006 = vld [vmem:[%s3 + $0x1540] sm:$0xff]
        %v2007 = vld [vmem:[%s3 + $0x1548] sm:$0xff]
        %v2008 = vld [vmem:[%s3 + $0x1550] sm:$0xff]
        %v2009 = vld [vmem:[%s3 + $0x1558] sm:$0xff]
        %v2010 = vld [vmem:[%s3 + $0x1560] sm:$0xff]
        %v2011 = vld [vmem:[%s3 + $0x1568] sm:$0xff]
        %v2012 = vld [vmem:[%s3 + $0x1570] sm:$0xff]
        %v2013 = vld [vmem:[%s3 + $0x1578] sm:$0xff]
        %v2014 = vld [vmem:[%s3 + $0x1580] sm:$0xff]
        %v2015 = vld [vmem:[%s3 + $0x1588] sm:$0xff]
        %v2016 = vld [vmem:[%s3 + $0x1590] sm:$0xff]
        %v2017 = vld [vmem:[%s3 + $0x1598] sm:$0xff]
        %v2018 = vld [vmem:[%s3 + $0x15a0] sm:$0xff]
        %v2019 = vld [vmem:[%s3 + $0x15a8] sm:$0xff]
        %v2020 = vld [vmem:[%s3 + $0x15b0] sm:$0xff]
        %v2021 = vld [vmem:[%s3 + $0x15b8] sm:$0xff]
        %v2022 = vld [vmem:[%s3 + $0x15c0] sm:$0xff]
        %v2023 = vld [vmem:[%s3 + $0x15c8] sm:$0xff]
        %v2024 = vld [vmem:[%s3 + $0x15d0] sm:$0xff]
        %v2025 = vld [vmem:[%s3 + $0x15d8] sm:$0xff]
        %v2026 = vld [vmem:[%s3 + $0x15e0] sm:$0xff]
        %v2027 = vld [vmem:[%s3 + $0x15e8] sm:$0xff]
        %v2028 = vld [vmem:[%s3 + $0x15f0] sm:$0xff]
        %v2029 = vld [vmem:[%s3 + $0x15f8] sm:$0xff]
        %v2030 = vld [vmem:[%s3 + $0x1600] sm:$0xff]
        %v2031 = vld [vmem:[%s3 + $0x1608] sm:$0xff]
        %v2032 = vld [vmem:[%s3 + $0x1610] sm:$0xff]
        %v2033 = vld [vmem:[%s3 + $0x1618] sm:$0xff]
        %v2034 = vld [vmem:[%s3 + $0x1620] sm:$0xff]
        %v2035 = vld [vmem:[%s3 + $0x1628] sm:$0xff]
        %v2036 = vld [vmem:[%s3 + $0x1630] sm:$0xff]
        %v2037 = vld [vmem:[%s3 + $0x1638] sm:$0xff]
        %v2038 = vld [vmem:[%s3 + $0x1640] sm:$0xff]
        %v2039 = vld [vmem:[%s3 + $0x1648] sm:$0xff]
        %v2040 = vld [vmem:[%s3 + $0x1650] sm:$0xff]
        %v2041 = vld [vmem:[%s3 + $0x1658] sm:$0xff]
        %v2042 = vld [vmem:[%s3 + $0x1660] sm:$0xff]
        %v2043 = vld [vmem:[%s3 + $0x1668] sm:$0xff]
        %v2044 = vld [vmem:[%s3 + $0x1670] sm:$0xff]
        %v2045 = vld [vmem:[%s3 + $0x1678] sm:$0xff]
        %v2046 = vld [vmem:[%s4] sm:$0xf]
        %v2048 = vlaneseq
        %v2049 = vshrl.u32 %v2048, 7
        %v2050 = vsub.s32 0, %v2049
        %v2051 = vrot.slane %v2046, %v2050
        %v2052 = vlaneseq
        %v2053 = vshrl.u32 %v2052, 7
        %v2054 = vsub.s32 1, %v2053
        %v2055 = vrot.slane %v2046, %v2054
        %v2056 = vlaneseq
        %v2057 = vshrl.u32 %v2056, 7
        %v2058 = vsub.s32 2, %v2057
        %v2059 = vrot.slane %v2046, %v2058
        %v2060 = vlaneseq
        %v2061 = vshrl.u32 %v2060, 7
        %v2062 = vsub.s32 3, %v2061
        %v2063 = vrot.slane %v2046, %v2062
        %v2068 = vsel %vm276, %v1309, 0
        %v2070 = vsel %vm276, %v1315, 0
        %2072 = vmatprep.subr.mxu0 %v1387
        %2073 = vmatpush1.msra.mxu0 %v1386
        %2074 = vmatprep.subr.mxu0 %v1383
        %2075 = vmatpush1.msra.mxu0 %v1382
        %2076 = vmatprep.subr.mxu0 %v1379
        %2077 = vmatpush1.msra.mxu0 %v1378
        %2078 = vmatprep.subr.mxu0 %v1375
        %2079 = vmatpush1.msra.mxu0 %v1374
        %2080 = vmatprep.subr.mxu0 %v1371
        %2081 = vmatpush1.msra.mxu0 %v1370
        %2082 = vmatprep.subr.mxu0 %v1367
        %2083 = vmatpush1.msra.mxu0 %v1366
        %2084 = vmatprep.subr.mxu0 %v1363
        %2085 = vmatpush1.msra.mxu0 %v1362
        %2086 = vmatprep.subr.mxu0 %v1359
        %2087 = vmatpush1.msra.mxu0 %v1358
        %2088 = vmatprep.subr.mxu0 %v1355
        %2089 = vmatpush1.msra.mxu0 %v1354
        %2090 = vmatprep.subr.mxu0 %v1351
        %2091 = vmatpush1.msra.mxu0 %v1350
        %2092 = vmatprep.subr.mxu0 %v1347
        %2093 = vmatpush1.msra.mxu0 %v1346
        %2094 = vmatprep.subr.mxu0 %v1343
        %2095 = vmatpush1.msra.mxu0 %v1342
        %2096 = vmatprep.subr.mxu0 %v1339
        %2097 = vmatpush1.msra.mxu0 %v1338
        %2098 = vmatprep.subr.mxu0 %v1335
        %2099 = vmatpush1.msra.mxu0 %v1334
        %2100 = vmatprep.subr.mxu0 %v1331
        %2101 = vmatpush1.msra.mxu0 %v1330
        %2102 = vmatprep.subr.mxu0 %v1327
        %2103 = vmatpush1.msra.mxu0 %v1326
        %2104 = vmatprep.subr.mxu0 %v1451
        %2105 = vmatpush2.msra.mxu0 %v1450
        %2106 = vmatprep.subr.mxu0 %v1447
        %2107 = vmatpush2.msra.mxu0 %v1446
        %2108 = vmatprep.subr.mxu0 %v1443
        %2109 = vmatpush2.msra.mxu0 %v1442
        %2110 = vmatprep.subr.mxu0 %v1439
        %2111 = vmatpush2.msra.mxu0 %v1438
        %2112 = vmatprep.subr.mxu0 %v1435
        %2113 = vmatpush2.msra.mxu0 %v1434
        %2114 = vmatprep.subr.mxu0 %v1431
        %2115 = vmatpush2.msra.mxu0 %v1430
        %2116 = vmatprep.subr.mxu0 %v1427
        %2117 = vmatpush2.msra.mxu0 %v1426
        %2118 = vmatprep.subr.mxu0 %v1423
        %2119 = vmatpush2.msra.mxu0 %v1422
        %2120 = vmatprep.subr.mxu0 %v1419
        %2121 = vmatpush2.msra.mxu0 %v1418
        %2122 = vmatprep.subr.mxu0 %v1415
        %2123 = vmatpush2.msra.mxu0 %v1414
        %2124 = vmatprep.subr.mxu0 %v1411
        %2125 = vmatpush2.msra.mxu0 %v1410
        %2126 = vmatprep.subr.mxu0 %v1407
        %2127 = vmatpush2.msra.mxu0 %v1406
        %2128 = vmatprep.subr.mxu0 %v1403
        %2129 = vmatpush2.msra.mxu0 %v1402
        %2130 = vmatprep.subr.mxu0 %v1399
        %2131 = vmatpush2.msra.mxu0 %v1398
        %2132 = vmatprep.subr.mxu0 %v1395
        %2133 = vmatpush2.msra.mxu0 %v1394
        %2134 = vmatprep.subr.mxu0 %v1391
        %2135 = vmatpush2.msra.mxu0 %v1390
        %2136 = vmatprep.mubr.f32.mxu0 %v1149
        %2137 = vmatmul.mubr.f32.gmra.mxu0 %v1148
        %v2138 = vpop.f32.mrf.mxu0
        %v2139 = vadd.f32 %v2051, %v2138
        %v2140 = vpop.f32.mrf.mxu0
        %v2141 = vadd.f32 %v2055, %v2140
        %2142 = vmatprep.mubr.f32.mxu0 %v1152
        %2143 = vmatmul.mubr.f32.gmra.mxu0 %v1151
        %v2144 = vpop.f32.mrf.mxu0
        %v2145 = vadd.f32 %v2051, %v2144
        %v2146 = vpop.f32.mrf.mxu0
        %v2147 = vadd.f32 %v2055, %v2146
        %2148 = vdwg.mxu0
        %2149 = vmatprep.subr.mxu0 %v1515
        %2150 = vmatpush1.msra.mxu0 %v1514
        %2151 = vmatprep.subr.mxu0 %v1511
        %2152 = vmatpush1.msra.mxu0 %v1510
        %2153 = vmatprep.subr.mxu0 %v1507
        %2154 = vmatpush1.msra.mxu0 %v1506
        %2155 = vmatprep.subr.mxu0 %v1503
        %2156 = vmatpush1.msra.mxu0 %v1502
        %2157 = vmatprep.subr.mxu0 %v1499
        %2158 = vmatpush1.msra.mxu0 %v1498
        %2159 = vmatprep.subr.mxu0 %v1495
        %2160 = vmatpush1.msra.mxu0 %v1494
        %2161 = vmatprep.subr.mxu0 %v1491
        %2162 = vmatpush1.msra.mxu0 %v1490
        %2163 = vmatprep.subr.mxu0 %v1487
        %2164 = vmatpush1.msra.mxu0 %v1486
        %2165 = vmatprep.subr.mxu0 %v1483
        %2166 = vmatpush1.msra.mxu0 %v1482
        %2167 = vmatprep.subr.mxu0 %v1479
        %2168 = vmatpush1.msra.mxu0 %v1478
        %2169 = vmatprep.subr.mxu0 %v1475
        %2170 = vmatpush1.msra.mxu0 %v1474
        %2171 = vmatprep.subr.mxu0 %v1471
        %2172 = vmatpush1.msra.mxu0 %v1470
        %2173 = vmatprep.subr.mxu0 %v1467
        %2174 = vmatpush1.msra.mxu0 %v1466
        %2175 = vmatprep.subr.mxu0 %v1463
        %2176 = vmatpush1.msra.mxu0 %v1462
        %2177 = vmatprep.subr.mxu0 %v1459
        %2178 = vmatpush1.msra.mxu0 %v1458
        %2179 = vmatprep.subr.mxu0 %v1455
        %2180 = vmatpush1.msra.mxu0 %v1454
        %2181 = vmatprep.subr.mxu0 %v1579
        %2182 = vmatpush2.msra.mxu0 %v1578
        %2183 = vmatprep.subr.mxu0 %v1575
        %2184 = vmatpush2.msra.mxu0 %v1574
        %2185 = vmatprep.subr.mxu0 %v1571
        %2186 = vmatpush2.msra.mxu0 %v1570
        %2187 = vmatprep.subr.mxu0 %v1567
        %2188 = vmatpush2.msra.mxu0 %v1566
        %2189 = vmatprep.subr.mxu0 %v1563
        %2190 = vmatpush2.msra.mxu0 %v1562
        %2191 = vmatprep.subr.mxu0 %v1559
        %2192 = vmatpush2.msra.mxu0 %v1558
        %2193 = vmatprep.subr.mxu0 %v1555
        %2194 = vmatpush2.msra.mxu0 %v1554
        %2195 = vmatprep.subr.mxu0 %v1551
        %2196 = vmatpush2.msra.mxu0 %v1550
        %2197 = vmatprep.subr.mxu0 %v1547
        %2198 = vmatpush2.msra.mxu0 %v1546
        %2199 = vmatprep.subr.mxu0 %v1543
        %2200 = vmatpush2.msra.mxu0 %v1542
        %2201 = vmatprep.subr.mxu0 %v1539
        %2202 = vmatpush2.msra.mxu0 %v1538
        %2203 = vmatprep.subr.mxu0 %v1535
        %2204 = vmatpush2.msra.mxu0 %v1534
        %2205 = vmatprep.subr.mxu0 %v1531
        %2206 = vmatpush2.msra.mxu0 %v1530
        %2207 = vmatprep.subr.mxu0 %v1527
        %2208 = vmatpush2.msra.mxu0 %v1526
        %2209 = vmatprep.subr.mxu0 %v1523
        %2210 = vmatpush2.msra.mxu0 %v1522
        %2211 = vmatprep.subr.mxu0 %v1519
        %2212 = vmatpush2.msra.mxu0 %v1518
        %2213 = vmatprep.mubr.f32.mxu0 %v1205
        %2214 = vmatmul.mubr.f32.gmra.mxu0 %v1320
        %v2215 = vpop.f32.mrf.mxu0
        %v2216 = vadd.f32 %v2139, %v2215
        %v2217 = vpop.f32.mrf.mxu0
        %v2218 = vadd.f32 %v2141, %v2217
        %2219 = vmatprep.mubr.f32.mxu0 %v1207
        %2220 = vmatmul.mubr.f32.gmra.mxu0 %v1321
        %v2221 = vpop.f32.mrf.mxu0
        %v2222 = vadd.f32 %v2145, %v2221
        %v2223 = vpop.f32.mrf.mxu0
        %v2224 = vadd.f32 %v2147, %v2223
        %2225 = vdwg.mxu0
        %2226 = vmatprep.subr.mxu0 %v1643
        %2227 = vmatpush1.msra.mxu0 %v1642
        %2228 = vmatprep.subr.mxu0 %v1639
        %2229 = vmatpush1.msra.mxu0 %v1638
        %2230 = vmatprep.subr.mxu0 %v1635
        %2231 = vmatpush1.msra.mxu0 %v1634
        %2232 = vmatprep.subr.mxu0 %v1631
        %2233 = vmatpush1.msra.mxu0 %v1630
        %2234 = vmatprep.subr.mxu0 %v1627
        %2235 = vmatpush1.msra.mxu0 %v1626
        %2236 = vmatprep.subr.mxu0 %v1623
        %2237 = vmatpush1.msra.mxu0 %v1622
        %2238 = vmatprep.subr.mxu0 %v1619
        %2239 = vmatpush1.msra.mxu0 %v1618
        %2240 = vmatprep.subr.mxu0 %v1615
        %2241 = vmatpush1.msra.mxu0 %v1614
        %2242 = vmatprep.subr.mxu0 %v1611
        %2243 = vmatpush1.msra.mxu0 %v1610
        %2244 = vmatprep.subr.mxu0 %v1607
        %2245 = vmatpush1.msra.mxu0 %v1606
        %2246 = vmatprep.subr.mxu0 %v1603
        %2247 = vmatpush1.msra.mxu0 %v1602
        %2248 = vmatprep.subr.mxu0 %v1599
        %2249 = vmatpush1.msra.mxu0 %v1598
        %2250 = vmatprep.subr.mxu0 %v1595
        %2251 = vmatpush1.msra.mxu0 %v1594
        %2252 = vmatprep.subr.mxu0 %v1591
        %2253 = vmatpush1.msra.mxu0 %v1590
        %2254 = vmatprep.subr.mxu0 %v1587
        %2255 = vmatpush1.msra.mxu0 %v1586
        %2256 = vmatprep.subr.mxu0 %v1583
        %2257 = vmatpush1.msra.mxu0 %v1582
        %2258 = vmatprep.subr.mxu0 %v1707
        %2259 = vmatpush2.msra.mxu0 %v1706
        %2260 = vmatprep.subr.mxu0 %v1703
        %2261 = vmatpush2.msra.mxu0 %v1702
        %2262 = vmatprep.subr.mxu0 %v1699
        %2263 = vmatpush2.msra.mxu0 %v1698
        %2264 = vmatprep.subr.mxu0 %v1695
        %2265 = vmatpush2.msra.mxu0 %v1694
        %2266 = vmatprep.subr.mxu0 %v1691
        %2267 = vmatpush2.msra.mxu0 %v1690
        %2268 = vmatprep.subr.mxu0 %v1687
        %2269 = vmatpush2.msra.mxu0 %v1686
        %2270 = vmatprep.subr.mxu0 %v1683
        %2271 = vmatpush2.msra.mxu0 %v1682
        %2272 = vmatprep.subr.mxu0 %v1679
        %2273 = vmatpush2.msra.mxu0 %v1678
        %2274 = vmatprep.subr.mxu0 %v1675
        %2275 = vmatpush2.msra.mxu0 %v1674
        %2276 = vmatprep.subr.mxu0 %v1671
        %2277 = vmatpush2.msra.mxu0 %v1670
        %2278 = vmatprep.subr.mxu0 %v1667
        %2279 = vmatpush2.msra.mxu0 %v1666
        %2280 = vmatprep.subr.mxu0 %v1663
        %2281 = vmatpush2.msra.mxu0 %v1662
        %2282 = vmatprep.subr.mxu0 %v1659
        %2283 = vmatpush2.msra.mxu0 %v1658
        %2284 = vmatprep.subr.mxu0 %v1655
        %2285 = vmatpush2.msra.mxu0 %v1654
        %2286 = vmatprep.subr.mxu0 %v1651
        %2287 = vmatpush2.msra.mxu0 %v1650
        %2288 = vmatprep.subr.mxu0 %v1647
        %2289 = vmatpush2.msra.mxu0 %v1646
        %2290 = vmatprep.mubr.f32.mxu0 %v1242
        %2291 = vmatmul.mubr.f32.gmra.mxu0 %v1322
        %v2292 = vpop.f32.mrf.mxu0
        %v2293 = vadd.f32 %v2216, %v2292
        %v2294 = vpop.f32.mrf.mxu0
        %v2295 = vadd.f32 %v2218, %v2294
        %2296 = vmatprep.mubr.f32.mxu0 %v1244
        %2297 = vmatmul.mubr.f32.gmra.mxu0 %v1323
        %v2298 = vpop.f32.mrf.mxu0
        %v2299 = vadd.f32 %v2222, %v2298
        %v2300 = vpop.f32.mrf.mxu0
        %v2301 = vadd.f32 %v2224, %v2300
        %2302 = vdwg.mxu0
        %2303 = vmatprep.subr.mxu0 %v1771
        %2304 = vmatpush1.msra.mxu0 %v1770
        %2305 = vmatprep.subr.mxu0 %v1767
        %2306 = vmatpush1.msra.mxu0 %v1766
        %2307 = vmatprep.subr.mxu0 %v1763
        %2308 = vmatpush1.msra.mxu0 %v1762
        %2309 = vmatprep.subr.mxu0 %v1759
        %2310 = vmatpush1.msra.mxu0 %v1758
        %2311 = vmatprep.subr.mxu0 %v1755
        %2312 = vmatpush1.msra.mxu0 %v1754
        %2313 = vmatprep.subr.mxu0 %v1751
        %2314 = vmatpush1.msra.mxu0 %v1750
        %2315 = vmatprep.subr.mxu0 %v1747
        %2316 = vmatpush1.msra.mxu0 %v1746
        %2317 = vmatprep.subr.mxu0 %v1743
        %2318 = vmatpush1.msra.mxu0 %v1742
        %2319 = vmatprep.subr.mxu0 %v1739
        %2320 = vmatpush1.msra.mxu0 %v1738
        %2321 = vmatprep.subr.mxu0 %v1735
        %2322 = vmatpush1.msra.mxu0 %v1734
        %2323 = vmatprep.subr.mxu0 %v1731
        %2324 = vmatpush1.msra.mxu0 %v1730
        %2325 = vmatprep.subr.mxu0 %v1727
        %2326 = vmatpush1.msra.mxu0 %v1726
        %2327 = vmatprep.subr.mxu0 %v1723
        %2328 = vmatpush1.msra.mxu0 %v1722
        %2329 = vmatprep.subr.mxu0 %v1719
        %2330 = vmatpush1.msra.mxu0 %v1718
        %2331 = vmatprep.subr.mxu0 %v1715
        %2332 = vmatpush1.msra.mxu0 %v1714
        %2333 = vmatprep.subr.mxu0 %v1711
        %2334 = vmatpush1.msra.mxu0 %v1710
        %2335 = vmatprep.subr.mxu0 %v1835
        %2336 = vmatpush2.msra.mxu0 %v1834
        %2337 = vmatprep.subr.mxu0 %v1831
        %2338 = vmatpush2.msra.mxu0 %v1830
        %2339 = vmatprep.subr.mxu0 %v1827
        %2340 = vmatpush2.msra.mxu0 %v1826
        %2341 = vmatprep.subr.mxu0 %v1823
        %2342 = vmatpush2.msra.mxu0 %v1822
        %2343 = vmatprep.subr.mxu0 %v1819
        %2344 = vmatpush2.msra.mxu0 %v1818
        %2345 = vmatprep.subr.mxu0 %v1815
        %2346 = vmatpush2.msra.mxu0 %v1814
        %2347 = vmatprep.subr.mxu0 %v1811
        %2348 = vmatpush2.msra.mxu0 %v1810
        %2349 = vmatprep.subr.mxu0 %v1807
        %2350 = vmatpush2.msra.mxu0 %v1806
        %2351 = vmatprep.subr.mxu0 %v1803
        %2352 = vmatpush2.msra.mxu0 %v1802
        %2353 = vmatprep.subr.mxu0 %v1799
        %2354 = vmatpush2.msra.mxu0 %v1798
        %2355 = vmatprep.subr.mxu0 %v1795
        %2356 = vmatpush2.msra.mxu0 %v1794
        %2357 = vmatprep.subr.mxu0 %v1791
        %2358 = vmatpush2.msra.mxu0 %v1790
        %2359 = vmatprep.subr.mxu0 %v1787
        %2360 = vmatpush2.msra.mxu0 %v1786
        %2361 = vmatprep.subr.mxu0 %v1783
        %2362 = vmatpush2.msra.mxu0 %v1782
        %2363 = vmatprep.subr.mxu0 %v1779
        %2364 = vmatpush2.msra.mxu0 %v1778
        %2365 = vmatprep.subr.mxu0 %v1775
        %2366 = vmatpush2.msra.mxu0 %v1774
        %2367 = vmatprep.mubr.f32.mxu0 %v1285
        %2368 = vmatmul.mubr.f32.gmra.mxu0 %v1324
        %v2369 = vpop.f32.mrf.mxu0
        %v2370 = vadd.f32 %v2293, %v2369
        %v2371 = vpop.f32.mrf.mxu0
        %v2372 = vadd.f32 %v2295, %v2371
        %2373 = vmatprep.mubr.f32.mxu0 %v1287
        %2374 = vmatmul.mubr.f32.gmra.mxu0 %v1325
        %v2375 = vpop.f32.mrf.mxu0
        %v2376 = vadd.f32 %v2299, %v2375
        %v2377 = vpop.f32.mrf.mxu0
        %v2378 = vadd.f32 %v2301, %v2377
        %2379 = vdwg.mxu0
        %2380 = vmatprep.subr.mxu0 %v1899
        %2381 = vmatpush1.msra.mxu0 %v1898
        %2382 = vmatprep.subr.mxu0 %v1895
        %2383 = vmatpush1.msra.mxu0 %v1894
        %2384 = vmatprep.subr.mxu0 %v1891
        %2385 = vmatpush1.msra.mxu0 %v1890
        %2386 = vmatprep.subr.mxu0 %v1887
        %2387 = vmatpush1.msra.mxu0 %v1886
        %2388 = vmatprep.subr.mxu0 %v1883
        %2389 = vmatpush1.msra.mxu0 %v1882
        %2390 = vmatprep.subr.mxu0 %v1879
        %2391 = vmatpush1.msra.mxu0 %v1878
        %2392 = vmatprep.subr.mxu0 %v1875
        %2393 = vmatpush1.msra.mxu0 %v1874
        %2394 = vmatprep.subr.mxu0 %v1871
        %2395 = vmatpush1.msra.mxu0 %v1870
        %2396 = vmatprep.subr.mxu0 %v1867
        %2397 = vmatpush1.msra.mxu0 %v1866
        %2398 = vmatprep.subr.mxu0 %v1863
        %2399 = vmatpush1.msra.mxu0 %v1862
        %2400 = vmatprep.subr.mxu0 %v1859
        %2401 = vmatpush1.msra.mxu0 %v1858
        %2402 = vmatprep.subr.mxu0 %v1855
        %2403 = vmatpush1.msra.mxu0 %v1854
        %2404 = vmatprep.subr.mxu0 %v1851
        %2405 = vmatpush1.msra.mxu0 %v1850
        %2406 = vmatprep.subr.mxu0 %v1847
        %2407 = vmatpush1.msra.mxu0 %v1846
        %2408 = vmatprep.subr.mxu0 %v1843
        %2409 = vmatpush1.msra.mxu0 %v1842
        %2410 = vmatprep.subr.mxu0 %v1839
        %2411 = vmatpush1.msra.mxu0 %v1838
        %2412 = vmatprep.subr.mxu0 %v1963
        %2413 = vmatpush2.msra.mxu0 %v1962
        %2414 = vmatprep.subr.mxu0 %v1959
        %2415 = vmatpush2.msra.mxu0 %v1958
        %2416 = vmatprep.subr.mxu0 %v1955
        %2417 = vmatpush2.msra.mxu0 %v1954
        %2418 = vmatprep.subr.mxu0 %v1951
        %2419 = vmatpush2.msra.mxu0 %v1950
        %2420 = vmatprep.subr.mxu0 %v1947
        %2421 = vmatpush2.msra.mxu0 %v1946
        %2422 = vmatprep.subr.mxu0 %v1943
        %2423 = vmatpush2.msra.mxu0 %v1942
        %2424 = vmatprep.subr.mxu0 %v1939
        %2425 = vmatpush2.msra.mxu0 %v1938
        %2426 = vmatprep.subr.mxu0 %v1935
        %2427 = vmatpush2.msra.mxu0 %v1934
        %2428 = vmatprep.subr.mxu0 %v1931
        %2429 = vmatpush2.msra.mxu0 %v1930
        %2430 = vmatprep.subr.mxu0 %v1927
        %2431 = vmatpush2.msra.mxu0 %v1926
        %2432 = vmatprep.subr.mxu0 %v1923
        %2433 = vmatpush2.msra.mxu0 %v1922
        %2434 = vmatprep.subr.mxu0 %v1919
        %2435 = vmatpush2.msra.mxu0 %v1918
        %2436 = vmatprep.subr.mxu0 %v1915
        %2437 = vmatpush2.msra.mxu0 %v1914
        %2438 = vmatprep.subr.mxu0 %v1911
        %2439 = vmatpush2.msra.mxu0 %v1910
        %2440 = vmatprep.subr.mxu0 %v1907
        %2441 = vmatpush2.msra.mxu0 %v1906
        %2442 = vmatprep.subr.mxu0 %v1903
        %2443 = vmatpush2.msra.mxu0 %v1902
        %2444 = vmatprep.mubr.f32.mxu0 %v1303
        %2445 = vmatmul.mubr.f32.gmra.mxu0 %v1286
        %v2446 = vpop.f32.mrf.mxu0
        %v2447 = vadd.f32 %v2370, %v2446
        %v2448 = vpop.f32.mrf.mxu0
        %v2449 = vadd.f32 %v2372, %v2448
        %2450 = vmatprep.mubr.f32.mxu0 %v1311
        %2451 = vmatmul.mubr.f32.gmra.mxu0 %v1288
        %v2452 = vpop.f32.mrf.mxu0
        %v2453 = vadd.f32 %v2376, %v2452
        %v2454 = vpop.f32.mrf.mxu0
        %v2455 = vadd.f32 %v2378, %v2454
        %2456 = vdwg.mxu0
        %2457 = vmatprep.subr.mxu0 %v2027
        %2458 = vmatpush1.msra.mxu0 %v2026
        %2459 = vmatprep.subr.mxu0 %v2023
        %2460 = vmatpush1.msra.mxu0 %v2022
        %2461 = vmatprep.subr.mxu0 %v2019
        %2462 = vmatpush1.msra.mxu0 %v2018
        %2463 = vmatprep.subr.mxu0 %v2015
        %2464 = vmatpush1.msra.mxu0 %v2014
        %2465 = vmatprep.subr.mxu0 %v2011
        %2466 = vmatpush1.msra.mxu0 %v2010
        %2467 = vmatprep.subr.mxu0 %v2007
        %2468 = vmatpush1.msra.mxu0 %v2006
        %2469 = vmatprep.subr.mxu0 %v2003
        %2470 = vmatpush1.msra.mxu0 %v2002
        %2471 = vmatprep.subr.mxu0 %v1999
        %2472 = vmatpush1.msra.mxu0 %v1998
        %2473 = vmatprep.subr.mxu0 %v1995
        %2474 = vmatpush1.msra.mxu0 %v1994
        %2475 = vmatprep.subr.mxu0 %v1991
        %2476 = vmatpush1.msra.mxu0 %v1990
        %2477 = vmatprep.subr.mxu0 %v1987
        %2478 = vmatpush1.msra.mxu0 %v1986
        %2479 = vmatprep.subr.mxu0 %v1983
        %2480 = vmatpush1.msra.mxu0 %v1982
        %2481 = vmatprep.subr.mxu0 %v1979
        %2482 = vmatpush1.msra.mxu0 %v1978
        %2483 = vmatprep.subr.mxu0 %v1975
        %2484 = vmatpush1.msra.mxu0 %v1974
        %2485 = vmatprep.subr.mxu0 %v1971
        %2486 = vmatpush1.msra.mxu0 %v1970
        %2487 = vmatprep.subr.mxu0 %v1967
        %2488 = vmatpush1.msra.mxu0 %v1966
        %2489 = vmatprep.subr.mxu0 0.0
        %2490 = vmatpush2.msra.mxu0 0.0
        %2491 = vmatprep.subr.mxu0 0.0
        %2492 = vmatpush2.msra.mxu0 0.0
        %2493 = vmatprep.subr.mxu0 0.0
        %2494 = vmatpush2.msra.mxu0 0.0
        %2495 = vmatprep.subr.mxu0 0.0
        %2496 = vmatpush2.msra.mxu0 0.0
        %2497 = vmatprep.subr.mxu0 0.0
        %2498 = vmatpush2.msra.mxu0 0.0
        %2499 = vmatprep.subr.mxu0 0.0
        %2500 = vmatpush2.msra.mxu0 0.0
        %2501 = vmatprep.subr.mxu0 0.0
        %2502 = vmatpush2.msra.mxu0 0.0
        %2503 = vmatprep.subr.mxu0 0.0
        %2504 = vmatpush2.msra.mxu0 0.0
        %2505 = vmatprep.subr.mxu0 0.0
        %2506 = vmatpush2.msra.mxu0 0.0
        %2507 = vmatprep.subr.mxu0 0.0
        %2508 = vmatpush2.msra.mxu0 0.0
        %2509 = vmatprep.subr.mxu0 0.0
        %2510 = vmatpush2.msra.mxu0 0.0
        %2511 = vmatprep.subr.mxu0 0.0
        %2512 = vmatpush2.msra.mxu0 0.0
        %2513 = vmatprep.subr.mxu0 %v2043
        %2514 = vmatpush2.msra.mxu0 %v2042
        %2515 = vmatprep.subr.mxu0 %v2039
        %2516 = vmatpush2.msra.mxu0 %v2038
        %2517 = vmatprep.subr.mxu0 %v2035
        %2518 = vmatpush2.msra.mxu0 %v2034
        %2519 = vmatprep.subr.mxu0 %v2031
        %2520 = vmatpush2.msra.mxu0 %v2030
        %2521 = vmatprep.mubr.f32.mxu0 %v2068
        %2522 = vmatmul.mubr.f32.gmra.mxu0 %v1306
        %v2523 = vpop.f32.mrf.mxu0
        %v2524 = vadd.f32 %v2447, %v2523
        %v2525 = vpop.f32.mrf.mxu0
        %v2526 = vadd.f32 %v2449, %v2525
        %2527 = vmatprep.mubr.f32.mxu0 %v2070
        %2528 = vmatmul.mubr.f32.gmra.mxu0 %v1313
        %v2529 = vpop.f32.mrf.mxu0
        %v2530 = vadd.f32 %v2453, %v2529
        %v2531 = vpop.f32.mrf.mxu0
        %v2532 = vadd.f32 %v2455, %v2531
        %2533 = vdwg.mxu0
        %2534 = vmatprep.subr.mxu0 %v1389
        %2535 = vmatpush1.msra.mxu0 %v1388
        %2536 = vmatprep.subr.mxu0 %v1385
        %2537 = vmatpush1.msra.mxu0 %v1384
        %2538 = vmatprep.subr.mxu0 %v1381
        %2539 = vmatpush1.msra.mxu0 %v1380
        %2540 = vmatprep.subr.mxu0 %v1377
        %2541 = vmatpush1.msra.mxu0 %v1376
        %2542 = vmatprep.subr.mxu0 %v1373
        %2543 = vmatpush1.msra.mxu0 %v1372
        %2544 = vmatprep.subr.mxu0 %v1369
        %2545 = vmatpush1.msra.mxu0 %v1368
        %2546 = vmatprep.subr.mxu0 %v1365
        %2547 = vmatpush1.msra.mxu0 %v1364
        %2548 = vmatprep.subr.mxu0 %v1361
        %2549 = vmatpush1.msra.mxu0 %v1360
        %2550 = vmatprep.subr.mxu0 %v1357
        %2551 = vmatpush1.msra.mxu0 %v1356
        %2552 = vmatprep.subr.mxu0 %v1353
        %2553 = vmatpush1.msra.mxu0 %v1352
        %2554 = vmatprep.subr.mxu0 %v1349
        %2555 = vmatpush1.msra.mxu0 %v1348
        %2556 = vmatprep.subr.mxu0 %v1345
        %2557 = vmatpush1.msra.mxu0 %v1344
        %2558 = vmatprep.subr.mxu0 %v1341
        %2559 = vmatpush1.msra.mxu0 %v1340
        %2560 = vmatprep.subr.mxu0 %v1337
        %2561 = vmatpush1.msra.mxu0 %v1336
        %2562 = vmatprep.subr.mxu0 %v1333
        %2563 = vmatpush1.msra.mxu0 %v1332
        %2564 = vmatprep.subr.mxu0 %v1329
        %2565 = vmatpush1.msra.mxu0 %v1328
        %2566 = vmatprep.subr.mxu0 %v1453
        %2567 = vmatpush2.msra.mxu0 %v1452
        %2568 = vmatprep.subr.mxu0 %v1449
        %2569 = vmatpush2.msra.mxu0 %v1448
        %2570 = vmatprep.subr.mxu0 %v1445
        %2571 = vmatpush2.msra.mxu0 %v1444
        %2572 = vmatprep.subr.mxu0 %v1441
        %2573 = vmatpush2.msra.mxu0 %v1440
        %2574 = vmatprep.subr.mxu0 %v1437
        %2575 = vmatpush2.msra.mxu0 %v1436
        %2576 = vmatprep.subr.mxu0 %v1433
        %2577 = vmatpush2.msra.mxu0 %v1432
        %2578 = vmatprep.subr.mxu0 %v1429
        %2579 = vmatpush2.msra.mxu0 %v1428
        %2580 = vmatprep.subr.mxu0 %v1425
        %2581 = vmatpush2.msra.mxu0 %v1424
        %2582 = vmatprep.subr.mxu0 %v1421
        %2583 = vmatpush2.msra.mxu0 %v1420
        %2584 = vmatprep.subr.mxu0 %v1417
        %2585 = vmatpush2.msra.mxu0 %v1416
        %2586 = vmatprep.subr.mxu0 %v1413
        %2587 = vmatpush2.msra.mxu0 %v1412
        %2588 = vmatprep.subr.mxu0 %v1409
        %2589 = vmatpush2.msra.mxu0 %v1408
        %2590 = vmatprep.subr.mxu0 %v1405
        %2591 = vmatpush2.msra.mxu0 %v1404
        %2592 = vmatprep.subr.mxu0 %v1401
        %2593 = vmatpush2.msra.mxu0 %v1400
        %2594 = vmatprep.subr.mxu0 %v1397
        %2595 = vmatpush2.msra.mxu0 %v1396
        %2596 = vmatprep.subr.mxu0 %v1393
        %2597 = vmatpush2.msra.mxu0 %v1392
        %2598 = vmatprep.mubr.f32.mxu0 %v1149
        %2599 = vmatmul.mubr.f32.gmra.mxu0 %v1148
        %v2600 = vpop.f32.mrf.mxu0
        %v2601 = vadd.f32 %v2059, %v2600
        %v2602 = vpop.f32.mrf.mxu0
        %v2603 = vadd.f32 %v2063, %v2602
        %2604 = vmatprep.mubr.f32.mxu0 %v1152
        %2605 = vmatmul.mubr.f32.gmra.mxu0 %v1151
        %v2606 = vpop.f32.mrf.mxu0
        %v2607 = vadd.f32 %v2059, %v2606
        %v2608 = vpop.f32.mrf.mxu0
        %v2609 = vadd.f32 %v2063, %v2608
        %2610 = vdwg.mxu0
        %2611 = vmatprep.subr.mxu0 %v1517
        %2612 = vmatpush1.msra.mxu0 %v1516
        %2613 = vmatprep.subr.mxu0 %v1513
        %2614 = vmatpush1.msra.mxu0 %v1512
        %2615 = vmatprep.subr.mxu0 %v1509
        %2616 = vmatpush1.msra.mxu0 %v1508
        %2617 = vmatprep.subr.mxu0 %v1505
        %2618 = vmatpush1.msra.mxu0 %v1504
        %2619 = vmatprep.subr.mxu0 %v1501
        %2620 = vmatpush1.msra.mxu0 %v1500
        %2621 = vmatprep.subr.mxu0 %v1497
        %2622 = vmatpush1.msra.mxu0 %v1496
        %2623 = vmatprep.subr.mxu0 %v1493
        %2624 = vmatpush1.msra.mxu0 %v1492
        %2625 = vmatprep.subr.mxu0 %v1489
        %2626 = vmatpush1.msra.mxu0 %v1488
        %2627 = vmatprep.subr.mxu0 %v1485
        %2628 = vmatpush1.msra.mxu0 %v1484
        %2629 = vmatprep.subr.mxu0 %v1481
        %2630 = vmatpush1.msra.mxu0 %v1480
        %2631 = vmatprep.subr.mxu0 %v1477
        %2632 = vmatpush1.msra.mxu0 %v1476
        %2633 = vmatprep.subr.mxu0 %v1473
        %2634 = vmatpush1.msra.mxu0 %v1472
        %2635 = vmatprep.subr.mxu0 %v1469
        %2636 = vmatpush1.msra.mxu0 %v1468
        %2637 = vmatprep.subr.mxu0 %v1465
        %2638 = vmatpush1.msra.mxu0 %v1464
        %2639 = vmatprep.subr.mxu0 %v1461
        %2640 = vmatpush1.msra.mxu0 %v1460
        %2641 = vmatprep.subr.mxu0 %v1457
        %2642 = vmatpush1.msra.mxu0 %v1456
        %2643 = vmatprep.subr.mxu0 %v1581
        %2644 = vmatpush2.msra.mxu0 %v1580
        %2645 = vmatprep.subr.mxu0 %v1577
        %2646 = vmatpush2.msra.mxu0 %v1576
        %2647 = vmatprep.subr.mxu0 %v1573
        %2648 = vmatpush2.msra.mxu0 %v1572
        %2649 = vmatprep.subr.mxu0 %v1569
        %2650 = vmatpush2.msra.mxu0 %v1568
        %2651 = vmatprep.subr.mxu0 %v1565
        %2652 = vmatpush2.msra.mxu0 %v1564
        %2653 = vmatprep.subr.mxu0 %v1561
        %2654 = vmatpush2.msra.mxu0 %v1560
        %2655 = vmatprep.subr.mxu0 %v1557
        %2656 = vmatpush2.msra.mxu0 %v1556
        %2657 = vmatprep.subr.mxu0 %v1553
        %2658 = vmatpush2.msra.mxu0 %v1552
        %2659 = vmatprep.subr.mxu0 %v1549
        %2660 = vmatpush2.msra.mxu0 %v1548
        %2661 = vmatprep.subr.mxu0 %v1545
        %2662 = vmatpush2.msra.mxu0 %v1544
        %2663 = vmatprep.subr.mxu0 %v1541
        %2664 = vmatpush2.msra.mxu0 %v1540
        %2665 = vmatprep.subr.mxu0 %v1537
        %2666 = vmatpush2.msra.mxu0 %v1536
        %2667 = vmatprep.subr.mxu0 %v1533
        %2668 = vmatpush2.msra.mxu0 %v1532
        %2669 = vmatprep.subr.mxu0 %v1529
        %2670 = vmatpush2.msra.mxu0 %v1528
        %2671 = vmatprep.subr.mxu0 %v1525
        %2672 = vmatpush2.msra.mxu0 %v1524
        %2673 = vmatprep.subr.mxu0 %v1521
        %2674 = vmatpush2.msra.mxu0 %v1520
        %2675 = vmatprep.mubr.f32.mxu0 %v1205
        %2676 = vmatmul.mubr.f32.gmra.mxu0 %v1320
        %v2677 = vpop.f32.mrf.mxu0
        %v2678 = vadd.f32 %v2601, %v2677
        %v2679 = vpop.f32.mrf.mxu0
        %v2680 = vadd.f32 %v2603, %v2679
        %2681 = vmatprep.mubr.f32.mxu0 %v1207
        %2682 = vmatmul.mubr.f32.gmra.mxu0 %v1321
        %v2683 = vpop.f32.mrf.mxu0
        %v2684 = vadd.f32 %v2607, %v2683
        %v2685 = vpop.f32.mrf.mxu0
        %v2686 = vadd.f32 %v2609, %v2685
        %2687 = vdwg.mxu0
        %2688 = vmatprep.subr.mxu0 %v1645
        %2689 = vmatpush1.msra.mxu0 %v1644
        %2690 = vmatprep.subr.mxu0 %v1641
        %2691 = vmatpush1.msra.mxu0 %v1640
        %2692 = vmatprep.subr.mxu0 %v1637
        %2693 = vmatpush1.msra.mxu0 %v1636
        %2694 = vmatprep.subr.mxu0 %v1633
        %2695 = vmatpush1.msra.mxu0 %v1632
        %2696 = vmatprep.subr.mxu0 %v1629
        %2697 = vmatpush1.msra.mxu0 %v1628
        %2698 = vmatprep.subr.mxu0 %v1625
        %2699 = vmatpush1.msra.mxu0 %v1624
        %2700 = vmatprep.subr.mxu0 %v1621
        %2701 = vmatpush1.msra.mxu0 %v1620
        %2702 = vmatprep.subr.mxu0 %v1617
        %2703 = vmatpush1.msra.mxu0 %v1616
        %2704 = vmatprep.subr.mxu0 %v1613
        %2705 = vmatpush1.msra.mxu0 %v1612
        %2706 = vmatprep.subr.mxu0 %v1609
        %2707 = vmatpush1.msra.mxu0 %v1608
        %2708 = vmatprep.subr.mxu0 %v1605
        %2709 = vmatpush1.msra.mxu0 %v1604
        %2710 = vmatprep.subr.mxu0 %v1601
        %2711 = vmatpush1.msra.mxu0 %v1600
        %2712 = vmatprep.subr.mxu0 %v1597
        %2713 = vmatpush1.msra.mxu0 %v1596
        %2714 = vmatprep.subr.mxu0 %v1593
        %2715 = vmatpush1.msra.mxu0 %v1592
        %2716 = vmatprep.subr.mxu0 %v1589
        %2717 = vmatpush1.msra.mxu0 %v1588
        %2718 = vmatprep.subr.mxu0 %v1585
        %2719 = vmatpush1.msra.mxu0 %v1584
        %2720 = vmatprep.subr.mxu0 %v1709
        %2721 = vmatpush2.msra.mxu0 %v1708
        %2722 = vmatprep.subr.mxu0 %v1705
        %2723 = vmatpush2.msra.mxu0 %v1704
        %2724 = vmatprep.subr.mxu0 %v1701
        %2725 = vmatpush2.msra.mxu0 %v1700
        %2726 = vmatprep.subr.mxu0 %v1697
        %2727 = vmatpush2.msra.mxu0 %v1696
        %2728 = vmatprep.subr.mxu0 %v1693
        %2729 = vmatpush2.msra.mxu0 %v1692
        %2730 = vmatprep.subr.mxu0 %v1689
        %2731 = vmatpush2.msra.mxu0 %v1688
        %2732 = vmatprep.subr.mxu0 %v1685
        %2733 = vmatpush2.msra.mxu0 %v1684
        %2734 = vmatprep.subr.mxu0 %v1681
        %2735 = vmatpush2.msra.mxu0 %v1680
        %2736 = vmatprep.subr.mxu0 %v1677
        %2737 = vmatpush2.msra.mxu0 %v1676
        %2738 = vmatprep.subr.mxu0 %v1673
        %2739 = vmatpush2.msra.mxu0 %v1672
        %2740 = vmatprep.subr.mxu0 %v1669
        %2741 = vmatpush2.msra.mxu0 %v1668
        %2742 = vmatprep.subr.mxu0 %v1665
        %2743 = vmatpush2.msra.mxu0 %v1664
        %2744 = vmatprep.subr.mxu0 %v1661
        %2745 = vmatpush2.msra.mxu0 %v1660
        %2746 = vmatprep.subr.mxu0 %v1657
        %2747 = vmatpush2.msra.mxu0 %v1656
        %2748 = vmatprep.subr.mxu0 %v1653
        %2749 = vmatpush2.msra.mxu0 %v1652
        %2750 = vmatprep.subr.mxu0 %v1649
        %2751 = vmatpush2.msra.mxu0 %v1648
        %2752 = vmatprep.mubr.f32.mxu0 %v1242
        %2753 = vmatmul.mubr.f32.gmra.mxu0 %v1322
        %v2754 = vpop.f32.mrf.mxu0
        %v2755 = vadd.f32 %v2678, %v2754
        %v2756 = vpop.f32.mrf.mxu0
        %v2757 = vadd.f32 %v2680, %v2756
        %2758 = vmatprep.mubr.f32.mxu0 %v1244
        %2759 = vmatmul.mubr.f32.gmra.mxu0 %v1323
        %v2760 = vpop.f32.mrf.mxu0
        %v2761 = vadd.f32 %v2684, %v2760
        %v2762 = vpop.f32.mrf.mxu0
        %v2763 = vadd.f32 %v2686, %v2762
        %2764 = vdwg.mxu0
        %2765 = vmatprep.subr.mxu0 %v1773
        %2766 = vmatpush1.msra.mxu0 %v1772
        %2767 = vmatprep.subr.mxu0 %v1769
        %2768 = vmatpush1.msra.mxu0 %v1768
        %2769 = vmatprep.subr.mxu0 %v1765
        %2770 = vmatpush1.msra.mxu0 %v1764
        %2771 = vmatprep.subr.mxu0 %v1761
        %2772 = vmatpush1.msra.mxu0 %v1760
        %2773 = vmatprep.subr.mxu0 %v1757
        %2774 = vmatpush1.msra.mxu0 %v1756
        %2775 = vmatprep.subr.mxu0 %v1753
        %2776 = vmatpush1.msra.mxu0 %v1752
        %2777 = vmatprep.subr.mxu0 %v1749
        %2778 = vmatpush1.msra.mxu0 %v1748
        %2779 = vmatprep.subr.mxu0 %v1745
        %2780 = vmatpush1.msra.mxu0 %v1744
        %2781 = vmatprep.subr.mxu0 %v1741
        %2782 = vmatpush1.msra.mxu0 %v1740
        %2783 = vmatprep.subr.mxu0 %v1737
        %2784 = vmatpush1.msra.mxu0 %v1736
        %2785 = vmatprep.subr.mxu0 %v1733
        %2786 = vmatpush1.msra.mxu0 %v1732
        %2787 = vmatprep.subr.mxu0 %v1729
        %2788 = vmatpush1.msra.mxu0 %v1728
        %2789 = vmatprep.subr.mxu0 %v1725
        %2790 = vmatpush1.msra.mxu0 %v1724
        %2791 = vmatprep.subr.mxu0 %v1721
        %2792 = vmatpush1.msra.mxu0 %v1720
        %2793 = vmatprep.subr.mxu0 %v1717
        %2794 = vmatpush1.msra.mxu0 %v1716
        %2795 = vmatprep.subr.mxu0 %v1713
        %2796 = vmatpush1.msra.mxu0 %v1712
        %2797 = vmatprep.subr.mxu0 %v1837
        %2798 = vmatpush2.msra.mxu0 %v1836
        %2799 = vmatprep.subr.mxu0 %v1833
        %2800 = vmatpush2.msra.mxu0 %v1832
        %2801 = vmatprep.subr.mxu0 %v1829
        %2802 = vmatpush2.msra.mxu0 %v1828
        %2803 = vmatprep.subr.mxu0 %v1825
        %2804 = vmatpush2.msra.mxu0 %v1824
        %2805 = vmatprep.subr.mxu0 %v1821
        %2806 = vmatpush2.msra.mxu0 %v1820
        %2807 = vmatprep.subr.mxu0 %v1817
        %2808 = vmatpush2.msra.mxu0 %v1816
        %2809 = vmatprep.subr.mxu0 %v1813
        %2810 = vmatpush2.msra.mxu0 %v1812
        %2811 = vmatprep.subr.mxu0 %v1809
        %2812 = vmatpush2.msra.mxu0 %v1808
        %2813 = vmatprep.subr.mxu0 %v1805
        %2814 = vmatpush2.msra.mxu0 %v1804
        %2815 = vmatprep.subr.mxu0 %v1801
        %2816 = vmatpush2.msra.mxu0 %v1800
        %2817 = vmatprep.subr.mxu0 %v1797
        %2818 = vmatpush2.msra.mxu0 %v1796
        %2819 = vmatprep.subr.mxu0 %v1793
        %2820 = vmatpush2.msra.mxu0 %v1792
        %2821 = vmatprep.subr.mxu0 %v1789
        %2822 = vmatpush2.msra.mxu0 %v1788
        %2823 = vmatprep.subr.mxu0 %v1785
        %2824 = vmatpush2.msra.mxu0 %v1784
        %2825 = vmatprep.subr.mxu0 %v1781
        %2826 = vmatpush2.msra.mxu0 %v1780
        %2827 = vmatprep.subr.mxu0 %v1777
        %2828 = vmatpush2.msra.mxu0 %v1776
        %2829 = vmatprep.mubr.f32.mxu0 %v1285
        %2830 = vmatmul.mubr.f32.gmra.mxu0 %v1324
        %v2831 = vpop.f32.mrf.mxu0
        %v2832 = vadd.f32 %v2755, %v2831
        %v2833 = vpop.f32.mrf.mxu0
        %v2834 = vadd.f32 %v2757, %v2833
        %2835 = vmatprep.mubr.f32.mxu0 %v1287
        %2836 = vmatmul.mubr.f32.gmra.mxu0 %v1325
        %v2837 = vpop.f32.mrf.mxu0
        %v2838 = vadd.f32 %v2761, %v2837
        %v2839 = vpop.f32.mrf.mxu0
        %v2840 = vadd.f32 %v2763, %v2839
        %2841 = vdwg.mxu0
        %2842 = vmatprep.subr.mxu0 %v1901
        %2843 = vmatpush1.msra.mxu0 %v1900
        %2844 = vmatprep.subr.mxu0 %v1897
        %2845 = vmatpush1.msra.mxu0 %v1896
        %2846 = vmatprep.subr.mxu0 %v1893
        %2847 = vmatpush1.msra.mxu0 %v1892
        %2848 = vmatprep.subr.mxu0 %v1889
        %2849 = vmatpush1.msra.mxu0 %v1888
        %2850 = vmatprep.subr.mxu0 %v1885
        %2851 = vmatpush1.msra.mxu0 %v1884
        %2852 = vmatprep.subr.mxu0 %v1881
        %2853 = vmatpush1.msra.mxu0 %v1880
        %2854 = vmatprep.subr.mxu0 %v1877
        %2855 = vmatpush1.msra.mxu0 %v1876
        %2856 = vmatprep.subr.mxu0 %v1873
        %2857 = vmatpush1.msra.mxu0 %v1872
        %2858 = vmatprep.subr.mxu0 %v1869
        %2859 = vmatpush1.msra.mxu0 %v1868
        %2860 = vmatprep.subr.mxu0 %v1865
        %2861 = vmatpush1.msra.mxu0 %v1864
        %2862 = vmatprep.subr.mxu0 %v1861
        %2863 = vmatpush1.msra.mxu0 %v1860
        %2864 = vmatprep.subr.mxu0 %v1857
        %2865 = vmatpush1.msra.mxu0 %v1856
        %2866 = vmatprep.subr.mxu0 %v1853
        %2867 = vmatpush1.msra.mxu0 %v1852
        %2868 = vmatprep.subr.mxu0 %v1849
        %2869 = vmatpush1.msra.mxu0 %v1848
        %2870 = vmatprep.subr.mxu0 %v1845
        %2871 = vmatpush1.msra.mxu0 %v1844
        %2872 = vmatprep.subr.mxu0 %v1841
        %2873 = vmatpush1.msra.mxu0 %v1840
        %2874 = vmatprep.subr.mxu0 %v1965
        %2875 = vmatpush2.msra.mxu0 %v1964
        %2876 = vmatprep.subr.mxu0 %v1961
        %2877 = vmatpush2.msra.mxu0 %v1960
        %2878 = vmatprep.subr.mxu0 %v1957
        %2879 = vmatpush2.msra.mxu0 %v1956
        %2880 = vmatprep.subr.mxu0 %v1953
        %2881 = vmatpush2.msra.mxu0 %v1952
        %2882 = vmatprep.subr.mxu0 %v1949
        %2883 = vmatpush2.msra.mxu0 %v1948
        %2884 = vmatprep.subr.mxu0 %v1945
        %2885 = vmatpush2.msra.mxu0 %v1944
        %2886 = vmatprep.subr.mxu0 %v1941
        %2887 = vmatpush2.msra.mxu0 %v1940
        %2888 = vmatprep.subr.mxu0 %v1937
        %2889 = vmatpush2.msra.mxu0 %v1936
        %2890 = vmatprep.subr.mxu0 %v1933
        %2891 = vmatpush2.msra.mxu0 %v1932
        %2892 = vmatprep.subr.mxu0 %v1929
        %2893 = vmatpush2.msra.mxu0 %v1928
        %2894 = vmatprep.subr.mxu0 %v1925
        %2895 = vmatpush2.msra.mxu0 %v1924
        %2896 = vmatprep.subr.mxu0 %v1921
        %2897 = vmatpush2.msra.mxu0 %v1920
        %2898 = vmatprep.subr.mxu0 %v1917
        %2899 = vmatpush2.msra.mxu0 %v1916
        %2900 = vmatprep.subr.mxu0 %v1913
        %2901 = vmatpush2.msra.mxu0 %v1912
        %2902 = vmatprep.subr.mxu0 %v1909
        %2903 = vmatpush2.msra.mxu0 %v1908
        %2904 = vmatprep.subr.mxu0 %v1905
        %2905 = vmatpush2.msra.mxu0 %v1904
        %2906 = vmatprep.mubr.f32.mxu0 %v1303
        %2907 = vmatmul.mubr.f32.gmra.mxu0 %v1286
        %v2908 = vpop.f32.mrf.mxu0
        %v2909 = vadd.f32 %v2832, %v2908
        %v2910 = vpop.f32.mrf.mxu0
        %v2911 = vadd.f32 %v2834, %v2910
        %2912 = vmatprep.mubr.f32.mxu0 %v1311
        %2913 = vmatmul.mubr.f32.gmra.mxu0 %v1288
        %v2914 = vpop.f32.mrf.mxu0
        %v2915 = vadd.f32 %v2838, %v2914
        %v2916 = vpop.f32.mrf.mxu0
        %v2917 = vadd.f32 %v2840, %v2916
        %2918 = vdwg.mxu0
        %2919 = vmatprep.subr.mxu0 %v2029
        %2920 = vmatpush1.msra.mxu0 %v2028
        %2921 = vmatprep.subr.mxu0 %v2025
        %2922 = vmatpush1.msra.mxu0 %v2024
        %2923 = vmatprep.subr.mxu0 %v2021
        %2924 = vmatpush1.msra.mxu0 %v2020
        %2925 = vmatprep.subr.mxu0 %v2017
        %2926 = vmatpush1.msra.mxu0 %v2016
        %2927 = vmatprep.subr.mxu0 %v2013
        %2928 = vmatpush1.msra.mxu0 %v2012
        %2929 = vmatprep.subr.mxu0 %v2009
        %2930 = vmatpush1.msra.mxu0 %v2008
        %2931 = vmatprep.subr.mxu0 %v2005
        %2932 = vmatpush1.msra.mxu0 %v2004
        %2933 = vmatprep.subr.mxu0 %v2001
        %2934 = vmatpush1.msra.mxu0 %v2000
        %2935 = vmatprep.subr.mxu0 %v1997
        %2936 = vmatpush1.msra.mxu0 %v1996
        %2937 = vmatprep.subr.mxu0 %v1993
        %2938 = vmatpush1.msra.mxu0 %v1992
        %2939 = vmatprep.subr.mxu0 %v1989
        %2940 = vmatpush1.msra.mxu0 %v1988
        %2941 = vmatprep.subr.mxu0 %v1985
        %2942 = vmatpush1.msra.mxu0 %v1984
        %2943 = vmatprep.subr.mxu0 %v1981
        %2944 = vmatpush1.msra.mxu0 %v1980
        %2945 = vmatprep.subr.mxu0 %v1977
        %2946 = vmatpush1.msra.mxu0 %v1976
        %2947 = vmatprep.subr.mxu0 %v1973
        %2948 = vmatpush1.msra.mxu0 %v1972
        %2949 = vmatprep.subr.mxu0 %v1969
        %2950 = vmatpush1.msra.mxu0 %v1968
        %2951 = vmatprep.subr.mxu0 0.0
        %2952 = vmatpush2.msra.mxu0 0.0
        %2953 = vmatprep.subr.mxu0 0.0
        %2954 = vmatpush2.msra.mxu0 0.0
        %2955 = vmatprep.subr.mxu0 0.0
        %2956 = vmatpush2.msra.mxu0 0.0
        %2957 = vmatprep.subr.mxu0 0.0
        %2958 = vmatpush2.msra.mxu0 0.0
        %2959 = vmatprep.subr.mxu0 0.0
        %2960 = vmatpush2.msra.mxu0 0.0
        %2961 = vmatprep.subr.mxu0 0.0
        %2962 = vmatpush2.msra.mxu0 0.0
        %2963 = vmatprep.subr.mxu0 0.0
        %2964 = vmatpush2.msra.mxu0 0.0
        %2965 = vmatprep.subr.mxu0 0.0
        %2966 = vmatpush2.msra.mxu0 0.0
        %2967 = vmatprep.subr.mxu0 0.0
        %2968 = vmatpush2.msra.mxu0 0.0
        %2969 = vmatprep.subr.mxu0 0.0
        %2970 = vmatpush2.msra.mxu0 0.0
        %2971 = vmatprep.subr.mxu0 0.0
        %2972 = vmatpush2.msra.mxu0 0.0
        %2973 = vmatprep.subr.mxu0 0.0
        %2974 = vmatpush2.msra.mxu0 0.0
        %2975 = vmatprep.subr.mxu0 %v2045
        %2976 = vmatpush2.msra.mxu0 %v2044
        %2977 = vmatprep.subr.mxu0 %v2041
        %2978 = vmatpush2.msra.mxu0 %v2040
        %2979 = vmatprep.subr.mxu0 %v2037
        %2980 = vmatpush2.msra.mxu0 %v2036
        %2981 = vmatprep.subr.mxu0 %v2033
        %2982 = vmatpush2.msra.mxu0 %v2032
        %2983 = vmatprep.mubr.f32.mxu0 %v2068
        %2984 = vmatmul.mubr.f32.gmra.mxu0 %v1306
        %v2985 = vpop.f32.mrf.mxu0
        %v2986 = vadd.f32 %v2909, %v2985
        %v2987 = vpop.f32.mrf.mxu0
        %v2988 = vadd.f32 %v2911, %v2987
        %2989 = vmatprep.mubr.f32.mxu0 %v2070
        %2990 = vmatmul.mubr.f32.gmra.mxu0 %v1313
        %v2991 = vpop.f32.mrf.mxu0
        %v2992 = vadd.f32 %v2915, %v2991
        %v2993 = vpop.f32.mrf.mxu0
        %v2994 = vadd.f32 %v2917, %v2993
        %2995 = vdwg.mxu0
        %v2996 = vmax.f32 %v2524, 0.0
        %v2997 = vmax.f32 %v2526, 0.0
        %v2998 = vmax.f32 %v2986, 0.0
        %v2999 = vmax.f32 %v2988, 0.0
        %v3000 = vmax.f32 %v2530, 0.0
        %v3001 = vmax.f32 %v2532, 0.0
        %v3002 = vmax.f32 %v2992, 0.0
        %v3003 = vmax.f32 %v2994, 0.0
        %3006 = vrot.lane.b32.xlu0 %v2996, 96
        %v3007 = vpop.permute.xlu0 %3006
        %3008 = vrot.lane.b32.xlu0 %v3000, 96
        %v3009 = vpop.permute.xlu0 %3008
        %v3012 = vmax.f32 %v2996, %v3007
        %v3013 = vmax.f32 %v3000, %v3009
        %3016 = vrot.lane.b32.xlu0 %v2997, 96
        %v3017 = vpop.permute.xlu0 %3016
        %3018 = vrot.lane.b32.xlu0 %v3001, 96
        %v3019 = vpop.permute.xlu0 %3018
        %v3022 = vmax.f32 %v2997, %v3017
        %v3023 = vmax.f32 %v3001, %v3019
        %3026 = vrot.lane.b32.xlu0 %v2998, 96
        %v3027 = vpop.permute.xlu0 %3026
        %3028 = vrot.lane.b32.xlu0 %v3002, 96
        %v3029 = vpop.permute.xlu0 %3028
        %v3032 = vmax.f32 %v2998, %v3027
        %v3033 = vmax.f32 %v3002, %v3029
        %3036 = vrot.lane.b32.xlu0 %v2999, 96
        %v3037 = vpop.permute.xlu0 %3036
        %3038 = vrot.lane.b32.xlu0 %v3003, 96
        %v3039 = vpop.permute.xlu0 %3038
        %v3042 = vmax.f32 %v2999, %v3037
        %v3043 = vmax.f32 %v3003, %v3039
        %3046 = vrot.lane.b32.xlu0 %v3012, 96
        %v3047 = vpop.permute.xlu0 %3046
        %3048 = vrot.lane.b32.xlu0 %v3013, 96
        %v3049 = vpop.permute.xlu0 %3048
        %3054 = vrot.lane.b32.xlu0 %v3022, 64
        %v3055 = vpop.permute.xlu0 %3054
        %3056 = vrot.lane.b32.xlu0 %v3023, 64
        %v3057 = vpop.permute.xlu0 %3056
        %3060 = vrot.lane.b32.xlu0 %v3022, 32
        %v3061 = vpop.permute.xlu0 %3060
        %3062 = vrot.lane.b32.xlu0 %v3023, 32
        %v3063 = vpop.permute.xlu0 %3062
        %3068 = vrot.lane.b32.xlu0 %v3032, 96
        %v3069 = vpop.permute.xlu0 %3068
        %3070 = vrot.lane.b32.xlu0 %v3033, 96
        %v3071 = vpop.permute.xlu0 %3070
        %3076 = vrot.lane.b32.xlu0 %v3042, 64
        %v3077 = vpop.permute.xlu0 %3076
        %3078 = vrot.lane.b32.xlu0 %v3043, 64
        %v3079 = vpop.permute.xlu0 %3078
        %v3082 = vsel %vm276, %v3012, %v3047
        %v3083 = vsel %vm276, %v3013, %v3049
        %v3084 = vsel %vm379, %v3082, %v3055
        %v3085 = vsel %vm379, %v3083, %v3057
        %v3086 = vsel %vm384, %v3084, %v3061
        %v3087 = vsel %vm384, %v3085, %v3063
        %v3088 = vsel %vm276, %v3032, %v3069
        %v3089 = vsel %vm276, %v3033, %v3071
        %v3090 = vsel %vm379, %v3088, %v3077
        %v3091 = vsel %vm379, %v3089, %v3079
        %v3094 = vrot.slane %v3086, 1
        %v3095 = vrot.slane %v3090, 1
        %v3098 = vmax.f32 %v3086, %v3094
        %v3099 = vmax.f32 %v3090, %v3095
        %v3102 = vrot.slane %v3087, 1
        %v3103 = vrot.slane %v3091, 1
        %v3106 = vmax.f32 %v3087, %v3102
        %v3107 = vmax.f32 %v3091, %v3103
        %v3110 = vrot.slane %v3098, 1
        %v3111 = vrot.slane %v3099, 1
        %v3114 = vrot.slane %v3098, 2
        %v3115 = vrot.slane %v3099, 2
        %v3118 = vrot.slane %v3098, 3
        %v3119 = vrot.slane %v3099, 3
        %v3124 = vrot.slane %v3106, 4
        %v3125 = vrot.slane %v3107, 4
        %v3128 = vrot.slane %v3106, 5
        %v3129 = vrot.slane %v3107, 5
        %v3132 = vrot.slane %v3106, 6
        %v3133 = vrot.slane %v3107, 6
        %v3136 = vsel %vm1077, %v3098, %v3110
        %v3137 = vsel %vm1077, %v3099, %v3111
        %v3138 = vsel %vm1080, %v3136, %v3114
        %v3139 = vsel %vm1080, %v3137, %v3115
        %v3140 = vsel %vm1083, %v3138, %v3118
        %v3141 = vsel %vm1083, %v3139, %v3119
        %v3142 = vsel %vm1086, %v3140, %v3124
        %v3143 = vsel %vm1086, %v3141, %v3125
        %v3144 = vsel %vm1089, %v3142, %v3128
        %v3145 = vsel %vm1089, %v3143, %v3129
        %v3146 = vsel %vm1092, %v3144, %v3132
        %v3147 = vsel %vm1092, %v3145, %v3133
        %v3150 = vrot.slane %v3146, 1
        %v3151 = vrot.slane %v3147, 1
        %3152 = vrot.lane.b32.xlu0 %v3150, 96
        %v3153 = vpop.permute.xlu0 %3152
        %3154 = vrot.lane.b32.xlu0 %v3151, 96
        %v3155 = vpop.permute.xlu0 %3154
        %v3156 = vsel %vm384, %v3153, %v3155
        %v3160 = vrot.slane %v3146, 2
        %v3161 = vrot.slane %v3147, 2
        %3162 = vrot.lane.b32.xlu0 %v3160, 64
        %v3163 = vpop.permute.xlu0 %3162
        %3164 = vrot.lane.b32.xlu0 %v3161, 64
        %v3165 = vpop.permute.xlu0 %3164
        %v3166 = vsel %vm379, %v3163, %v3165
        %v3170 = vrot.slane %v3146, 3
        %v3171 = vrot.slane %v3147, 3
        %3172 = vrot.lane.b32.xlu0 %v3170, 32
        %v3173 = vpop.permute.xlu0 %3172
        %3174 = vrot.lane.b32.xlu0 %v3171, 32
        %v3175 = vpop.permute.xlu0 %3174
        %v3176 = vsel %vm276, %v3173, %v3175
        %v3179 = vrot.slane %v3146, 4
        %v3180 = vrot.slane %v3147, 4
        %v3183 = vrot.slane %v3146, 5
        %v3184 = vrot.slane %v3147, 5
        %3185 = vrot.lane.b32.xlu0 %v3183, 96
        %v3186 = vpop.permute.xlu0 %3185
        %3187 = vrot.lane.b32.xlu0 %v3184, 96
        %v3188 = vpop.permute.xlu0 %3187
        %v3189 = vsel %vm384, %v3186, %v3188
        %v3193 = vrot.slane %v3146, 6
        %v3194 = vrot.slane %v3147, 6
        %3195 = vrot.lane.b32.xlu0 %v3193, 64
        %v3196 = vpop.permute.xlu0 %3195
        %3197 = vrot.lane.b32.xlu0 %v3194, 64
        %v3198 = vpop.permute.xlu0 %3197
        %v3199 = vsel %vm379, %v3196, %v3198
        %v3202 = vsel %vm384, %v3147, %v3153
        %v3203 = vsel %vm379, %v3155, %v3163
        %v3204 = vsel %vm276, %v3165, %v3173
        %v3205 = vsel %vm384, %v3180, %v3186
        %v3206 = vsel %vm379, %v3188, %v3196
        %v3207 = vld [vmem:[%s5] sm:$0xff]
        %v3208 = vld [vmem:[%s5 + $0x8] sm:$0xff]
        %v3209 = vld [vmem:[%s5 + $0x10] sm:$0xff]
        %v3210 = vld [vmem:[%s5 + $0x18] sm:$0xff]
        %v3211 = vld [vmem:[%s5 + $0x20] sm:$0xff]
        %v3212 = vld [vmem:[%s5 + $0x28] sm:$0xff]
        %v3213 = vld [vmem:[%s5 + $0x30] sm:$0xff]
        %v3214 = vld [vmem:[%s5 + $0x38] sm:$0xff]
        %v3215 = vld [vmem:[%s5 + $0x40] sm:$0xff]
        %v3216 = vld [vmem:[%s5 + $0x48] sm:$0xff]
        %v3217 = vld [vmem:[%s5 + $0x50] sm:$0xff]
        %v3218 = vld [vmem:[%s5 + $0x58] sm:$0xff]
        %v3219 = vld [vmem:[%s5 + $0x60] sm:$0xff]
        %v3220 = vld [vmem:[%s5 + $0x68] sm:$0xff]
        %v3221 = vld [vmem:[%s5 + $0x70] sm:$0xff]
        %v3222 = vld [vmem:[%s5 + $0x78] sm:$0xff]
        %v3223 = vld [vmem:[%s5 + $0x80] sm:$0xff]
        %v3224 = vld [vmem:[%s5 + $0x88] sm:$0xff]
        %v3225 = vld [vmem:[%s5 + $0x90] sm:$0xff]
        %v3226 = vld [vmem:[%s5 + $0x98] sm:$0xff]
        %v3227 = vld [vmem:[%s5 + $0xa0] sm:$0xff]
        %v3228 = vld [vmem:[%s5 + $0xa8] sm:$0xff]
        %v3229 = vld [vmem:[%s5 + $0xb0] sm:$0xff]
        %v3230 = vld [vmem:[%s5 + $0xb8] sm:$0xff]
        %v3231 = vld [vmem:[%s5 + $0xc0] sm:$0xff]
        %v3232 = vld [vmem:[%s5 + $0xc8] sm:$0xff]
        %v3233 = vld [vmem:[%s5 + $0xd0] sm:$0xff]
        %v3234 = vld [vmem:[%s5 + $0xd8] sm:$0xff]
        %v3235 = vld [vmem:[%s5 + $0xe0] sm:$0xff]
        %v3236 = vld [vmem:[%s5 + $0xe8] sm:$0xff]
        %v3237 = vld [vmem:[%s5 + $0xf0] sm:$0xff]
        %v3238 = vld [vmem:[%s5 + $0xf8] sm:$0xff]
        %v3239 = vld [vmem:[%s5 + $0x100] sm:$0xff]
        %v3240 = vld [vmem:[%s5 + $0x108] sm:$0xff]
        %v3241 = vld [vmem:[%s5 + $0x110] sm:$0xff]
        %v3242 = vld [vmem:[%s5 + $0x118] sm:$0xff]
        %v3243 = vld [vmem:[%s5 + $0x120] sm:$0xff]
        %v3244 = vld [vmem:[%s5 + $0x128] sm:$0xff]
        %v3245 = vld [vmem:[%s5 + $0x130] sm:$0xff]
        %v3246 = vld [vmem:[%s5 + $0x138] sm:$0xff]
        %v3247 = vld [vmem:[%s5 + $0x140] sm:$0xff]
        %v3248 = vld [vmem:[%s5 + $0x148] sm:$0xff]
        %v3249 = vld [vmem:[%s5 + $0x150] sm:$0xff]
        %v3250 = vld [vmem:[%s5 + $0x158] sm:$0xff]
        %v3251 = vld [vmem:[%s5 + $0x160] sm:$0xff]
        %v3252 = vld [vmem:[%s5 + $0x168] sm:$0xff]
        %v3253 = vld [vmem:[%s5 + $0x170] sm:$0xff]
        %v3254 = vld [vmem:[%s5 + $0x178] sm:$0xff]
        %v3255 = vld [vmem:[%s5 + $0x180] sm:$0xff]
        %v3256 = vld [vmem:[%s5 + $0x188] sm:$0xff]
        %v3257 = vld [vmem:[%s5 + $0x190] sm:$0xff]
        %v3258 = vld [vmem:[%s5 + $0x198] sm:$0xff]
        %v3259 = vld [vmem:[%s5 + $0x1a0] sm:$0xff]
        %v3260 = vld [vmem:[%s5 + $0x1a8] sm:$0xff]
        %v3261 = vld [vmem:[%s5 + $0x1b0] sm:$0xff]
        %v3262 = vld [vmem:[%s5 + $0x1b8] sm:$0xff]
        %v3263 = vld [vmem:[%s5 + $0x1c0] sm:$0xff]
        %v3264 = vld [vmem:[%s5 + $0x1c8] sm:$0xff]
        %v3265 = vld [vmem:[%s5 + $0x1d0] sm:$0xff]
        %v3266 = vld [vmem:[%s5 + $0x1d8] sm:$0xff]
        %v3267 = vld [vmem:[%s5 + $0x1e0] sm:$0xff]
        %v3268 = vld [vmem:[%s5 + $0x1e8] sm:$0xff]
        %v3269 = vld [vmem:[%s5 + $0x1f0] sm:$0xff]
        %v3270 = vld [vmem:[%s5 + $0x1f8] sm:$0xff]
        %v3271 = vld [vmem:[%s5 + $0x200] sm:$0xff]
        %v3272 = vld [vmem:[%s5 + $0x208] sm:$0xff]
        %v3273 = vld [vmem:[%s5 + $0x210] sm:$0xff]
        %v3274 = vld [vmem:[%s5 + $0x218] sm:$0xff]
        %v3275 = vld [vmem:[%s5 + $0x220] sm:$0xff]
        %v3276 = vld [vmem:[%s5 + $0x228] sm:$0xff]
        %v3277 = vld [vmem:[%s5 + $0x230] sm:$0xff]
        %v3278 = vld [vmem:[%s5 + $0x238] sm:$0xff]
        %v3279 = vld [vmem:[%s5 + $0x240] sm:$0xff]
        %v3280 = vld [vmem:[%s5 + $0x248] sm:$0xff]
        %v3281 = vld [vmem:[%s5 + $0x250] sm:$0xff]
        %v3282 = vld [vmem:[%s5 + $0x258] sm:$0xff]
        %v3283 = vld [vmem:[%s5 + $0x260] sm:$0xff]
        %v3284 = vld [vmem:[%s5 + $0x268] sm:$0xff]
        %v3285 = vld [vmem:[%s5 + $0x270] sm:$0xff]
        %v3286 = vld [vmem:[%s5 + $0x278] sm:$0xff]
        %v3287 = vld [vmem:[%s5 + $0x280] sm:$0xff]
        %v3288 = vld [vmem:[%s5 + $0x288] sm:$0xff]
        %v3289 = vld [vmem:[%s5 + $0x290] sm:$0xff]
        %v3290 = vld [vmem:[%s5 + $0x298] sm:$0xff]
        %v3291 = vld [vmem:[%s5 + $0x2a0] sm:$0xff]
        %v3292 = vld [vmem:[%s5 + $0x2a8] sm:$0xff]
        %v3293 = vld [vmem:[%s5 + $0x2b0] sm:$0xff]
        %v3294 = vld [vmem:[%s5 + $0x2b8] sm:$0xff]
        %v3295 = vld [vmem:[%s5 + $0x2c0] sm:$0xff]
        %v3296 = vld [vmem:[%s5 + $0x2c8] sm:$0xff]
        %v3297 = vld [vmem:[%s5 + $0x2d0] sm:$0xff]
        %v3298 = vld [vmem:[%s5 + $0x2d8] sm:$0xff]
        %v3299 = vld [vmem:[%s5 + $0x2e0] sm:$0xff]
        %v3300 = vld [vmem:[%s5 + $0x2e8] sm:$0xff]
        %v3301 = vld [vmem:[%s5 + $0x2f0] sm:$0xff]
        %v3302 = vld [vmem:[%s5 + $0x2f8] sm:$0xff]
        %v3303 = vld [vmem:[%s5 + $0x300] sm:$0xff]
        %v3304 = vld [vmem:[%s5 + $0x308] sm:$0xff]
        %v3305 = vld [vmem:[%s5 + $0x310] sm:$0xff]
        %v3306 = vld [vmem:[%s5 + $0x318] sm:$0xff]
        %v3307 = vld [vmem:[%s5 + $0x320] sm:$0xff]
        %v3308 = vld [vmem:[%s5 + $0x328] sm:$0xff]
        %v3309 = vld [vmem:[%s5 + $0x330] sm:$0xff]
        %v3310 = vld [vmem:[%s5 + $0x338] sm:$0xff]
        %v3311 = vld [vmem:[%s5 + $0x340] sm:$0xff]
        %v3312 = vld [vmem:[%s5 + $0x348] sm:$0xff]
        %v3313 = vld [vmem:[%s5 + $0x350] sm:$0xff]
        %v3314 = vld [vmem:[%s5 + $0x358] sm:$0xff]
        %v3315 = vld [vmem:[%s5 + $0x360] sm:$0xff]
        %v3316 = vld [vmem:[%s5 + $0x368] sm:$0xff]
        %v3317 = vld [vmem:[%s5 + $0x370] sm:$0xff]
        %v3318 = vld [vmem:[%s5 + $0x378] sm:$0xff]
        %v3319 = vld [vmem:[%s5 + $0x380] sm:$0xff]
        %v3320 = vld [vmem:[%s5 + $0x388] sm:$0xff]
        %v3321 = vld [vmem:[%s5 + $0x390] sm:$0xff]
        %v3322 = vld [vmem:[%s5 + $0x398] sm:$0xff]
        %v3323 = vld [vmem:[%s5 + $0x3a0] sm:$0xff]
        %v3324 = vld [vmem:[%s5 + $0x3a8] sm:$0xff]
        %v3325 = vld [vmem:[%s5 + $0x3b0] sm:$0xff]
        %v3326 = vld [vmem:[%s5 + $0x3b8] sm:$0xff]
        %v3327 = vld [vmem:[%s5 + $0x3c0] sm:$0xff]
        %v3328 = vld [vmem:[%s5 + $0x3c8] sm:$0xff]
        %v3329 = vld [vmem:[%s5 + $0x3d0] sm:$0xff]
        %v3330 = vld [vmem:[%s5 + $0x3d8] sm:$0xff]
        %v3331 = vld [vmem:[%s5 + $0x3e0] sm:$0xff]
        %v3332 = vld [vmem:[%s5 + $0x3e8] sm:$0xff]
        %v3333 = vld [vmem:[%s5 + $0x3f0] sm:$0xff]
        %v3334 = vld [vmem:[%s5 + $0x3f8] sm:$0xff]
        %v3335 = vld [vmem:[%s5 + $0x400] sm:$0xff]
        %v3336 = vld [vmem:[%s5 + $0x408] sm:$0xff]
        %v3337 = vld [vmem:[%s5 + $0x410] sm:$0xff]
        %v3338 = vld [vmem:[%s5 + $0x418] sm:$0xff]
        %v3339 = vld [vmem:[%s5 + $0x420] sm:$0xff]
        %v3340 = vld [vmem:[%s5 + $0x428] sm:$0xff]
        %v3341 = vld [vmem:[%s5 + $0x430] sm:$0xff]
        %v3342 = vld [vmem:[%s5 + $0x438] sm:$0xff]
        %v3343 = vld [vmem:[%s5 + $0x440] sm:$0xff]
        %v3344 = vld [vmem:[%s5 + $0x448] sm:$0xff]
        %v3345 = vld [vmem:[%s5 + $0x450] sm:$0xff]
        %v3346 = vld [vmem:[%s5 + $0x458] sm:$0xff]
        %v3347 = vld [vmem:[%s5 + $0x460] sm:$0xff]
        %v3348 = vld [vmem:[%s5 + $0x468] sm:$0xff]
        %v3349 = vld [vmem:[%s5 + $0x470] sm:$0xff]
        %v3350 = vld [vmem:[%s5 + $0x478] sm:$0xff]
        %v3351 = vld [vmem:[%s5 + $0x480] sm:$0xff]
        %v3352 = vld [vmem:[%s5 + $0x488] sm:$0xff]
        %v3353 = vld [vmem:[%s5 + $0x490] sm:$0xff]
        %v3354 = vld [vmem:[%s5 + $0x498] sm:$0xff]
        %v3355 = vld [vmem:[%s5 + $0x4a0] sm:$0xff]
        %v3356 = vld [vmem:[%s5 + $0x4a8] sm:$0xff]
        %v3357 = vld [vmem:[%s5 + $0x4b0] sm:$0xff]
        %v3358 = vld [vmem:[%s5 + $0x4b8] sm:$0xff]
        %v3359 = vld [vmem:[%s5 + $0x4c0] sm:$0xff]
        %v3360 = vld [vmem:[%s5 + $0x4c8] sm:$0xff]
        %v3361 = vld [vmem:[%s5 + $0x4d0] sm:$0xff]
        %v3362 = vld [vmem:[%s5 + $0x4d8] sm:$0xff]
        %v3363 = vld [vmem:[%s5 + $0x4e0] sm:$0xff]
        %v3364 = vld [vmem:[%s5 + $0x4e8] sm:$0xff]
        %v3365 = vld [vmem:[%s5 + $0x4f0] sm:$0xff]
        %v3366 = vld [vmem:[%s5 + $0x4f8] sm:$0xff]
        %v3367 = vld [vmem:[%s5 + $0x500] sm:$0xff]
        %v3368 = vld [vmem:[%s5 + $0x508] sm:$0xff]
        %v3369 = vld [vmem:[%s5 + $0x510] sm:$0xff]
        %v3370 = vld [vmem:[%s5 + $0x518] sm:$0xff]
        %v3371 = vld [vmem:[%s5 + $0x520] sm:$0xff]
        %v3372 = vld [vmem:[%s5 + $0x528] sm:$0xff]
        %v3373 = vld [vmem:[%s5 + $0x530] sm:$0xff]
        %v3374 = vld [vmem:[%s5 + $0x538] sm:$0xff]
        %v3375 = vld [vmem:[%s5 + $0x540] sm:$0xff]
        %v3376 = vld [vmem:[%s5 + $0x548] sm:$0xff]
        %v3377 = vld [vmem:[%s5 + $0x550] sm:$0xff]
        %v3378 = vld [vmem:[%s5 + $0x558] sm:$0xff]
        %v3379 = vld [vmem:[%s5 + $0x560] sm:$0xff]
        %v3380 = vld [vmem:[%s5 + $0x568] sm:$0xff]
        %v3381 = vld [vmem:[%s5 + $0x570] sm:$0xff]
        %v3382 = vld [vmem:[%s5 + $0x578] sm:$0xff]
        %v3383 = vld [vmem:[%s5 + $0x580] sm:$0xff]
        %v3384 = vld [vmem:[%s5 + $0x588] sm:$0xff]
        %v3385 = vld [vmem:[%s5 + $0x590] sm:$0xff]
        %v3386 = vld [vmem:[%s5 + $0x598] sm:$0xff]
        %v3387 = vld [vmem:[%s5 + $0x5a0] sm:$0xff]
        %v3388 = vld [vmem:[%s5 + $0x5a8] sm:$0xff]
        %v3389 = vld [vmem:[%s5 + $0x5b0] sm:$0xff]
        %v3390 = vld [vmem:[%s5 + $0x5b8] sm:$0xff]
        %v3391 = vld [vmem:[%s5 + $0x5c0] sm:$0xff]
        %v3392 = vld [vmem:[%s5 + $0x5c8] sm:$0xff]
        %v3393 = vld [vmem:[%s5 + $0x5d0] sm:$0xff]
        %v3394 = vld [vmem:[%s5 + $0x5d8] sm:$0xff]
        %v3395 = vld [vmem:[%s5 + $0x5e0] sm:$0xff]
        %v3396 = vld [vmem:[%s5 + $0x5e8] sm:$0xff]
        %v3397 = vld [vmem:[%s5 + $0x5f0] sm:$0xff]
        %v3398 = vld [vmem:[%s5 + $0x5f8] sm:$0xff]
        %v3399 = vld [vmem:[%s5 + $0x600] sm:$0xff]
        %v3400 = vld [vmem:[%s5 + $0x608] sm:$0xff]
        %v3401 = vld [vmem:[%s5 + $0x610] sm:$0xff]
        %v3402 = vld [vmem:[%s5 + $0x618] sm:$0xff]
        %v3403 = vld [vmem:[%s6] sm:$0x1]
        %v3404 = vsel %vm276, %v3198, 0
        %3406 = vmatprep.subr.mxu0 0.0
        %3407 = vmatpush1.msra.mxu0 %v3222
        %3408 = vmatprep.subr.mxu0 0.0
        %3409 = vmatpush1.msra.mxu0 %v3221
        %3410 = vmatprep.subr.mxu0 0.0
        %3411 = vmatpush1.msra.mxu0 %v3220
        %3412 = vmatprep.subr.mxu0 0.0
        %3413 = vmatpush1.msra.mxu0 %v3219
        %3414 = vmatprep.subr.mxu0 0.0
        %3415 = vmatpush1.msra.mxu0 %v3218
        %3416 = vmatprep.subr.mxu0 0.0
        %3417 = vmatpush1.msra.mxu0 %v3217
        %3418 = vmatprep.subr.mxu0 0.0
        %3419 = vmatpush1.msra.mxu0 %v3216
        %3420 = vmatprep.subr.mxu0 0.0
        %3421 = vmatpush1.msra.mxu0 %v3215
        %3422 = vmatprep.subr.mxu0 0.0
        %3423 = vmatpush1.msra.mxu0 %v3214
        %3424 = vmatprep.subr.mxu0 0.0
        %3425 = vmatpush1.msra.mxu0 %v3213
        %3426 = vmatprep.subr.mxu0 0.0
        %3427 = vmatpush1.msra.mxu0 %v3212
        %3428 = vmatprep.subr.mxu0 0.0
        %3429 = vmatpush1.msra.mxu0 %v3211
        %3430 = vmatprep.subr.mxu0 0.0
        %3431 = vmatpush1.msra.mxu0 %v3210
        %3432 = vmatprep.subr.mxu0 0.0
        %3433 = vmatpush1.msra.mxu0 %v3209
        %3434 = vmatprep.subr.mxu0 0.0
        %3435 = vmatpush1.msra.mxu0 %v3208
        %3436 = vmatprep.subr.mxu0 0.0
        %3437 = vmatpush1.msra.mxu0 %v3207
        %3438 = vmatprep.subr.mxu0 0.0
        %3439 = vmatpush2.msra.mxu0 %v3238
        %3440 = vmatprep.subr.mxu0 0.0
        %3441 = vmatpush2.msra.mxu0 %v3237
        %3442 = vmatprep.subr.mxu0 0.0
        %3443 = vmatpush2.msra.mxu0 %v3236
        %3444 = vmatprep.subr.mxu0 0.0
        %3445 = vmatpush2.msra.mxu0 %v3235
        %3446 = vmatprep.subr.mxu0 0.0
        %3447 = vmatpush2.msra.mxu0 %v3234
        %3448 = vmatprep.subr.mxu0 0.0
        %3449 = vmatpush2.msra.mxu0 %v3233
        %3450 = vmatprep.subr.mxu0 0.0
        %3451 = vmatpush2.msra.mxu0 %v3232
        %3452 = vmatprep.subr.mxu0 0.0
        %3453 = vmatpush2.msra.mxu0 %v3231
        %3454 = vmatprep.subr.mxu0 0.0
        %3455 = vmatpush2.msra.mxu0 %v3230
        %3456 = vmatprep.subr.mxu0 0.0
        %3457 = vmatpush2.msra.mxu0 %v3229
        %3458 = vmatprep.subr.mxu0 0.0
        %3459 = vmatpush2.msra.mxu0 %v3228
        %3460 = vmatprep.subr.mxu0 0.0
        %3461 = vmatpush2.msra.mxu0 %v3227
        %3462 = vmatprep.subr.mxu0 0.0
        %3463 = vmatpush2.msra.mxu0 %v3226
        %3464 = vmatprep.subr.mxu0 0.0
        %3465 = vmatpush2.msra.mxu0 %v3225
        %3466 = vmatprep.subr.mxu0 0.0
        %3467 = vmatpush2.msra.mxu0 %v3224
        %3468 = vmatprep.subr.mxu0 0.0
        %3469 = vmatpush2.msra.mxu0 %v3223
        %3470 = vmatprep.mubr.f32.mxu0 %v3202
        %3471 = vmatmul.mubr.f32.gmra.mxu0 %v3146
        %v3472 = vpop.f32.mrf.mxu0
        %v3473 = vadd.f32 %v3403, %v3472
        %v3474 = vpop.f32.mrf.mxu0
        %3475 = vdwg.mxu0
        %3476 = vmatprep.subr.mxu0 0.0
        %3477 = vmatpush1.msra.mxu0 %v3254
        %3478 = vmatprep.subr.mxu0 0.0
        %3479 = vmatpush1.msra.mxu0 %v3253
        %3480 = vmatprep.subr.mxu0 0.0
        %3481 = vmatpush1.msra.mxu0 %v3252
        %3482 = vmatprep.subr.mxu0 0.0
        %3483 = vmatpush1.msra.mxu0 %v3251
        %3484 = vmatprep.subr.mxu0 0.0
        %3485 = vmatpush1.msra.mxu0 %v3250
        %3486 = vmatprep.subr.mxu0 0.0
        %3487 = vmatpush1.msra.mxu0 %v3249
        %3488 = vmatprep.subr.mxu0 0.0
        %3489 = vmatpush1.msra.mxu0 %v3248
        %3490 = vmatprep.subr.mxu0 0.0
        %3491 = vmatpush1.msra.mxu0 %v3247
        %3492 = vmatprep.subr.mxu0 0.0
        %3493 = vmatpush1.msra.mxu0 %v3246
        %3494 = vmatprep.subr.mxu0 0.0
        %3495 = vmatpush1.msra.mxu0 %v3245
        %3496 = vmatprep.subr.mxu0 0.0
        %3497 = vmatpush1.msra.mxu0 %v3244
        %3498 = vmatprep.subr.mxu0 0.0
        %3499 = vmatpush1.msra.mxu0 %v3243
        %3500 = vmatprep.subr.mxu0 0.0
        %3501 = vmatpush1.msra.mxu0 %v3242
        %3502 = vmatprep.subr.mxu0 0.0
        %3503 = vmatpush1.msra.mxu0 %v3241
        %3504 = vmatprep.subr.mxu0 0.0
        %3505 = vmatpush1.msra.mxu0 %v3240
        %3506 = vmatprep.subr.mxu0 0.0
        %3507 = vmatpush1.msra.mxu0 %v3239
        %3508 = vmatprep.subr.mxu0 0.0
        %3509 = vmatpush2.msra.mxu0 %v3270
        %3510 = vmatprep.subr.mxu0 0.0
        %3511 = vmatpush2.msra.mxu0 %v3269
        %3512 = vmatprep.subr.mxu0 0.0
        %3513 = vmatpush2.msra.mxu0 %v3268
        %3514 = vmatprep.subr.mxu0 0.0
        %3515 = vmatpush2.msra.mxu0 %v3267
        %3516 = vmatprep.subr.mxu0 0.0
        %3517 = vmatpush2.msra.mxu0 %v3266
        %3518 = vmatprep.subr.mxu0 0.0
        %3519 = vmatpush2.msra.mxu0 %v3265
        %3520 = vmatprep.subr.mxu0 0.0
        %3521 = vmatpush2.msra.mxu0 %v3264
        %3522 = vmatprep.subr.mxu0 0.0
        %3523 = vmatpush2.msra.mxu0 %v3263
        %3524 = vmatprep.subr.mxu0 0.0
        %3525 = vmatpush2.msra.mxu0 %v3262
        %3526 = vmatprep.subr.mxu0 0.0
        %3527 = vmatpush2.msra.mxu0 %v3261
        %3528 = vmatprep.subr.mxu0 0.0
        %3529 = vmatpush2.msra.mxu0 %v3260
        %3530 = vmatprep.subr.mxu0 0.0
        %3531 = vmatpush2.msra.mxu0 %v3259
        %3532 = vmatprep.subr.mxu0 0.0
        %3533 = vmatpush2.msra.mxu0 %v3258
        %3534 = vmatprep.subr.mxu0 0.0
        %3535 = vmatpush2.msra.mxu0 %v3257
        %3536 = vmatprep.subr.mxu0 0.0
        %3537 = vmatpush2.msra.mxu0 %v3256
        %3538 = vmatprep.subr.mxu0 0.0
        %3539 = vmatpush2.msra.mxu0 %v3255
        %3540 = vmatprep.mubr.f32.mxu0 %v3203
        %3541 = vmatmul.mubr.f32.gmra.mxu0 %v3156
        %v3542 = vpop.f32.mrf.mxu0
        %v3543 = vadd.f32 %v3473, %v3542
        %v3544 = vpop.f32.mrf.mxu0
        %3545 = vdwg.mxu0
        %3546 = vmatprep.subr.mxu0 0.0
        %3547 = vmatpush1.msra.mxu0 %v3286
        %3548 = vmatprep.subr.mxu0 0.0
        %3549 = vmatpush1.msra.mxu0 %v3285
        %3550 = vmatprep.subr.mxu0 0.0
        %3551 = vmatpush1.msra.mxu0 %v3284
        %3552 = vmatprep.subr.mxu0 0.0
        %3553 = vmatpush1.msra.mxu0 %v3283
        %3554 = vmatprep.subr.mxu0 0.0
        %3555 = vmatpush1.msra.mxu0 %v3282
        %3556 = vmatprep.subr.mxu0 0.0
        %3557 = vmatpush1.msra.mxu0 %v3281
        %3558 = vmatprep.subr.mxu0 0.0
        %3559 = vmatpush1.msra.mxu0 %v3280
        %3560 = vmatprep.subr.mxu0 0.0
        %3561 = vmatpush1.msra.mxu0 %v3279
        %3562 = vmatprep.subr.mxu0 0.0
        %3563 = vmatpush1.msra.mxu0 %v3278
        %3564 = vmatprep.subr.mxu0 0.0
        %3565 = vmatpush1.msra.mxu0 %v3277
        %3566 = vmatprep.subr.mxu0 0.0
        %3567 = vmatpush1.msra.mxu0 %v3276
        %3568 = vmatprep.subr.mxu0 0.0
        %3569 = vmatpush1.msra.mxu0 %v3275
        %3570 = vmatprep.subr.mxu0 0.0
        %3571 = vmatpush1.msra.mxu0 %v3274
        %3572 = vmatprep.subr.mxu0 0.0
        %3573 = vmatpush1.msra.mxu0 %v3273
        %3574 = vmatprep.subr.mxu0 0.0
        %3575 = vmatpush1.msra.mxu0 %v3272
        %3576 = vmatprep.subr.mxu0 0.0
        %3577 = vmatpush1.msra.mxu0 %v3271
        %3578 = vmatprep.subr.mxu0 0.0
        %3579 = vmatpush2.msra.mxu0 %v3302
        %3580 = vmatprep.subr.mxu0 0.0
        %3581 = vmatpush2.msra.mxu0 %v3301
        %3582 = vmatprep.subr.mxu0 0.0
        %3583 = vmatpush2.msra.mxu0 %v3300
        %3584 = vmatprep.subr.mxu0 0.0
        %3585 = vmatpush2.msra.mxu0 %v3299
        %3586 = vmatprep.subr.mxu0 0.0
        %3587 = vmatpush2.msra.mxu0 %v3298
        %3588 = vmatprep.subr.mxu0 0.0
        %3589 = vmatpush2.msra.mxu0 %v3297
        %3590 = vmatprep.subr.mxu0 0.0
        %3591 = vmatpush2.msra.mxu0 %v3296
        %3592 = vmatprep.subr.mxu0 0.0
        %3593 = vmatpush2.msra.mxu0 %v3295
        %3594 = vmatprep.subr.mxu0 0.0
        %3595 = vmatpush2.msra.mxu0 %v3294
        %3596 = vmatprep.subr.mxu0 0.0
        %3597 = vmatpush2.msra.mxu0 %v3293
        %3598 = vmatprep.subr.mxu0 0.0
        %3599 = vmatpush2.msra.mxu0 %v3292
        %3600 = vmatprep.subr.mxu0 0.0
        %3601 = vmatpush2.msra.mxu0 %v3291
        %3602 = vmatprep.subr.mxu0 0.0
        %3603 = vmatpush2.msra.mxu0 %v3290
        %3604 = vmatprep.subr.mxu0 0.0
        %3605 = vmatpush2.msra.mxu0 %v3289
        %3606 = vmatprep.subr.mxu0 0.0
        %3607 = vmatpush2.msra.mxu0 %v3288
        %3608 = vmatprep.subr.mxu0 0.0
        %3609 = vmatpush2.msra.mxu0 %v3287
        %3610 = vmatprep.mubr.f32.mxu0 %v3204
        %3611 = vmatmul.mubr.f32.gmra.mxu0 %v3166
        %v3612 = vpop.f32.mrf.mxu0
        %v3613 = vadd.f32 %v3543, %v3612
        %v3614 = vpop.f32.mrf.mxu0
        %3615 = vdwg.mxu0
        %3616 = vmatprep.subr.mxu0 0.0
        %3617 = vmatpush1.msra.mxu0 %v3318
        %3618 = vmatprep.subr.mxu0 0.0
        %3619 = vmatpush1.msra.mxu0 %v3317
        %3620 = vmatprep.subr.mxu0 0.0
        %3621 = vmatpush1.msra.mxu0 %v3316
        %3622 = vmatprep.subr.mxu0 0.0
        %3623 = vmatpush1.msra.mxu0 %v3315
        %3624 = vmatprep.subr.mxu0 0.0
        %3625 = vmatpush1.msra.mxu0 %v3314
        %3626 = vmatprep.subr.mxu0 0.0
        %3627 = vmatpush1.msra.mxu0 %v3313
        %3628 = vmatprep.subr.mxu0 0.0
        %3629 = vmatpush1.msra.mxu0 %v3312
        %3630 = vmatprep.subr.mxu0 0.0
        %3631 = vmatpush1.msra.mxu0 %v3311
        %3632 = vmatprep.subr.mxu0 0.0
        %3633 = vmatpush1.msra.mxu0 %v3310
        %3634 = vmatprep.subr.mxu0 0.0
        %3635 = vmatpush1.msra.mxu0 %v3309
        %3636 = vmatprep.subr.mxu0 0.0
        %3637 = vmatpush1.msra.mxu0 %v3308
        %3638 = vmatprep.subr.mxu0 0.0
        %3639 = vmatpush1.msra.mxu0 %v3307
        %3640 = vmatprep.subr.mxu0 0.0
        %3641 = vmatpush1.msra.mxu0 %v3306
        %3642 = vmatprep.subr.mxu0 0.0
        %3643 = vmatpush1.msra.mxu0 %v3305
        %3644 = vmatprep.subr.mxu0 0.0
        %3645 = vmatpush1.msra.mxu0 %v3304
        %3646 = vmatprep.subr.mxu0 0.0
        %3647 = vmatpush1.msra.mxu0 %v3303
        %3648 = vmatprep.subr.mxu0 0.0
        %3649 = vmatpush2.msra.mxu0 %v3334
        %3650 = vmatprep.subr.mxu0 0.0
        %3651 = vmatpush2.msra.mxu0 %v3333
        %3652 = vmatprep.subr.mxu0 0.0
        %3653 = vmatpush2.msra.mxu0 %v3332
        %3654 = vmatprep.subr.mxu0 0.0
        %3655 = vmatpush2.msra.mxu0 %v3331
        %3656 = vmatprep.subr.mxu0 0.0
        %3657 = vmatpush2.msra.mxu0 %v3330
        %3658 = vmatprep.subr.mxu0 0.0
        %3659 = vmatpush2.msra.mxu0 %v3329
        %3660 = vmatprep.subr.mxu0 0.0
        %3661 = vmatpush2.msra.mxu0 %v3328
        %3662 = vmatprep.subr.mxu0 0.0
        %3663 = vmatpush2.msra.mxu0 %v3327
        %3664 = vmatprep.subr.mxu0 0.0
        %3665 = vmatpush2.msra.mxu0 %v3326
        %3666 = vmatprep.subr.mxu0 0.0
        %3667 = vmatpush2.msra.mxu0 %v3325
        %3668 = vmatprep.subr.mxu0 0.0
        %3669 = vmatpush2.msra.mxu0 %v3324
        %3670 = vmatprep.subr.mxu0 0.0
        %3671 = vmatpush2.msra.mxu0 %v3323
        %3672 = vmatprep.subr.mxu0 0.0
        %3673 = vmatpush2.msra.mxu0 %v3322
        %3674 = vmatprep.subr.mxu0 0.0
        %3675 = vmatpush2.msra.mxu0 %v3321
        %3676 = vmatprep.subr.mxu0 0.0
        %3677 = vmatpush2.msra.mxu0 %v3320
        %3678 = vmatprep.subr.mxu0 0.0
        %3679 = vmatpush2.msra.mxu0 %v3319
        %3680 = vmatprep.mubr.f32.mxu0 %v3179
        %3681 = vmatmul.mubr.f32.gmra.mxu0 %v3176
        %v3682 = vpop.f32.mrf.mxu0
        %v3683 = vadd.f32 %v3613, %v3682
        %v3684 = vpop.f32.mrf.mxu0
        %3685 = vdwg.mxu0
        %3686 = vmatprep.subr.mxu0 0.0
        %3687 = vmatpush1.msra.mxu0 %v3350
        %3688 = vmatprep.subr.mxu0 0.0
        %3689 = vmatpush1.msra.mxu0 %v3349
        %3690 = vmatprep.subr.mxu0 0.0
        %3691 = vmatpush1.msra.mxu0 %v3348
        %3692 = vmatprep.subr.mxu0 0.0
        %3693 = vmatpush1.msra.mxu0 %v3347
        %3694 = vmatprep.subr.mxu0 0.0
        %3695 = vmatpush1.msra.mxu0 %v3346
        %3696 = vmatprep.subr.mxu0 0.0
        %3697 = vmatpush1.msra.mxu0 %v3345
        %3698 = vmatprep.subr.mxu0 0.0
        %3699 = vmatpush1.msra.mxu0 %v3344
        %3700 = vmatprep.subr.mxu0 0.0
        %3701 = vmatpush1.msra.mxu0 %v3343
        %3702 = vmatprep.subr.mxu0 0.0
        %3703 = vmatpush1.msra.mxu0 %v3342
        %3704 = vmatprep.subr.mxu0 0.0
        %3705 = vmatpush1.msra.mxu0 %v3341
        %3706 = vmatprep.subr.mxu0 0.0
        %3707 = vmatpush1.msra.mxu0 %v3340
        %3708 = vmatprep.subr.mxu0 0.0
        %3709 = vmatpush1.msra.mxu0 %v3339
        %3710 = vmatprep.subr.mxu0 0.0
        %3711 = vmatpush1.msra.mxu0 %v3338
        %3712 = vmatprep.subr.mxu0 0.0
        %3713 = vmatpush1.msra.mxu0 %v3337
        %3714 = vmatprep.subr.mxu0 0.0
        %3715 = vmatpush1.msra.mxu0 %v3336
        %3716 = vmatprep.subr.mxu0 0.0
        %3717 = vmatpush1.msra.mxu0 %v3335
        %3718 = vmatprep.subr.mxu0 0.0
        %3719 = vmatpush2.msra.mxu0 %v3366
        %3720 = vmatprep.subr.mxu0 0.0
        %3721 = vmatpush2.msra.mxu0 %v3365
        %3722 = vmatprep.subr.mxu0 0.0
        %3723 = vmatpush2.msra.mxu0 %v3364
        %3724 = vmatprep.subr.mxu0 0.0
        %3725 = vmatpush2.msra.mxu0 %v3363
        %3726 = vmatprep.subr.mxu0 0.0
        %3727 = vmatpush2.msra.mxu0 %v3362
        %3728 = vmatprep.subr.mxu0 0.0
        %3729 = vmatpush2.msra.mxu0 %v3361
        %3730 = vmatprep.subr.mxu0 0.0
        %3731 = vmatpush2.msra.mxu0 %v3360
        %3732 = vmatprep.subr.mxu0 0.0
        %3733 = vmatpush2.msra.mxu0 %v3359
        %3734 = vmatprep.subr.mxu0 0.0
        %3735 = vmatpush2.msra.mxu0 %v3358
        %3736 = vmatprep.subr.mxu0 0.0
        %3737 = vmatpush2.msra.mxu0 %v3357
        %3738 = vmatprep.subr.mxu0 0.0
        %3739 = vmatpush2.msra.mxu0 %v3356
        %3740 = vmatprep.subr.mxu0 0.0
        %3741 = vmatpush2.msra.mxu0 %v3355
        %3742 = vmatprep.subr.mxu0 0.0
        %3743 = vmatpush2.msra.mxu0 %v3354
        %3744 = vmatprep.subr.mxu0 0.0
        %3745 = vmatpush2.msra.mxu0 %v3353
        %3746 = vmatprep.subr.mxu0 0.0
        %3747 = vmatpush2.msra.mxu0 %v3352
        %3748 = vmatprep.subr.mxu0 0.0
        %3749 = vmatpush2.msra.mxu0 %v3351
        %3750 = vmatprep.mubr.f32.mxu0 %v3189
        %3751 = vmatmul.mubr.f32.gmra.mxu0 %v3205
        %v3752 = vpop.f32.mrf.mxu0
        %v3753 = vadd.f32 %v3683, %v3752
        %v3754 = vpop.f32.mrf.mxu0
        %3755 = vdwg.mxu0
        %3756 = vmatprep.subr.mxu0 0.0
        %3757 = vmatpush1.msra.mxu0 %v3382
        %3758 = vmatprep.subr.mxu0 0.0
        %3759 = vmatpush1.msra.mxu0 %v3381
        %3760 = vmatprep.subr.mxu0 0.0
        %3761 = vmatpush1.msra.mxu0 %v3380
        %3762 = vmatprep.subr.mxu0 0.0
        %3763 = vmatpush1.msra.mxu0 %v3379
        %3764 = vmatprep.subr.mxu0 0.0
        %3765 = vmatpush1.msra.mxu0 %v3378
        %3766 = vmatprep.subr.mxu0 0.0
        %3767 = vmatpush1.msra.mxu0 %v3377
        %3768 = vmatprep.subr.mxu0 0.0
        %3769 = vmatpush1.msra.mxu0 %v3376
        %3770 = vmatprep.subr.mxu0 0.0
        %3771 = vmatpush1.msra.mxu0 %v3375
        %3772 = vmatprep.subr.mxu0 0.0
        %3773 = vmatpush1.msra.mxu0 %v3374
        %3774 = vmatprep.subr.mxu0 0.0
        %3775 = vmatpush1.msra.mxu0 %v3373
        %3776 = vmatprep.subr.mxu0 0.0
        %3777 = vmatpush1.msra.mxu0 %v3372
        %3778 = vmatprep.subr.mxu0 0.0
        %3779 = vmatpush1.msra.mxu0 %v3371
        %3780 = vmatprep.subr.mxu0 0.0
        %3781 = vmatpush1.msra.mxu0 %v3370
        %3782 = vmatprep.subr.mxu0 0.0
        %3783 = vmatpush1.msra.mxu0 %v3369
        %3784 = vmatprep.subr.mxu0 0.0
        %3785 = vmatpush1.msra.mxu0 %v3368
        %3786 = vmatprep.subr.mxu0 0.0
        %3787 = vmatpush1.msra.mxu0 %v3367
        %3788 = vmatprep.subr.mxu0 0.0
        %3789 = vmatpush2.msra.mxu0 %v3398
        %3790 = vmatprep.subr.mxu0 0.0
        %3791 = vmatpush2.msra.mxu0 %v3397
        %3792 = vmatprep.subr.mxu0 0.0
        %3793 = vmatpush2.msra.mxu0 %v3396
        %3794 = vmatprep.subr.mxu0 0.0
        %3795 = vmatpush2.msra.mxu0 %v3395
        %3796 = vmatprep.subr.mxu0 0.0
        %3797 = vmatpush2.msra.mxu0 %v3394
        %3798 = vmatprep.subr.mxu0 0.0
        %3799 = vmatpush2.msra.mxu0 %v3393
        %3800 = vmatprep.subr.mxu0 0.0
        %3801 = vmatpush2.msra.mxu0 %v3392
        %3802 = vmatprep.subr.mxu0 0.0
        %3803 = vmatpush2.msra.mxu0 %v3391
        %3804 = vmatprep.subr.mxu0 0.0
        %3805 = vmatpush2.msra.mxu0 %v3390
        %3806 = vmatprep.subr.mxu0 0.0
        %3807 = vmatpush2.msra.mxu0 %v3389
        %3808 = vmatprep.subr.mxu0 0.0
        %3809 = vmatpush2.msra.mxu0 %v3388
        %3810 = vmatprep.subr.mxu0 0.0
        %3811 = vmatpush2.msra.mxu0 %v3387
        %3812 = vmatprep.subr.mxu0 0.0
        %3813 = vmatpush2.msra.mxu0 %v3386
        %3814 = vmatprep.subr.mxu0 0.0
        %3815 = vmatpush2.msra.mxu0 %v3385
        %3816 = vmatprep.subr.mxu0 0.0
        %3817 = vmatpush2.msra.mxu0 %v3384
        %3818 = vmatprep.subr.mxu0 0.0
        %3819 = vmatpush2.msra.mxu0 %v3383
        %3820 = vmatprep.mubr.f32.mxu0 %v3199
        %3821 = vmatmul.mubr.f32.gmra.mxu0 %v3206
        %v3822 = vpop.f32.mrf.mxu0
        %v3823 = vadd.f32 %v3753, %v3822
        %v3824 = vpop.f32.mrf.mxu0
        %3825 = vdwg.mxu0
        %3826 = vmatprep.subr.mxu0 0.0
        %3827 = vmatpush1.msra.mxu0 0.0
        %3828 = vmatprep.subr.mxu0 0.0
        %3829 = vmatpush1.msra.mxu0 0.0
        %3830 = vmatprep.subr.mxu0 0.0
        %3831 = vmatpush1.msra.mxu0 0.0
        %3832 = vmatprep.subr.mxu0 0.0
        %3833 = vmatpush1.msra.mxu0 0.0
        %3834 = vmatprep.subr.mxu0 0.0
        %3835 = vmatpush1.msra.mxu0 0.0
        %3836 = vmatprep.subr.mxu0 0.0
        %3837 = vmatpush1.msra.mxu0 0.0
        %3838 = vmatprep.subr.mxu0 0.0
        %3839 = vmatpush1.msra.mxu0 0.0
        %3840 = vmatprep.subr.mxu0 0.0
        %3841 = vmatpush1.msra.mxu0 0.0
        %3842 = vmatprep.subr.mxu0 0.0
        %3843 = vmatpush1.msra.mxu0 0.0
        %3844 = vmatprep.subr.mxu0 0.0
        %3845 = vmatpush1.msra.mxu0 0.0
        %3846 = vmatprep.subr.mxu0 0.0
        %3847 = vmatpush1.msra.mxu0 0.0
        %3848 = vmatprep.subr.mxu0 0.0
        %3849 = vmatpush1.msra.mxu0 0.0
        %3850 = vmatprep.subr.mxu0 0.0
        %3851 = vmatpush1.msra.mxu0 %v3402
        %3852 = vmatprep.subr.mxu0 0.0
        %3853 = vmatpush1.msra.mxu0 %v3401
        %3854 = vmatprep.subr.mxu0 0.0
        %3855 = vmatpush1.msra.mxu0 %v3400
        %3856 = vmatprep.subr.mxu0 0.0
        %3857 = vmatpush1.msra.mxu0 %v3399
        %3858 = vmatprep.subr.mxu0 0.0
        %3859 = vmatpush2.msra.mxu0 0.0
        %3860 = vmatprep.subr.mxu0 0.0
        %3861 = vmatpush2.msra.mxu0 0.0
        %3862 = vmatprep.subr.mxu0 0.0
        %3863 = vmatpush2.msra.mxu0 0.0
        %3864 = vmatprep.subr.mxu0 0.0
        %3865 = vmatpush2.msra.mxu0 0.0
        %3866 = vmatprep.subr.mxu0 0.0
        %3867 = vmatpush2.msra.mxu0 0.0
        %3868 = vmatprep.subr.mxu0 0.0
        %3869 = vmatpush2.msra.mxu0 0.0
        %3870 = vmatprep.subr.mxu0 0.0
        %3871 = vmatpush2.msra.mxu0 0.0
        %3872 = vmatprep.subr.mxu0 0.0
        %3873 = vmatpush2.msra.mxu0 0.0
        %3874 = vmatprep.subr.mxu0 0.0
        %3875 = vmatpush2.msra.mxu0 0.0
        %3876 = vmatprep.subr.mxu0 0.0
        %3877 = vmatpush2.msra.mxu0 0.0
        %3878 = vmatprep.subr.mxu0 0.0
        %3879 = vmatpush2.msra.mxu0 0.0
        %3880 = vmatprep.subr.mxu0 0.0
        %3881 = vmatpush2.msra.mxu0 0.0
        %3882 = vmatprep.subr.mxu0 0.0
        %3883 = vmatpush2.msra.mxu0 0.0
        %3884 = vmatprep.subr.mxu0 0.0
        %3885 = vmatpush2.msra.mxu0 0.0
        %3886 = vmatprep.subr.mxu0 0.0
        %3887 = vmatpush2.msra.mxu0 0.0
        %3888 = vmatprep.subr.mxu0 0.0
        %3889 = vmatpush2.msra.mxu0 0.0
        %3890 = vmatprep.mubr.f32.mxu0 0.0
        %3891 = vmatmul.mubr.f32.gmra.mxu0 %v3404
        %v3892 = vpop.f32.mrf.mxu0
        %v3893 = vadd.f32 %v3823, %v3892
        %v3894 = vpop.f32.mrf.mxu0
        %3895 = vdwg.mxu0
        %3896 = vst [vmem:[%s270] sm:$0x1] %v3893
        %s3897 = sand.u32 %s181, 1
        %s3898 = scalar_lea.sflag [#allocation5], %s3897
        %s3899 = sand.u32 %s181, 1
        %s3900 = scalar_lea.vmem [#allocation4], %s3899
        // Predicated region
        $region49: #{cnn_forward.1} parent=47 // pred_check
          %p3901 = pneg %p191
        $region50: #{cnn_forward.1} parent=47 // pred_check_branch
          %3903 = sbr.rel (%p3901) target = $region52
        $region51: #{cnn_forward.1} parent=47 // pred_region
          %s3905 = ssub.s32 16, 16
          %3906 = vsyncadd %s3898, %s3905
          %s3907 = smul.addr %s21, 16
          %s3908 = scalar_lea.hbm %s7, %s3907
          %s3910 = sshll.u32 %s3900, 4
          %s3911 = int_to_ptr.vmem [resolvable:$true] %s3910
          %3913 = dma.vmem_to_hbm [thread:$0]  %s3911, 16, %s3908, %s3898
        $region52: #{cnn_forward.1} parent=47 // pred_fallthru
          _
      $region48: #{cnn_forward.1} parent=5 // pred_fallthru
        _
      %p3914 = scmp.le.s32.totalorder 2, %s16
      // Predicated region
      $region53: #{cnn_forward.1} parent=5 // pred_check
        %p3915 = pneg %p3914
      $region54: #{cnn_forward.1} parent=5 // pred_check_branch
        %3917 = sbr.rel (%p3915) target = $region56
      $region55: #{cnn_forward.1} parent=5 // pred_region
        %s3918 = ssub.s32 %s16, 2
        // Predicated region
        $region57: #{cnn_forward.1} parent=55 // pred_check
          %p3919 = pneg %p197
        $region58: #{cnn_forward.1} parent=55 // pred_check_branch
          %3921 = sbr.rel (%p3919) target = $region60
        $region59: #{cnn_forward.1} parent=55 // pred_region
          %s3922 = sand.u32 %s182, 1
          %s3923 = scalar_lea.sflag [#allocation5], %s3922
          %s3924 = sand.u32 %s182, 1
          %s3925 = scalar_lea.vmem [#allocation4], %s3924
          %3926 = dma.done %s3923, 16
        $region60: #{cnn_forward.1} parent=55 // pred_fallthru
          _
      $region56: #{cnn_forward.1} parent=5 // pred_fallthru
        _
    $region6: #{cnn_forward.1} parent=1 // loop_footer
      %s20 = sadd.s32 1, %s16
    $region7: #{cnn_forward.1} parent=1 // loop_footer_branch
      %15 = sbr.rel target = $region3
    $region8: #{cnn_forward.1} parent=1 // loop_exit
      _
    %3927 = vsyncpa [#allocation5], 1
    %s3928 = scalar_lea.sflag [#allocation5], 1
    %3929 = vsyncpa %s3928, 1

</llo_original>
